<compile_context>
chip_gen: v5e
topology: v5e:2x2
jax: 0.10.0
libtpu: 0.0.40
codegen_flags: <defaults>
</compile_context>

<pallas_src>
import jax
import jax.numpy as jnp
from jax.experimental import pallas as pl
from jax.experimental.pallas import tpu as pltpu

LANE = 128


# ---------------------------------------------------------------------------
# Small helpers
# ---------------------------------------------------------------------------
def _round_up(n, m):
    return ((n + m - 1) // m) * m


def _pad_last2(a, rows, cols):
    pad = [(0, 0)] * (a.ndim - 2)
    pad += [(0, rows - a.shape[-2]), (0, cols - a.shape[-1])]
    return jnp.pad(a, pad)


def _pad_bias(b, n):
    return jnp.pad(b, (0, n - b.shape[0])).reshape(1, n).astype(jnp.float32)


def _choose_row_tile(Ho, Wo, target_m=256):
    """Smallest RT dividing Ho with RT*Wo >= target_m and a sublane-aligned
    output block (RT*Wo % 8 == 0), falling back to a single full tile."""
    for rt in range(1, Ho + 1):
        if Ho % rt:
            continue
        if rt * Wo < target_m:
            continue
        if (rt * Wo) % 8 == 0 or rt == Ho:
            return rt
    return Ho


def _vmem_limit_bytes(required):
    """Data-driven scoped-VMEM limit instead of a hardcoded constant."""
    try:
        cap = int(getattr(pltpu.get_tpu_info(), "vmem_capacity_bytes", 64 << 20))
    except Exception:            # pragma: no cover - HW query unavailable
        cap = 64 << 20
    cap = max(int(cap * 0.875), 32 << 20)      # stay below physical VMEM
    want = int(required * 1.5) + (8 << 20)     # headroom for compiler temporaries
    return min(max(want, 32 << 20), cap)


# ---------------------------------------------------------------------------
# Fused bottleneck kernel (one image x one output-row tile per grid step)
# ---------------------------------------------------------------------------
def _make_bottleneck_kernel(*, stride, H, W, Wo, Wp, RT, Cw, has_downsample):
    s = stride
    HALO = 2 // s              # extra conv1 rows a tile needs (2 for s=1, 1 for s=2)
    RTH = RT + HALO
    M1 = RTH * Wp              # conv1 matmul rows per phase (this tile)
    M2 = RT * Wo               # output rows written by this grid step
    qW = (W + 1) % s           # phase column that holds the right zero-pad column
    pH = (H + 1) % s           # phase row    that holds the bottom zero-pad row
    po, oo = 1 % s, 1 // s     # phase / offset of the stride-s shortcut slice

    def body(xp_ref, w1_ref, b1_ref, w2_ref, b2_ref, w3_ref, b3_ref,
             wd_ref, bd_ref, o_ref, y1_ref):
        r = pl.program_id(1)
        row0 = r * RT                                   # first output row of tile

        # ---- conv1: 1x1 + BN + ReLU, only on the rows this tile needs --------
        w1 = w1_ref[...]
        b1 = b1_ref[...]
        for p in range(s):
            for q in range(s):
                ph = p * s + q
                xt = xp_ref[0, ph, pl.ds(row0, RTH), :, :]      # (RTH, Wp, Cin_p) bf16
                z = jnp.dot(xt.reshape(M1, xt.shape[-1]), w1,
                            preferred_element_type=jnp.float32)
                z = jnp.maximum(z + b1, 0.0).reshape(RTH, Wp, Cw)
                y1_ref[ph] = z.astype(jnp.bfloat16)

        # ---- zero conv2's padding ring with a few static stores --------------
        # (replaces the old per-step iota+where masking; halo columns live at
        #  fixed phase columns, halo rows only exist in the first / last tile)
        zcol = jnp.zeros((RTH, 1, Cw), jnp.bfloat16)
        zrow = jnp.zeros((1, Wp, Cw), jnp.bfloat16)
        for p in range(s):
            for q in range(s):
                ph = p * s + q
                if q == 0:
                    y1_ref[ph, :, 0:1, :] = zcol                # padded column 0
                if q == qW:
                    y1_ref[ph, :, Wp - 1:Wp, :] = zcol          # padded column W+1

        @pl.when(r == 0)
        def _():
            for p in range(s):
                for q in range(s):
                    if p == 0:
                        y1_ref[p * s + q, 0:1, :, :] = zrow     # padded row 0

        @pl.when(r == pl.num_programs(1) - 1)
        def _():
            for p in range(s):
                for q in range(s):
                    if p == pH:
                        y1_ref[p * s + q, RTH - 1:RTH, :, :] = zrow   # padded row H+1

        # ---- conv2: 3x3 / stride s / pad 1 == 9 accumulating MXU taps --------
        acc = jnp.zeros((M2, Cw), jnp.float32)
        for di in range(3):
            for dj in range(3):
                ph = (di % s) * s + (dj % s)
                oi, oj = di // s, dj // s
                tap = y1_ref[ph, oi:oi + RT, oj:oj + Wo, :]     # (RT, Wo, Cw) bf16
                acc = acc + jnp.dot(tap.reshape(M2, Cw), w2_ref[di * 3 + dj],
                                    preferred_element_type=jnp.float32)
        y2 = jnp.maximum(acc + b2_ref[...], 0.0).astype(jnp.bfloat16)

        # ---- conv3 + shortcut + add + ReLU, streamed per row tile ------------
        y3 = jnp.dot(y2, w3_ref[...],
                     preferred_element_type=jnp.float32) + b3_ref[...]

        rs = xp_ref[0, po * s + po, pl.ds(oo + row0, RT), oo:oo + Wo, :]
        rs = rs.reshape(M2, rs.shape[-1])
        if has_downsample:
            res = jnp.dot(rs, wd_ref[...],
                          preferred_element_type=jnp.float32) + bd_ref[...]
        else:
            res = rs.astype(jnp.float32)                        # identity fast path

        o_ref[0] = jnp.maximum(y3 + res, 0.0).astype(o_ref.dtype)

    if has_downsample:
        def kernel(xp_ref, w1_ref, b1_ref, w2_ref, b2_ref, w3_ref, b3_ref,
                   wd_ref, bd_ref, o_ref, y1_ref):
            body(xp_ref, w1_ref, b1_ref, w2_ref, b2_ref, w3_ref, b3_ref,
                 wd_ref, bd_ref, o_ref, y1_ref)
    else:
        def kernel(xp_ref, w1_ref, b1_ref, w2_ref, b2_ref, w3_ref, b3_ref,
                   o_ref, y1_ref):
            body(xp_ref, w1_ref, b1_ref, w2_ref, b2_ref, w3_ref, b3_ref,
                 None, None, o_ref, y1_ref)

    return kernel


# ---------------------------------------------------------------------------
# Forward pass (XLA glue + one fused Pallas kernel)
# ---------------------------------------------------------------------------
def _bottleneck_forward_impl(x_nchw, params, stride):
    N, Cin, H, W = x_nchw.shape
    width = params["w1"].shape[0]
    Cout = params["w3"].shape[0]
    s = stride
    assert s in (1, 2) and H % s == 0 and W % s == 0, \
        "TODO(synk): only stride 1/2 with even spatial dims supported"
    Ho, Wo = H // s, W // s
    Hp, Wp = (H + 2) // s, (W + 2) // s
    has_downsample = "wd" in params

    Cin_p = _round_up(Cin, LANE)
    Cw_p = _round_up(width, LANE)
    Cout_p = _round_up(Cout, LANE)

    RT = _choose_row_tile(Ho, Wo)
    R = Ho // RT
    HALO = 2 // s
    RTH = RT + HALO

    # --- fold weights into lane-dense bf16 matmul operands (bias stays f32) ---
    w1 = _pad_last2(params["w1"][:, :, 0, 0].T, Cin_p, Cw_p).astype(jnp.bfloat16)
    b1 = _pad_bias(params["b1"], Cw_p)
    w2 = jnp.transpose(params["w2"], (2, 3, 1, 0)).reshape(9, width, width)
    w2 = _pad_last2(w2, Cw_p, Cw_p).astype(jnp.bfloat16)
    b2 = _pad_bias(params["b2"], Cw_p)
    w3 = _pad_last2(params["w3"][:, :, 0, 0].T, Cw_p, Cout_p).astype(jnp.bfloat16)
    b3 = _pad_bias(params["b3"], Cout_p)

    # --- input: NCHW -> NHWC, channel pad, spatial pad(1), bf16, phase split --
    x = jnp.transpose(x_nchw, (0, 2, 3, 1))
    x = jnp.pad(x, ((0, 0), (1, 1), (1, 1), (0, Cin_p - Cin))).astype(jnp.bfloat16)
    if s == 1:
        xp = x.reshape(N, 1, Hp, Wp, Cin_p)                  # no relayout needed
    else:
        # phase (p, q)[a, b] = x_pad[s*a + p, s*b + q]; total bytes == x_pad bytes
        xp = x.reshape(N, Hp, s, Wp, s, Cin_p).transpose(0, 2, 4, 1, 3, 5)
        xp = xp.reshape(N, s * s, Hp, Wp, Cin_p)

    kernel = _make_bottleneck_kernel(stride=s, H=H, W=W, Wo=Wo, Wp=Wp, RT=RT,
                                     Cw=Cw_p, has_downsample=has_downsample)

    # Weights / biases: whole-array VMEM residents (no per-step re-blocking,
    # no double-buffered copies of the folded weights).
    wspec = pl.BlockSpec(memory_space=pltpu.MemorySpace.VMEM)

    in_specs = [
        pl.BlockSpec((1, s * s, Hp, Wp, Cin_p), lambda n, r: (n, 0, 0, 0, 0)),
        wspec, wspec, wspec, wspec, wspec, wspec,
    ]
    operands = [xp, w1, b1, w2, b2, w3, b3]
    if has_downsample:
        wd = _pad_last2(params["wd"][:, :, 0, 0].T, Cin_p, Cout_p).astype(jnp.bfloat16)
        bd = _pad_bias(params["bd"], Cout_p)
        in_specs += [wspec, wspec]
        operands += [wd, bd]

    # --- data-driven scoped-VMEM limit ----------------------------------------
    weight_bytes = sum(int(a.size) * a.dtype.itemsize for a in operands[1:])
    in_block = s * s * Hp * Wp * Cin_p * 2            # bf16, double-buffered
    out_block = RT * Wo * Cout_p * 2                  # bf16, double-buffered
    scratch_bytes = s * s * RTH * Wp * Cw_p * 2
    work_bytes = (RT * Wo) * (6 * Cw_p + 8 * Cout_p + 4 * Cin_p) \
        + RTH * Wp * (4 * Cw_p + 2 * Cin_p)
    required = (2 * weight_bytes + 2 * in_block + 2 * out_block
                + scratch_bytes + work_bytes)
    vmem_limit = _vmem_limit_bytes(required)

    out = pl.pallas_call(
        kernel,
        out_shape=jax.ShapeDtypeStruct((N, Ho * Wo, Cout_p), jnp.bfloat16),
        grid=(N, R),
        in_specs=in_specs,
        out_specs=pl.BlockSpec((1, RT * Wo, Cout_p), lambda n, r: (n, r, 0)),
        scratch_shapes=[pltpu.VMEM((s * s, RTH, Wp, Cw_p), jnp.bfloat16)],
        compiler_params=pltpu.CompilerParams(
            dimension_semantics=("parallel", "parallel"),
            vmem_limit_bytes=vmem_limit,
        ),
    )(*operands)

    out = out[:, :, :Cout].reshape(N, Ho, Wo, Cout)
    return jnp.transpose(out, (0, 3, 1, 2))           # NCHW (bf16 activations)


bottleneck_forward = jax.jit(_bottleneck_forward_impl, static_argnums=(2,))


# ---------------------------------------------------------------------------
# Parameter construction (Conv + folded BatchNorm, deterministic)
# ---------------------------------------------------------------------------
def init_conv_bn(key, cin, cout, k):
    k1, k2, k3, k4, k5 = jax.random.split(key, 5)
    w = 0.1 * jax.random.normal(k1, (cout, cin, k, k), jnp.float32)   # OIHW, no bias
    gamma = 1.0 + 0.1 * jax.random.normal(k2, (cout,), jnp.float32)
    beta = 0.1 * jax.random.normal(k3, (cout,), jnp.float32)
    mean = 0.1 * jax.random.normal(k4, (cout,), jnp.float32)
    var = jnp.abs(jax.random.normal(k5, (cout,), jnp.float32)) + 0.5
    scale = gamma / jnp.sqrt(var + 1e-5)
    return w * scale[:, None, None, None], beta - mean * scale


def make_bottleneck_params(key, in_channels, out_channels, stride, expansion=4):
    width = out_channels // expansion
    k1, k2, k3, k4 = jax.random.split(key, 4)
    p = {}
    p["w1"], p["b1"] = init_conv_bn(k1, in_channels, width, 1)        # 1x1
    p["w2"], p["b2"] = init_conv_bn(k2, width, width, 3)              # 3x3 pad=1 stride
    p["w3"], p["b3"] = init_conv_bn(k3, width, out_channels, 1)       # 1x1
    if in_channels != out_channels or stride != 1:
        p["wd"], p["bd"] = init_conv_bn(k4, in_channels, out_channels, 1)
    # else: identity shortcut -> no projection params (kernel fast path)
    return p


# ---------------------------------------------------------------------------
# Plain-JAX reference (mirrors the kernel's bf16 operand rounding)
# ---------------------------------------------------------------------------
def _conv_nhwc(x, w_oihw, b, stride, pad):
    w_hwio = jnp.transpose(w_oihw, (2, 3, 1, 0))
    y = jax.lax.conv_general_dilated(
        x, w_hwio, (stride, stride), [(pad, pad), (pad, pad)],
        dimension_numbers=("NHWC", "HWIO", "NHWC"))
    return y + b


def bottleneck_reference(x_nchw, p, stride):
    q = lambda a: a.astype(jnp.bfloat16).astype(jnp.float32)   # bf16 operands, f32 accum
    x = jnp.transpose(x_nchw, (0, 2, 3, 1))
    y = jax.nn.relu(_conv_nhwc(q(x), q(p["w1"]), p["b1"], 1, 0))
    y = jax.nn.relu(_conv_nhwc(q(y), q(p["w2"]), p["b2"], stride, 1))
    y = _conv_nhwc(q(y), q(p["w3"]), p["b3"], 1, 0)
    if "wd" in p:
        res = _conv_nhwc(q(x), q(p["wd"]), p["bd"], stride, 0)
    else:
        res = q(x)[:, ::stride, ::stride, :]
    out = jax.nn.relu(y + res)
    return jnp.transpose(out, (0, 3, 1, 2))


def _check(out, ref, shape, tag):
    assert out.shape == ref.shape == shape, (out.shape, ref.shape, shape)
    err = jnp.max(jnp.abs(out.astype(jnp.float32) - ref))
    assert jnp.allclose(out.astype(jnp.float32), ref, rtol=2e-2, atol=2e-2), \
        f"{tag}: max err {err}"


# ---------------------------------------------------------------------------
if __name__ == "__main__":
    key = jax.random.PRNGKey(0)
    kp1, kx1, kp2, kx2, kp3, kx3 = jax.random.split(key, 6)

    # --- block 1: stride-2 bottleneck with projection shortcut ---------------
    N, Cin, H, W = 2, 8, 16, 16
    Cout, stride = 16, 2                                              # width = 4
    params = make_bottleneck_params(kp1, Cin, Cout, stride)
    x = jax.random.normal(kx1, (N, Cin, H, W), jnp.float32)           # NCHW like PyTorch
    out = jax.block_until_ready(bottleneck_forward(x, params, stride))
    ref = jax.block_until_ready(bottleneck_reference(x, params, stride))
    _check(out, ref, (N, Cout, H // stride, W // stride), "stride2/proj")

    # --- block 2: identity-shortcut bottleneck (fast path, no projection) ----
    N2, C2, H2, W2 = 2, 16, 16, 16
    params2 = make_bottleneck_params(kp2, C2, C2, 1)
    x2 = jax.random.normal(kx2, (N2, C2, H2, W2), jnp.float32)
    out2 = jax.block_until_ready(bottleneck_forward(x2, params2, 1))
    ref2 = jax.block_until_ready(bottleneck_reference(x2, params2, 1))
    _check(out2, ref2, (N2, C2, H2, W2), "stride1/identity")

    # --- block 3: stride-1 projection block, multiple row tiles (R > 1) ------
    N3, C3, H3, W3, Cout3 = 1, 32, 32, 32, 64
    params3 = make_bottleneck_params(kp3, C3, Cout3, 1)
    x3 = jax.random.normal(kx3, (N3, C3, H3, W3), jnp.float32)
    out3 = jax.block_until_ready(bottleneck_forward(x3, params3, 1))
    ref3 = jax.block_until_ready(bottleneck_reference(x3, params3, 1))
    _check(out3, ref3, (N3, Cout3, H3, W3), "stride1/proj/row-tiled")

    print("KERNEL_OK")
</pallas_src>

<mosaic_0001>
module attributes {stable_mosaic.version = 11 : i64} {
  func.func @kernel(%arg0: i32, %arg1: i32, %arg2: memref<1x4x9x9x128xbf16, #tpu.memory_space<vmem>>, %arg3: memref<128x128xbf16, #tpu.memory_space<vmem>>, %arg4: memref<1x128xf32, #tpu.memory_space<vmem>>, %arg5: memref<9x128x128xbf16, #tpu.memory_space<vmem>>, %arg6: memref<1x128xf32, #tpu.memory_space<vmem>>, %arg7: memref<128x128xbf16, #tpu.memory_space<vmem>>, %arg8: memref<1x128xf32, #tpu.memory_space<vmem>>, %arg9: memref<128x128xbf16, #tpu.memory_space<vmem>>, %arg10: memref<1x128xf32, #tpu.memory_space<vmem>>, %arg11: memref<1x64x128xbf16, #tpu.memory_space<vmem>>, %arg12: memref<4x9x9x128xbf16, #tpu.memory_space<vmem>>) attributes {dimension_semantics = [#tpu.dimension_semantics<parallel>, #tpu.dimension_semantics<parallel>], iteration_bounds = array<i64: 2, 1>, scalar_prefetch = 0 : i64, scratch_operands = 1 : i64, tpu.core_type = #tpu.core_type<tc>, window_params = [{transform_indices = @transform_0, window_bounds = array<i64: 1, 4, 9, 9, 128>}, {pipeline_mode = #tpu.pipeline_mode<synchronous>, transform_indices = @transform_1, window_bounds = array<i64: 128, 128>}, {pipeline_mode = #tpu.pipeline_mode<synchronous>, transform_indices = @transform_2, window_bounds = array<i64: 1, 128>}, {pipeline_mode = #tpu.pipeline_mode<synchronous>, transform_indices = @transform_3, window_bounds = array<i64: 9, 128, 128>}, {pipeline_mode = #tpu.pipeline_mode<synchronous>, transform_indices = @transform_4, window_bounds = array<i64: 1, 128>}, {pipeline_mode = #tpu.pipeline_mode<synchronous>, transform_indices = @transform_5, window_bounds = array<i64: 128, 128>}, {pipeline_mode = #tpu.pipeline_mode<synchronous>, transform_indices = @transform_6, window_bounds = array<i64: 1, 128>}, {pipeline_mode = #tpu.pipeline_mode<synchronous>, transform_indices = @transform_7, window_bounds = array<i64: 128, 128>}, {pipeline_mode = #tpu.pipeline_mode<synchronous>, transform_indices = @transform_8, window_bounds = array<i64: 1, 128>}, {transform_indices = @transform_9, window_bounds = array<i64: 1, 64, 128>}]} {
    %c8_i32 = arith.constant 8 : i32
    %0 = arith.muli %arg1, %c8_i32 : i32
    %c0 = arith.constant 0 : index
    %c0_0 = arith.constant 0 : index
    %1 = vector.load %arg3[%c0, %c0_0] : memref<128x128xbf16, #tpu.memory_space<vmem>>, vector<128x128xbf16>
    %c0_1 = arith.constant 0 : index
    %c0_2 = arith.constant 0 : index
    %2 = vector.load %arg4[%c0_1, %c0_2] : memref<1x128xf32, #tpu.memory_space<vmem>>, vector<1x128xf32>
    %c0_3 = arith.constant 0 : index
    %c0_4 = arith.constant 0 : index
    %3 = arith.index_cast %0 : i32 to index
    %c0_5 = arith.constant 0 : index
    %c0_6 = arith.constant 0 : index
    %4 = vector.load %arg2[%c0_3, %c0_4, %3, %c0_5, %c0_6] : memref<1x4x9x9x128xbf16, #tpu.memory_space<vmem>>, vector<1x1x9x9x128xbf16>
    %5 = vector.shape_cast %4 : vector<1x1x9x9x128xbf16> to vector<9x9x128xbf16>
    %6 = vector.shape_cast %5 : vector<9x9x128xbf16> to vector<81x128xbf16>
    %cst = arith.constant dense<0.000000e+00> : vector<81x128xf32>
    %7 = tpu.matmul %6, %1, %cst {dimension_numbers = #tpu.dot_dimension_numbers<[1], [0], [0], [1], [0, 0, 1, 1], [], []>} : vector<81x128xbf16>, vector<128x128xbf16>, vector<81x128xf32> -> vector<81x128xf32>
    %8 = vector.broadcast %2 : vector<1x128xf32> to vector<81x128xf32>
    %9 = arith.addf %7, %8 : vector<81x128xf32>
    %cst_7 = arith.constant 0.000000e+00 : f32
    %10 = vector.broadcast %cst_7 : f32 to vector<81x128xf32>
    %11 = arith.maximumf %9, %10 : vector<81x128xf32>
    %12 = vector.shape_cast %11 : vector<81x128xf32> to vector<9x9x128xf32>
    %13 = arith.truncf %12 : vector<9x9x128xf32> to vector<9x9x128xbf16>
    %c0_8 = arith.constant 0 : index
    %c0_9 = arith.constant 0 : index
    %c0_10 = arith.constant 0 : index
    %c0_11 = arith.constant 0 : index
    %14 = vector.load %arg12[%c0_8, %c0_9, %c0_10, %c0_11] : memref<4x9x9x128xbf16, #tpu.memory_space<vmem>>, vector<1x9x9x128xbf16>
    %15 = vector.shape_cast %14 : vector<1x9x9x128xbf16> to vector<9x9x128xbf16>
    %16 = vector.shape_cast %13 : vector<9x9x128xbf16> to vector<1x9x9x128xbf16>
    tpu.vector_store %arg12[%c0_8, %c0_9, %c0_10, %c0_11], %16 {strides = array<i32>} : memref<4x9x9x128xbf16, #tpu.memory_space<vmem>>, vector<1x9x9x128xbf16>,
    %c0_12 = arith.constant 0 : index
    %c1 = arith.constant 1 : index
    %17 = arith.index_cast %0 : i32 to index
    %c0_13 = arith.constant 0 : index
    %c0_14 = arith.constant 0 : index
    %18 = vector.load %arg2[%c0_12, %c1, %17, %c0_13, %c0_14] : memref<1x4x9x9x128xbf16, #tpu.memory_space<vmem>>, vector<1x1x9x9x128xbf16>
    %19 = vector.shape_cast %18 : vector<1x1x9x9x128xbf16> to vector<9x9x128xbf16>
    %20 = vector.shape_cast %19 : vector<9x9x128xbf16> to vector<81x128xbf16>
    %cst_15 = arith.constant dense<0.000000e+00> : vector<81x128xf32>
    %21 = tpu.matmul %20, %1, %cst_15 {dimension_numbers = #tpu.dot_dimension_numbers<[1], [0], [0], [1], [0, 0, 1, 1], [], []>} : vector<81x128xbf16>, vector<128x128xbf16>, vector<81x128xf32> -> vector<81x128xf32>
    %22 = vector.broadcast %2 : vector<1x128xf32> to vector<81x128xf32>
    %23 = arith.addf %21, %22 : vector<81x128xf32>
    %cst_16 = arith.constant 0.000000e+00 : f32
    %24 = vector.broadcast %cst_16 : f32 to vector<81x128xf32>
    %25 = arith.maximumf %23, %24 : vector<81x128xf32>
    %26 = vector.shape_cast %25 : vector<81x128xf32> to vector<9x9x128xf32>
    %27 = arith.truncf %26 : vector<9x9x128xf32> to vector<9x9x128xbf16>
    %c1_17 = arith.constant 1 : index
    %c0_18 = arith.constant 0 : index
    %c0_19 = arith.constant 0 : index
    %c0_20 = arith.constant 0 : index
    %28 = vector.load %arg12[%c1_17, %c0_18, %c0_19, %c0_20] : memref<4x9x9x128xbf16, #tpu.memory_space<vmem>>, vector<1x9x9x128xbf16>
    %29 = vector.shape_cast %28 : vector<1x9x9x128xbf16> to vector<9x9x128xbf16>
    %30 = vector.shape_cast %27 : vector<9x9x128xbf16> to vector<1x9x9x128xbf16>
    tpu.vector_store %arg12[%c1_17, %c0_18, %c0_19, %c0_20], %30 {strides = array<i32>} : memref<4x9x9x128xbf16, #tpu.memory_space<vmem>>, vector<1x9x9x128xbf16>,
    %c0_21 = arith.constant 0 : index
    %c2 = arith.constant 2 : index
    %31 = arith.index_cast %0 : i32 to index
    %c0_22 = arith.constant 0 : index
    %c0_23 = arith.constant 0 : index
    %32 = vector.load %arg2[%c0_21, %c2, %31, %c0_22, %c0_23] : memref<1x4x9x9x128xbf16, #tpu.memory_space<vmem>>, vector<1x1x9x9x128xbf16>
    %33 = vector.shape_cast %32 : vector<1x1x9x9x128xbf16> to vector<9x9x128xbf16>
    %34 = vector.shape_cast %33 : vector<9x9x128xbf16> to vector<81x128xbf16>
    %cst_24 = arith.constant dense<0.000000e+00> : vector<81x128xf32>
    %35 = tpu.matmul %34, %1, %cst_24 {dimension_numbers = #tpu.dot_dimension_numbers<[1], [0], [0], [1], [0, 0, 1, 1], [], []>} : vector<81x128xbf16>, vector<128x128xbf16>, vector<81x128xf32> -> vector<81x128xf32>
    %36 = vector.broadcast %2 : vector<1x128xf32> to vector<81x128xf32>
    %37 = arith.addf %35, %36 : vector<81x128xf32>
    %cst_25 = arith.constant 0.000000e+00 : f32
    %38 = vector.broadcast %cst_25 : f32 to vector<81x128xf32>
    %39 = arith.maximumf %37, %38 : vector<81x128xf32>
    %40 = vector.shape_cast %39 : vector<81x128xf32> to vector<9x9x128xf32>
    %41 = arith.truncf %40 : vector<9x9x128xf32> to vector<9x9x128xbf16>
    %c2_26 = arith.constant 2 : index
    %c0_27 = arith.constant 0 : index
    %c0_28 = arith.constant 0 : index
    %c0_29 = arith.constant 0 : index
    %42 = vector.load %arg12[%c2_26, %c0_27, %c0_28, %c0_29] : memref<4x9x9x128xbf16, #tpu.memory_space<vmem>>, vector<1x9x9x128xbf16>
    %43 = vector.shape_cast %42 : vector<1x9x9x128xbf16> to vector<9x9x128xbf16>
    %44 = vector.shape_cast %41 : vector<9x9x128xbf16> to vector<1x9x9x128xbf16>
    tpu.vector_store %arg12[%c2_26, %c0_27, %c0_28, %c0_29], %44 {strides = array<i32>} : memref<4x9x9x128xbf16, #tpu.memory_space<vmem>>, vector<1x9x9x128xbf16>,
    %c0_30 = arith.constant 0 : index
    %c3 = arith.constant 3 : index
    %45 = arith.index_cast %0 : i32 to index
    %c0_31 = arith.constant 0 : index
    %c0_32 = arith.constant 0 : index
    %46 = vector.load %arg2[%c0_30, %c3, %45, %c0_31, %c0_32] : memref<1x4x9x9x128xbf16, #tpu.memory_space<vmem>>, vector<1x1x9x9x128xbf16>
    %47 = vector.shape_cast %46 : vector<1x1x9x9x128xbf16> to vector<9x9x128xbf16>
    %48 = vector.shape_cast %47 : vector<9x9x128xbf16> to vector<81x128xbf16>
    %cst_33 = arith.constant dense<0.000000e+00> : vector<81x128xf32>
    %49 = tpu.matmul %48, %1, %cst_33 {dimension_numbers = #tpu.dot_dimension_numbers<[1], [0], [0], [1], [0, 0, 1, 1], [], []>} : vector<81x128xbf16>, vector<128x128xbf16>, vector<81x128xf32> -> vector<81x128xf32>
    %50 = vector.broadcast %2 : vector<1x128xf32> to vector<81x128xf32>
    %51 = arith.addf %49, %50 : vector<81x128xf32>
    %cst_34 = arith.constant 0.000000e+00 : f32
    %52 = vector.broadcast %cst_34 : f32 to vector<81x128xf32>
    %53 = arith.maximumf %51, %52 : vector<81x128xf32>
    %54 = vector.shape_cast %53 : vector<81x128xf32> to vector<9x9x128xf32>
    %55 = arith.truncf %54 : vector<9x9x128xf32> to vector<9x9x128xbf16>
    %c3_35 = arith.constant 3 : index
    %c0_36 = arith.constant 0 : index
    %c0_37 = arith.constant 0 : index
    %c0_38 = arith.constant 0 : index
    %56 = vector.load %arg12[%c3_35, %c0_36, %c0_37, %c0_38] : memref<4x9x9x128xbf16, #tpu.memory_space<vmem>>, vector<1x9x9x128xbf16>
    %57 = vector.shape_cast %56 : vector<1x9x9x128xbf16> to vector<9x9x128xbf16>
    %58 = vector.shape_cast %55 : vector<9x9x128xbf16> to vector<1x9x9x128xbf16>
    tpu.vector_store %arg12[%c3_35, %c0_36, %c0_37, %c0_38], %58 {strides = array<i32>} : memref<4x9x9x128xbf16, #tpu.memory_space<vmem>>, vector<1x9x9x128xbf16>,
    %cst_39 = arith.constant 0.000000e+00 : bf16
    %59 = vector.broadcast %cst_39 : bf16 to vector<9x1x128xbf16>
    %cst_40 = arith.constant 0.000000e+00 : bf16
    %60 = vector.broadcast %cst_40 : bf16 to vector<1x9x128xbf16>
    %c0_41 = arith.constant 0 : index
    %c0_42 = arith.constant 0 : index
    %c0_43 = arith.constant 0 : index
    %c0_44 = arith.constant 0 : index
    %61 = vector.load %arg12[%c0_41, %c0_42, %c0_43, %c0_44] : memref<4x9x9x128xbf16, #tpu.memory_space<vmem>>, vector<1x9x1x128xbf16>
    %62 = vector.shape_cast %61 : vector<1x9x1x128xbf16> to vector<9x1x128xbf16>
    %63 = vector.shape_cast %59 : vector<9x1x128xbf16> to vector<1x9x1x128xbf16>
    tpu.vector_store %arg12[%c0_41, %c0_42, %c0_43, %c0_44], %63 {strides = array<i32>} : memref<4x9x9x128xbf16, #tpu.memory_space<vmem>>, vector<1x9x1x128xbf16>,
    %c1_45 = arith.constant 1 : index
    %c0_46 = arith.constant 0 : index
    %c8 = arith.constant 8 : index
    %c0_47 = arith.constant 0 : index
    %64 = vector.load %arg12[%c1_45, %c0_46, %c8, %c0_47] : memref<4x9x9x128xbf16, #tpu.memory_space<vmem>>, vector<1x9x1x128xbf16>
    %65 = vector.shape_cast %64 : vector<1x9x1x128xbf16> to vector<9x1x128xbf16>
    %66 = vector.shape_cast %59 : vector<9x1x128xbf16> to vector<1x9x1x128xbf16>
    tpu.vector_store %arg12[%c1_45, %c0_46, %c8, %c0_47], %66 {strides = array<i32>} : memref<4x9x9x128xbf16, #tpu.memory_space<vmem>>, vector<1x9x1x128xbf16>,
    %c2_48 = arith.constant 2 : index
    %c0_49 = arith.constant 0 : index
    %c0_50 = arith.constant 0 : index
    %c0_51 = arith.constant 0 : index
    %67 = vector.load %arg12[%c2_48, %c0_49, %c0_50, %c0_51] : memref<4x9x9x128xbf16, #tpu.memory_space<vmem>>, vector<1x9x1x128xbf16>
    %68 = vector.shape_cast %67 : vector<1x9x1x128xbf16> to vector<9x1x128xbf16>
    %69 = vector.shape_cast %59 : vector<9x1x128xbf16> to vector<1x9x1x128xbf16>
    tpu.vector_store %arg12[%c2_48, %c0_49, %c0_50, %c0_51], %69 {strides = array<i32>} : memref<4x9x9x128xbf16, #tpu.memory_space<vmem>>, vector<1x9x1x128xbf16>,
    %c3_52 = arith.constant 3 : index
    %c0_53 = arith.constant 0 : index
    %c8_54 = arith.constant 8 : index
    %c0_55 = arith.constant 0 : index
    %70 = vector.load %arg12[%c3_52, %c0_53, %c8_54, %c0_55] : memref<4x9x9x128xbf16, #tpu.memory_space<vmem>>, vector<1x9x1x128xbf16>
    %71 = vector.shape_cast %70 : vector<1x9x1x128xbf16> to vector<9x1x128xbf16>
    %72 = vector.shape_cast %59 : vector<9x1x128xbf16> to vector<1x9x1x128xbf16>
    tpu.vector_store %arg12[%c3_52, %c0_53, %c8_54, %c0_55], %72 {strides = array<i32>} : memref<4x9x9x128xbf16, #tpu.memory_space<vmem>>, vector<1x9x1x128xbf16>,
    %c0_i32 = arith.constant 0 : i32
    %73 = arith.cmpi eq, %arg1, %c0_i32 : i32
    %74 = arith.extui %73 : i1 to i32
    %c0_i32_56 = arith.constant 0 : i32
    %75 = arith.cmpi ne, %74, %c0_i32_56 : i32
    scf.if %75 {
      %c0_150 = arith.constant 0 : index
      %c0_151 = arith.constant 0 : index
      %c0_152 = arith.constant 0 : index
      %c0_153 = arith.constant 0 : index
      %171 = vector.load %arg12[%c0_150, %c0_151, %c0_152, %c0_153] : memref<4x9x9x128xbf16, #tpu.memory_space<vmem>>, vector<1x1x9x128xbf16>
      %172 = vector.shape_cast %171 : vector<1x1x9x128xbf16> to vector<1x9x128xbf16>
      %173 = vector.shape_cast %60 : vector<1x9x128xbf16> to vector<1x1x9x128xbf16>
      tpu.vector_store %arg12[%c0_150, %c0_151, %c0_152, %c0_153], %173 {strides = array<i32>} : memref<4x9x9x128xbf16, #tpu.memory_space<vmem>>, vector<1x1x9x128xbf16>,
      %c1_154 = arith.constant 1 : index
      %c0_155 = arith.constant 0 : index
      %c0_156 = arith.constant 0 : index
      %c0_157 = arith.constant 0 : index
      %174 = vector.load %arg12[%c1_154, %c0_155, %c0_156, %c0_157] : memref<4x9x9x128xbf16, #tpu.memory_space<vmem>>, vector<1x1x9x128xbf16>
      %175 = vector.shape_cast %174 : vector<1x1x9x128xbf16> to vector<1x9x128xbf16>
      %176 = vector.shape_cast %60 : vector<1x9x128xbf16> to vector<1x1x9x128xbf16>
      tpu.vector_store %arg12[%c1_154, %c0_155, %c0_156, %c0_157], %176 {strides = array<i32>} : memref<4x9x9x128xbf16, #tpu.memory_space<vmem>>, vector<1x1x9x128xbf16>,
    } else {
    }
    %c0_i32_57 = arith.constant 0 : i32
    %76 = arith.cmpi eq, %arg1, %c0_i32_57 : i32
    %77 = arith.extui %76 : i1 to i32
    %c0_i32_58 = arith.constant 0 : i32
    %78 = arith.cmpi ne, %77, %c0_i32_58 : i32
    scf.if %78 {
      %c2_150 = arith.constant 2 : index
      %c8_151 = arith.constant 8 : index
      %c0_152 = arith.constant 0 : index
      %c0_153 = arith.constant 0 : index
      %171 = vector.load %arg12[%c2_150, %c8_151, %c0_152, %c0_153] : memref<4x9x9x128xbf16, #tpu.memory_space<vmem>>, vector<1x1x9x128xbf16>
      %172 = vector.shape_cast %171 : vector<1x1x9x128xbf16> to vector<1x9x128xbf16>
      %173 = vector.shape_cast %60 : vector<1x9x128xbf16> to vector<1x1x9x128xbf16>
      tpu.vector_store %arg12[%c2_150, %c8_151, %c0_152, %c0_153], %173 {strides = array<i32>} : memref<4x9x9x128xbf16, #tpu.memory_space<vmem>>, vector<1x1x9x128xbf16>,
      %c3_154 = arith.constant 3 : index
      %c8_155 = arith.constant 8 : index
      %c0_156 = arith.constant 0 : index
      %c0_157 = arith.constant 0 : index
      %174 = vector.load %arg12[%c3_154, %c8_155, %c0_156, %c0_157] : memref<4x9x9x128xbf16, #tpu.memory_space<vmem>>, vector<1x1x9x128xbf16>
      %175 = vector.shape_cast %174 : vector<1x1x9x128xbf16> to vector<1x9x128xbf16>
      %176 = vector.shape_cast %60 : vector<1x9x128xbf16> to vector<1x1x9x128xbf16>
      tpu.vector_store %arg12[%c3_154, %c8_155, %c0_156, %c0_157], %176 {strides = array<i32>} : memref<4x9x9x128xbf16, #tpu.memory_space<vmem>>, vector<1x1x9x128xbf16>,
    } else {
    }
    %cst_59 = arith.constant 0.000000e+00 : f32
    %79 = vector.broadcast %cst_59 : f32 to vector<64x128xf32>
    %c0_60 = arith.constant 0 : index
    %c0_61 = arith.constant 0 : index
    %c0_62 = arith.constant 0 : index
    %c0_63 = arith.constant 0 : index
    %80 = vector.load %arg12[%c0_60, %c0_61, %c0_62, %c0_63] : memref<4x9x9x128xbf16, #tpu.memory_space<vmem>>, vector<1x8x8x128xbf16>
    %81 = vector.shape_cast %80 : vector<1x8x8x128xbf16> to vector<8x8x128xbf16>
    %82 = vector.shape_cast %81 : vector<8x8x128xbf16> to vector<64x128xbf16>
    %c0_64 = arith.constant 0 : index
    %c0_65 = arith.constant 0 : index
    %c0_66 = arith.constant 0 : index
    %83 = vector.load %arg5[%c0_64, %c0_65, %c0_66] : memref<9x128x128xbf16, #tpu.memory_space<vmem>>, vector<1x128x128xbf16>
    %84 = vector.shape_cast %83 : vector<1x128x128xbf16> to vector<128x128xbf16>
    %cst_67 = arith.constant dense<0.000000e+00> : vector<64x128xf32>
    %85 = tpu.matmul %82, %84, %cst_67 {dimension_numbers = #tpu.dot_dimension_numbers<[1], [0], [0], [1], [0, 0, 1, 1], [], []>} : vector<64x128xbf16>, vector<128x128xbf16>, vector<64x128xf32> -> vector<64x128xf32>
    %86 = arith.addf %79, %85 : vector<64x128xf32>
    %c1_68 = arith.constant 1 : index
    %c0_69 = arith.constant 0 : index
    %c0_70 = arith.constant 0 : index
    %c0_71 = arith.constant 0 : index
    %87 = vector.load %arg12[%c1_68, %c0_69, %c0_70, %c0_71] : memref<4x9x9x128xbf16, #tpu.memory_space<vmem>>, vector<1x8x8x128xbf16>
    %88 = vector.shape_cast %87 : vector<1x8x8x128xbf16> to vector<8x8x128xbf16>
    %89 = vector.shape_cast %88 : vector<8x8x128xbf16> to vector<64x128xbf16>
    %c1_72 = arith.constant 1 : index
    %c0_73 = arith.constant 0 : index
    %c0_74 = arith.constant 0 : index
    %90 = vector.load %arg5[%c1_72, %c0_73, %c0_74] : memref<9x128x128xbf16, #tpu.memory_space<vmem>>, vector<1x128x128xbf16>
    %91 = vector.shape_cast %90 : vector<1x128x128xbf16> to vector<128x128xbf16>
    %cst_75 = arith.constant dense<0.000000e+00> : vector<64x128xf32>
    %92 = tpu.matmul %89, %91, %cst_75 {dimension_numbers = #tpu.dot_dimension_numbers<[1], [0], [0], [1], [0, 0, 1, 1], [], []>} : vector<64x128xbf16>, vector<128x128xbf16>, vector<64x128xf32> -> vector<64x128xf32>
    %93 = arith.addf %86, %92 : vector<64x128xf32>
    %c0_76 = arith.constant 0 : index
    %c0_77 = arith.constant 0 : index
    %c1_78 = arith.constant 1 : index
    %c0_79 = arith.constant 0 : index
    %94 = vector.load %arg12[%c0_76, %c0_77, %c1_78, %c0_79] : memref<4x9x9x128xbf16, #tpu.memory_space<vmem>>, vector<1x8x8x128xbf16>
    %95 = vector.shape_cast %94 : vector<1x8x8x128xbf16> to vector<8x8x128xbf16>
    %96 = vector.shape_cast %95 : vector<8x8x128xbf16> to vector<64x128xbf16>
    %c2_80 = arith.constant 2 : index
    %c0_81 = arith.constant 0 : index
    %c0_82 = arith.constant 0 : index
    %97 = vector.load %arg5[%c2_80, %c0_81, %c0_82] : memref<9x128x128xbf16, #tpu.memory_space<vmem>>, vector<1x128x128xbf16>
    %98 = vector.shape_cast %97 : vector<1x128x128xbf16> to vector<128x128xbf16>
    %cst_83 = arith.constant dense<0.000000e+00> : vector<64x128xf32>
    %99 = tpu.matmul %96, %98, %cst_83 {dimension_numbers = #tpu.dot_dimension_numbers<[1], [0], [0], [1], [0, 0, 1, 1], [], []>} : vector<64x128xbf16>, vector<128x128xbf16>, vector<64x128xf32> -> vector<64x128xf32>
    %100 = arith.addf %93, %99 : vector<64x128xf32>
    %c2_84 = arith.constant 2 : index
    %c0_85 = arith.constant 0 : index
    %c0_86 = arith.constant 0 : index
    %c0_87 = arith.constant 0 : index
    %101 = vector.load %arg12[%c2_84, %c0_85, %c0_86, %c0_87] : memref<4x9x9x128xbf16, #tpu.memory_space<vmem>>, vector<1x8x8x128xbf16>
    %102 = vector.shape_cast %101 : vector<1x8x8x128xbf16> to vector<8x8x128xbf16>
    %103 = vector.shape_cast %102 : vector<8x8x128xbf16> to vector<64x128xbf16>
    %c3_88 = arith.constant 3 : index
    %c0_89 = arith.constant 0 : index
    %c0_90 = arith.constant 0 : index
    %104 = vector.load %arg5[%c3_88, %c0_89, %c0_90] : memref<9x128x128xbf16, #tpu.memory_space<vmem>>, vector<1x128x128xbf16>
    %105 = vector.shape_cast %104 : vector<1x128x128xbf16> to vector<128x128xbf16>
    %cst_91 = arith.constant dense<0.000000e+00> : vector<64x128xf32>
    %106 = tpu.matmul %103, %105, %cst_91 {dimension_numbers = #tpu.dot_dimension_numbers<[1], [0], [0], [1], [0, 0, 1, 1], [], []>} : vector<64x128xbf16>, vector<128x128xbf16>, vector<64x128xf32> -> vector<64x128xf32>
    %107 = arith.addf %100, %106 : vector<64x128xf32>
    %c3_92 = arith.constant 3 : index
    %c0_93 = arith.constant 0 : index
    %c0_94 = arith.constant 0 : index
    %c0_95 = arith.constant 0 : index
    %108 = vector.load %arg12[%c3_92, %c0_93, %c0_94, %c0_95] : memref<4x9x9x128xbf16, #tpu.memory_space<vmem>>, vector<1x8x8x128xbf16>
    %109 = vector.shape_cast %108 : vector<1x8x8x128xbf16> to vector<8x8x128xbf16>
    %110 = vector.shape_cast %109 : vector<8x8x128xbf16> to vector<64x128xbf16>
    %c4 = arith.constant 4 : index
    %c0_96 = arith.constant 0 : index
    %c0_97 = arith.constant 0 : index
    %111 = vector.load %arg5[%c4, %c0_96, %c0_97] : memref<9x128x128xbf16, #tpu.memory_space<vmem>>, vector<1x128x128xbf16>
    %112 = vector.shape_cast %111 : vector<1x128x128xbf16> to vector<128x128xbf16>
    %cst_98 = arith.constant dense<0.000000e+00> : vector<64x128xf32>
    %113 = tpu.matmul %110, %112, %cst_98 {dimension_numbers = #tpu.dot_dimension_numbers<[1], [0], [0], [1], [0, 0, 1, 1], [], []>} : vector<64x128xbf16>, vector<128x128xbf16>, vector<64x128xf32> -> vector<64x128xf32>
    %114 = arith.addf %107, %113 : vector<64x128xf32>
    %c2_99 = arith.constant 2 : index
    %c0_100 = arith.constant 0 : index
    %c1_101 = arith.constant 1 : index
    %c0_102 = arith.constant 0 : index
    %115 = vector.load %arg12[%c2_99, %c0_100, %c1_101, %c0_102] : memref<4x9x9x128xbf16, #tpu.memory_space<vmem>>, vector<1x8x8x128xbf16>
    %116 = vector.shape_cast %115 : vector<1x8x8x128xbf16> to vector<8x8x128xbf16>
    %117 = vector.shape_cast %116 : vector<8x8x128xbf16> to vector<64x128xbf16>
    %c5 = arith.constant 5 : index
    %c0_103 = arith.constant 0 : index
    %c0_104 = arith.constant 0 : index
    %118 = vector.load %arg5[%c5, %c0_103, %c0_104] : memref<9x128x128xbf16, #tpu.memory_space<vmem>>, vector<1x128x128xbf16>
    %119 = vector.shape_cast %118 : vector<1x128x128xbf16> to vector<128x128xbf16>
    %cst_105 = arith.constant dense<0.000000e+00> : vector<64x128xf32>
    %120 = tpu.matmul %117, %119, %cst_105 {dimension_numbers = #tpu.dot_dimension_numbers<[1], [0], [0], [1], [0, 0, 1, 1], [], []>} : vector<64x128xbf16>, vector<128x128xbf16>, vector<64x128xf32> -> vector<64x128xf32>
    %121 = arith.addf %114, %120 : vector<64x128xf32>
    %c0_106 = arith.constant 0 : index
    %c1_107 = arith.constant 1 : index
    %c0_108 = arith.constant 0 : index
    %c0_109 = arith.constant 0 : index
    %122 = vector.load %arg12[%c0_106, %c1_107, %c0_108, %c0_109] : memref<4x9x9x128xbf16, #tpu.memory_space<vmem>>, vector<1x8x8x128xbf16>
    %123 = vector.shape_cast %122 : vector<1x8x8x128xbf16> to vector<8x8x128xbf16>
    %124 = vector.shape_cast %123 : vector<8x8x128xbf16> to vector<64x128xbf16>
    %c6 = arith.constant 6 : index
    %c0_110 = arith.constant 0 : index
    %c0_111 = arith.constant 0 : index
    %125 = vector.load %arg5[%c6, %c0_110, %c0_111] : memref<9x128x128xbf16, #tpu.memory_space<vmem>>, vector<1x128x128xbf16>
    %126 = vector.shape_cast %125 : vector<1x128x128xbf16> to vector<128x128xbf16>
    %cst_112 = arith.constant dense<0.000000e+00> : vector<64x128xf32>
    %127 = tpu.matmul %124, %126, %cst_112 {dimension_numbers = #tpu.dot_dimension_numbers<[1], [0], [0], [1], [0, 0, 1, 1], [], []>} : vector<64x128xbf16>, vector<128x128xbf16>, vector<64x128xf32> -> vector<64x128xf32>
    %128 = arith.addf %121, %127 : vector<64x128xf32>
    %c1_113 = arith.constant 1 : index
    %c1_114 = arith.constant 1 : index
    %c0_115 = arith.constant 0 : index
    %c0_116 = arith.constant 0 : index
    %129 = vector.load %arg12[%c1_113, %c1_114, %c0_115, %c0_116] : memref<4x9x9x128xbf16, #tpu.memory_space<vmem>>, vector<1x8x8x128xbf16>
    %130 = vector.shape_cast %129 : vector<1x8x8x128xbf16> to vector<8x8x128xbf16>
    %131 = vector.shape_cast %130 : vector<8x8x128xbf16> to vector<64x128xbf16>
    %c7 = arith.constant 7 : index
    %c0_117 = arith.constant 0 : index
    %c0_118 = arith.constant 0 : index
    %132 = vector.load %arg5[%c7, %c0_117, %c0_118] : memref<9x128x128xbf16, #tpu.memory_space<vmem>>, vector<1x128x128xbf16>
    %133 = vector.shape_cast %132 : vector<1x128x128xbf16> to vector<128x128xbf16>
    %cst_119 = arith.constant dense<0.000000e+00> : vector<64x128xf32>
    %134 = tpu.matmul %131, %133, %cst_119 {dimension_numbers = #tpu.dot_dimension_numbers<[1], [0], [0], [1], [0, 0, 1, 1], [], []>} : vector<64x128xbf16>, vector<128x128xbf16>, vector<64x128xf32> -> vector<64x128xf32>
    %135 = arith.addf %128, %134 : vector<64x128xf32>
    %c0_120 = arith.constant 0 : index
    %c1_121 = arith.constant 1 : index
    %c1_122 = arith.constant 1 : index
    %c0_123 = arith.constant 0 : index
    %136 = vector.load %arg12[%c0_120, %c1_121, %c1_122, %c0_123] : memref<4x9x9x128xbf16, #tpu.memory_space<vmem>>, vector<1x8x8x128xbf16>
    %137 = vector.shape_cast %136 : vector<1x8x8x128xbf16> to vector<8x8x128xbf16>
    %138 = vector.shape_cast %137 : vector<8x8x128xbf16> to vector<64x128xbf16>
    %c8_124 = arith.constant 8 : index
    %c0_125 = arith.constant 0 : index
    %c0_126 = arith.constant 0 : index
    %139 = vector.load %arg5[%c8_124, %c0_125, %c0_126] : memref<9x128x128xbf16, #tpu.memory_space<vmem>>, vector<1x128x128xbf16>
    %140 = vector.shape_cast %139 : vector<1x128x128xbf16> to vector<128x128xbf16>
    %cst_127 = arith.constant dense<0.000000e+00> : vector<64x128xf32>
    %141 = tpu.matmul %138, %140, %cst_127 {dimension_numbers = #tpu.dot_dimension_numbers<[1], [0], [0], [1], [0, 0, 1, 1], [], []>} : vector<64x128xbf16>, vector<128x128xbf16>, vector<64x128xf32> -> vector<64x128xf32>
    %142 = arith.addf %135, %141 : vector<64x128xf32>
    %c0_128 = arith.constant 0 : index
    %c0_129 = arith.constant 0 : index
    %143 = vector.load %arg6[%c0_128, %c0_129] : memref<1x128xf32, #tpu.memory_space<vmem>>, vector<1x128xf32>
    %144 = vector.broadcast %143 : vector<1x128xf32> to vector<64x128xf32>
    %145 = arith.addf %142, %144 : vector<64x128xf32>
    %cst_130 = arith.constant 0.000000e+00 : f32
    %146 = vector.broadcast %cst_130 : f32 to vector<64x128xf32>
    %147 = arith.maximumf %145, %146 : vector<64x128xf32>
    %148 = arith.truncf %147 : vector<64x128xf32> to vector<64x128xbf16>
    %c0_131 = arith.constant 0 : index
    %c0_132 = arith.constant 0 : index
    %149 = vector.load %arg7[%c0_131, %c0_132] : memref<128x128xbf16, #tpu.memory_space<vmem>>, vector<128x128xbf16>
    %cst_133 = arith.constant dense<0.000000e+00> : vector<64x128xf32>
    %150 = tpu.matmul %148, %149, %cst_133 {dimension_numbers = #tpu.dot_dimension_numbers<[1], [0], [0], [1], [0, 0, 1, 1], [], []>} : vector<64x128xbf16>, vector<128x128xbf16>, vector<64x128xf32> -> vector<64x128xf32>
    %c0_134 = arith.constant 0 : index
    %c0_135 = arith.constant 0 : index
    %151 = vector.load %arg8[%c0_134, %c0_135] : memref<1x128xf32, #tpu.memory_space<vmem>>, vector<1x128xf32>
    %152 = vector.broadcast %151 : vector<1x128xf32> to vector<64x128xf32>
    %153 = arith.addf %150, %152 : vector<64x128xf32>
    %c0_i32_136 = arith.constant 0 : i32
    %154 = arith.addi %c0_i32_136, %0 : i32
    %c0_137 = arith.constant 0 : index
    %c3_138 = arith.constant 3 : index
    %155 = arith.index_cast %154 : i32 to index
    %c0_139 = arith.constant 0 : index
    %c0_140 = arith.constant 0 : index
    %156 = vector.load %arg2[%c0_137, %c3_138, %155, %c0_139, %c0_140] : memref<1x4x9x9x128xbf16, #tpu.memory_space<vmem>>, vector<1x1x8x8x128xbf16>
    %157 = vector.shape_cast %156 : vector<1x1x8x8x128xbf16> to vector<8x8x128xbf16>
    %158 = vector.shape_cast %157 : vector<8x8x128xbf16> to vector<64x128xbf16>
    %c0_141 = arith.constant 0 : index
    %c0_142 = arith.constant 0 : index
    %159 = vector.load %arg9[%c0_141, %c0_142] : memref<128x128xbf16, #tpu.memory_space<vmem>>, vector<128x128xbf16>
    %cst_143 = arith.constant dense<0.000000e+00> : vector<64x128xf32>
    %160 = tpu.matmul %158, %159, %cst_143 {dimension_numbers = #tpu.dot_dimension_numbers<[1], [0], [0], [1], [0, 0, 1, 1], [], []>} : vector<64x128xbf16>, vector<128x128xbf16>, vector<64x128xf32> -> vector<64x128xf32>
    %c0_144 = arith.constant 0 : index
    %c0_145 = arith.constant 0 : index
    %161 = vector.load %arg10[%c0_144, %c0_145] : memref<1x128xf32, #tpu.memory_space<vmem>>, vector<1x128xf32>
    %162 = vector.broadcast %161 : vector<1x128xf32> to vector<64x128xf32>
    %163 = arith.addf %160, %162 : vector<64x128xf32>
    %164 = arith.addf %153, %163 : vector<64x128xf32>
    %cst_146 = arith.constant 0.000000e+00 : f32
    %165 = vector.broadcast %cst_146 : f32 to vector<64x128xf32>
    %166 = arith.maximumf %164, %165 : vector<64x128xf32>
    %167 = arith.truncf %166 : vector<64x128xf32> to vector<64x128xbf16>
    %c0_147 = arith.constant 0 : index
    %c0_148 = arith.constant 0 : index
    %c0_149 = arith.constant 0 : index
    %168 = vector.load %arg11[%c0_147, %c0_148, %c0_149] : memref<1x64x128xbf16, #tpu.memory_space<vmem>>, vector<1x64x128xbf16>
    %169 = vector.shape_cast %168 : vector<1x64x128xbf16> to vector<64x128xbf16>
    %170 = vector.shape_cast %167 : vector<64x128xbf16> to vector<1x64x128xbf16>
    tpu.vector_store %arg11[%c0_147, %c0_148, %c0_149], %170 {strides = array<i32>} : memref<1x64x128xbf16, #tpu.memory_space<vmem>>, vector<1x64x128xbf16>,
    return
  }
  func.func @transform_0(%arg0: i32, %arg1: i32) -> (i32, i32, i32, i32, i32) {
    %c0_i32 = arith.constant 0 : i32
    %c0_i32_0 = arith.constant 0 : i32
    %c0_i32_1 = arith.constant 0 : i32
    %c0_i32_2 = arith.constant 0 : i32
    %c0_i32_3 = arith.constant 0 : i32
    return %arg0, %c0_i32, %c0_i32_0, %c0_i32_1, %c0_i32_2 : i32, i32, i32, i32, i32
  }
  func.func @transform_1(%arg0: i32, %arg1: i32) -> (i32, i32) {
    %c0_i32 = arith.constant 0 : i32
    %c0_i32_0 = arith.constant 0 : i32
    %c0_i32_1 = arith.constant 0 : i32
    return %c0_i32, %c0_i32_0 : i32, i32
  }
  func.func @transform_2(%arg0: i32, %arg1: i32) -> (i32, i32) {
    %c0_i32 = arith.constant 0 : i32
    %c0_i32_0 = arith.constant 0 : i32
    %c0_i32_1 = arith.constant 0 : i32
    return %c0_i32, %c0_i32_0 : i32, i32
  }
  func.func @transform_3(%arg0: i32, %arg1: i32) -> (i32, i32, i32) {
    %c0_i32 = arith.constant 0 : i32
    %c0_i32_0 = arith.constant 0 : i32
    %c0_i32_1 = arith.constant 0 : i32
    %c0_i32_2 = arith.constant 0 : i32
    return %c0_i32, %c0_i32_0, %c0_i32_1 : i32, i32, i32
  }
  func.func @transform_4(%arg0: i32, %arg1: i32) -> (i32, i32) {
    %c0_i32 = arith.constant 0 : i32
    %c0_i32_0 = arith.constant 0 : i32
    %c0_i32_1 = arith.constant 0 : i32
    return %c0_i32, %c0_i32_0 : i32, i32
  }
  func.func @transform_5(%arg0: i32, %arg1: i32) -> (i32, i32) {
    %c0_i32 = arith.constant 0 : i32
    %c0_i32_0 = arith.constant 0 : i32
    %c0_i32_1 = arith.constant 0 : i32
    return %c0_i32, %c0_i32_0 : i32, i32
  }
  func.func @transform_6(%arg0: i32, %arg1: i32) -> (i32, i32) {
    %c0_i32 = arith.constant 0 : i32
    %c0_i32_0 = arith.constant 0 : i32
    %c0_i32_1 = arith.constant 0 : i32
    return %c0_i32, %c0_i32_0 : i32, i32
  }
  func.func @transform_7(%arg0: i32, %arg1: i32) -> (i32, i32) {
    %c0_i32 = arith.constant 0 : i32
    %c0_i32_0 = arith.constant 0 : i32
    %c0_i32_1 = arith.constant 0 : i32
    return %c0_i32, %c0_i32_0 : i32, i32
  }
  func.func @transform_8(%arg0: i32, %arg1: i32) -> (i32, i32) {
    %c0_i32 = arith.constant 0 : i32
    %c0_i32_0 = arith.constant 0 : i32
    %c0_i32_1 = arith.constant 0 : i32
    return %c0_i32, %c0_i32_0 : i32, i32
  }
  func.func @transform_9(%arg0: i32, %arg1: i32) -> (i32, i32, i32) {
    %c0_i32 = arith.constant 0 : i32
    %c0_i32_0 = arith.constant 0 : i32
    return %arg0, %arg1, %c0_i32 : i32, i32, i32
  }
}

</mosaic_0001>

<llo_original>
// kernel: _bottleneck_forward_impl.1
$region0: #{_bottleneck_forward_impl.1}
  #allocation0 [shape = 'u32[]', space=smem, size = 0x4, offset = 0x4, fixed_abs, tag = 'smem constant byte address 0x4 - core index']
  #allocation1 [shape = 'u32[72,128]{1,0:T(1,128)}', space=vmem, size = 0x9000, scoped, tag = 'internal scratch']
  #allocation2 [shape = 'bf16[4,9,9,128]{3,2,1,0:T(8,128)(2,1)}', space=vmem, size = 0x24000, scoped, tag = 'scratch operand']
  %s0 = inlined_call_operand.vmem [shape: bf16[2,4,9,9,128], index: 0, kind: input, shape index: {}]
  %s1 = inlined_call_operand.vmem [shape: bf16[128,128], index: 1, kind: input, shape index: {}]
  %s2 = inlined_call_operand.vmem [shape: f32[1,128], index: 2, kind: input, shape index: {}]
  %s3 = inlined_call_operand.vmem [shape: bf16[9,128,128], index: 3, kind: input, shape index: {}]
  %s4 = inlined_call_operand.vmem [shape: f32[1,128], index: 4, kind: input, shape index: {}]
  %s5 = inlined_call_operand.vmem [shape: bf16[128,128], index: 5, kind: input, shape index: {}]
  %s6 = inlined_call_operand.vmem [shape: f32[1,128], index: 6, kind: input, shape index: {}]
  %s7 = inlined_call_operand.vmem [shape: bf16[128,128], index: 7, kind: input, shape index: {}]
  %s8 = inlined_call_operand.vmem [shape: f32[1,128], index: 8, kind: input, shape index: {}]
  %s9 = inlined_call_operand.vmem [shape: bf16[2,64,128], index: 9, kind: output, shape index: {}]
  %s10 = sld [smem:[#allocation0]]
  $region73: #{_bottleneck_forward_impl.1} parent=0
    _
  %s12 = ssub.s32 1, %s10
  %s13 = scalar_select 0, %s12, %s10
  loop: start=0, step=1, limit=4
  $region2: #{_bottleneck_forward_impl.1} parent=0 // loop_pre_header
    _
  $region3: #{_bottleneck_forward_impl.1} parent=0 // loop_header
    %s15 = sphi 0, %s19
    %p16 = scmp.ge.s32.totalorder %s15, 4
    %s22 = sphi 0, %s34
    %s23 = sphi 0, %s30
    %s24 = sphi 0, %s22
    %s25 = sphi 0, %s23
    %s26 = sphi 0, %s24
    %s27 = sphi 0, %s25
    %s37 = sphi 0, %s39
    %s40 = sphi 0, %s37
    %s41 = sphi 0, %s40
    %s57 = sphi 0, %s41
    %s61 = sphi 0, %s61
    %s63 = sphi 0, %s61
    %s64 = sphi 0, %s63
    %s78 = sphi 0, %s64
    %s82 = sphi 0, %s82
    %s84 = sphi 0, %s82
    %s85 = sphi 0, %s84
    %s99 = sphi 0, %s85
    %s103 = sphi 0, %s103
    %s105 = sphi 0, %s103
    %s106 = sphi 0, %s105
    %s120 = sphi 0, %s106
    %s124 = sphi 0, %s124
    %s126 = sphi 0, %s124
    %s127 = sphi 0, %s126
    %s141 = sphi 0, %s127
    %s145 = sphi 0, %s145
    %s147 = sphi 0, %s145
    %s148 = sphi 0, %s147
    %s162 = sphi 0, %s148
    %s166 = sphi 0, %s166
    %s168 = sphi 0, %s166
    %s169 = sphi 0, %s168
    %s183 = sphi 0, %s169
    %s187 = sphi 0, %s187
    %s189 = sphi 0, %s187
    %s190 = sphi 0, %s189
    %s204 = sphi 0, %s190
    %s208 = sphi 0, %s208
    %s210 = sphi 0, %s208
    %s211 = sphi 0, %s210
    %s225 = sphi 0, %s211
    %s233 = sphi 0, %s235
    %s236 = sphi 0, %s233
    %s237 = sphi 0, %s236
    %s253 = sphi 0, %s237
  $region4: #{_bottleneck_forward_impl.1} parent=0 // loop_header_branch
    %18 = sbr.rel (%p16) target = $region8
  $region5: #{_bottleneck_forward_impl.1} parent=0 // loop_body
    %s20 = ssub.s32 %s15, 1
    %s21 = ssub.s32 %s15, 2
    %s28 = sadd.s32 1, %s23
    %p29 = scmp.ge.s32.totalorder %s28, 1
    %s30 = scalar_select %p29, 0, %s28
    %s31 = sadd.s32 1, %s22
    %s32 = scalar_select %p29, %s31, %s22
    %p33 = scmp.ge.s32.totalorder %s32, 2
    %s34 = scalar_select %p33, 0, %s32
    %s35 = ssub.s32 %s22, %s34
    %p36 = scmp.eq.s32.totalorder %s35, 0
    %s38 = sadd.s32 %s37, 1
    %s39 = scalar_select %p36, %s37, %s38
    %p42 = pneg %p36
    %p43 = scmp.eq.s32.totalorder %s15, 1
    %p44 = por %p42, %p43
    %p45 = scmp.ne.s32.totalorder %s37, %s40
    %p46 = scmp.eq.s32.totalorder %s15, 0
    %p47 = por %p45, %p46
    %p48 = scmp.ne.s32.totalorder %s37, %s40
    %p49 = scmp.eq.s32.totalorder %s20, 1
    %p50 = por %p48, %p49
    %p51 = scmp.ne.s32.totalorder %s40, %s41
    %p52 = scmp.eq.s32.totalorder %s20, 0
    %p53 = por %p51, %p52
    %p54 = scmp.ne.s32.totalorder %s40, %s41
    %p55 = scmp.eq.s32.totalorder %s21, 1
    %p56 = por %p54, %p55
    %p58 = scmp.ne.s32.totalorder %s41, %s57
    %p59 = scmp.eq.s32.totalorder %s21, 0
    %p60 = por %p58, %p59
    %s62 = sadd.s32 %s61, 1
    %p65 = scmp.eq.s32.totalorder %s15, 1
    %p66 = scmp.ne.s32.totalorder %s61, %s63
    %p67 = scmp.eq.s32.totalorder %s15, 0
    %p68 = por %p66, %p67
    %p69 = scmp.ne.s32.totalorder %s61, %s63
    %p70 = scmp.eq.s32.totalorder %s20, 1
    %p71 = por %p69, %p70
    %p72 = scmp.ne.s32.totalorder %s63, %s64
    %p73 = scmp.eq.s32.totalorder %s20, 0
    %p74 = por %p72, %p73
    %p75 = scmp.ne.s32.totalorder %s63, %s64
    %p76 = scmp.eq.s32.totalorder %s21, 1
    %p77 = por %p75, %p76
    %p79 = scmp.ne.s32.totalorder %s64, %s78
    %p80 = scmp.eq.s32.totalorder %s21, 0
    %p81 = por %p79, %p80
    %s83 = sadd.s32 %s82, 1
    %p86 = scmp.eq.s32.totalorder %s15, 1
    %p87 = scmp.ne.s32.totalorder %s82, %s84
    %p88 = scmp.eq.s32.totalorder %s15, 0
    %p89 = por %p87, %p88
    %p90 = scmp.ne.s32.totalorder %s82, %s84
    %p91 = scmp.eq.s32.totalorder %s20, 1
    %p92 = por %p90, %p91
    %p93 = scmp.ne.s32.totalorder %s84, %s85
    %p94 = scmp.eq.s32.totalorder %s20, 0
    %p95 = por %p93, %p94
    %p96 = scmp.ne.s32.totalorder %s84, %s85
    %p97 = scmp.eq.s32.totalorder %s21, 1
    %p98 = por %p96, %p97
    %p100 = scmp.ne.s32.totalorder %s85, %s99
    %p101 = scmp.eq.s32.totalorder %s21, 0
    %p102 = por %p100, %p101
    %s104 = sadd.s32 %s103, 1
    %p107 = scmp.eq.s32.totalorder %s15, 1
    %p108 = scmp.ne.s32.totalorder %s103, %s105
    %p109 = scmp.eq.s32.totalorder %s15, 0
    %p110 = por %p108, %p109
    %p111 = scmp.ne.s32.totalorder %s103, %s105
    %p112 = scmp.eq.s32.totalorder %s20, 1
    %p113 = por %p111, %p112
    %p114 = scmp.ne.s32.totalorder %s105, %s106
    %p115 = scmp.eq.s32.totalorder %s20, 0
    %p116 = por %p114, %p115
    %p117 = scmp.ne.s32.totalorder %s105, %s106
    %p118 = scmp.eq.s32.totalorder %s21, 1
    %p119 = por %p117, %p118
    %p121 = scmp.ne.s32.totalorder %s106, %s120
    %p122 = scmp.eq.s32.totalorder %s21, 0
    %p123 = por %p121, %p122
    %s125 = sadd.s32 %s124, 1
    %p128 = scmp.eq.s32.totalorder %s15, 1
    %p129 = scmp.ne.s32.totalorder %s124, %s126
    %p130 = scmp.eq.s32.totalorder %s15, 0
    %p131 = por %p129, %p130
    %p132 = scmp.ne.s32.totalorder %s124, %s126
    %p133 = scmp.eq.s32.totalorder %s20, 1
    %p134 = por %p132, %p133
    %p135 = scmp.ne.s32.totalorder %s126, %s127
    %p136 = scmp.eq.s32.totalorder %s20, 0
    %p137 = por %p135, %p136
    %p138 = scmp.ne.s32.totalorder %s126, %s127
    %p139 = scmp.eq.s32.totalorder %s21, 1
    %p140 = por %p138, %p139
    %p142 = scmp.ne.s32.totalorder %s127, %s141
    %p143 = scmp.eq.s32.totalorder %s21, 0
    %p144 = por %p142, %p143
    %s146 = sadd.s32 %s145, 1
    %p149 = scmp.eq.s32.totalorder %s15, 1
    %p150 = scmp.ne.s32.totalorder %s145, %s147
    %p151 = scmp.eq.s32.totalorder %s15, 0
    %p152 = por %p150, %p151
    %p153 = scmp.ne.s32.totalorder %s145, %s147
    %p154 = scmp.eq.s32.totalorder %s20, 1
    %p155 = por %p153, %p154
    %p156 = scmp.ne.s32.totalorder %s147, %s148
    %p157 = scmp.eq.s32.totalorder %s20, 0
    %p158 = por %p156, %p157
    %p159 = scmp.ne.s32.totalorder %s147, %s148
    %p160 = scmp.eq.s32.totalorder %s21, 1
    %p161 = por %p159, %p160
    %p163 = scmp.ne.s32.totalorder %s148, %s162
    %p164 = scmp.eq.s32.totalorder %s21, 0
    %p165 = por %p163, %p164
    %s167 = sadd.s32 %s166, 1
    %p170 = scmp.eq.s32.totalorder %s15, 1
    %p171 = scmp.ne.s32.totalorder %s166, %s168
    %p172 = scmp.eq.s32.totalorder %s15, 0
    %p173 = por %p171, %p172
    %p174 = scmp.ne.s32.totalorder %s166, %s168
    %p175 = scmp.eq.s32.totalorder %s20, 1
    %p176 = por %p174, %p175
    %p177 = scmp.ne.s32.totalorder %s168, %s169
    %p178 = scmp.eq.s32.totalorder %s20, 0
    %p179 = por %p177, %p178
    %p180 = scmp.ne.s32.totalorder %s168, %s169
    %p181 = scmp.eq.s32.totalorder %s21, 1
    %p182 = por %p180, %p181
    %p184 = scmp.ne.s32.totalorder %s169, %s183
    %p185 = scmp.eq.s32.totalorder %s21, 0
    %p186 = por %p184, %p185
    %s188 = sadd.s32 %s187, 1
    %p191 = scmp.eq.s32.totalorder %s15, 1
    %p192 = scmp.ne.s32.totalorder %s187, %s189
    %p193 = scmp.eq.s32.totalorder %s15, 0
    %p194 = por %p192, %p193
    %p195 = scmp.ne.s32.totalorder %s187, %s189
    %p196 = scmp.eq.s32.totalorder %s20, 1
    %p197 = por %p195, %p196
    %p198 = scmp.ne.s32.totalorder %s189, %s190
    %p199 = scmp.eq.s32.totalorder %s20, 0
    %p200 = por %p198, %p199
    %p201 = scmp.ne.s32.totalorder %s189, %s190
    %p202 = scmp.eq.s32.totalorder %s21, 1
    %p203 = por %p201, %p202
    %p205 = scmp.ne.s32.totalorder %s190, %s204
    %p206 = scmp.eq.s32.totalorder %s21, 0
    %p207 = por %p205, %p206
    %s209 = sadd.s32 %s208, 1
    %p212 = scmp.eq.s32.totalorder %s15, 1
    %p213 = scmp.ne.s32.totalorder %s208, %s210
    %p214 = scmp.eq.s32.totalorder %s15, 0
    %p215 = por %p213, %p214
    %p216 = scmp.ne.s32.totalorder %s208, %s210
    %p217 = scmp.eq.s32.totalorder %s20, 1
    %p218 = por %p216, %p217
    %p219 = scmp.ne.s32.totalorder %s210, %s211
    %p220 = scmp.eq.s32.totalorder %s20, 0
    %p221 = por %p219, %p220
    %p222 = scmp.ne.s32.totalorder %s210, %s211
    %p223 = scmp.eq.s32.totalorder %s21, 1
    %p224 = por %p222, %p223
    %p226 = scmp.ne.s32.totalorder %s211, %s225
    %p227 = scmp.eq.s32.totalorder %s21, 0
    %p228 = por %p226, %p227
    %s229 = ssub.s32 %s22, %s34
    %s230 = ssub.s32 %s23, %s30
    %s231 = sor.u32 %s229, %s230
    %p232 = scmp.eq.s32.totalorder %s231, 0
    %s234 = sadd.s32 %s233, 1
    %s235 = scalar_select %p232, %s233, %s234
    %p238 = pneg %p232
    %p239 = scmp.eq.s32.totalorder %s15, 1
    %p240 = por %p238, %p239
    %p241 = scmp.ne.s32.totalorder %s233, %s236
    %p242 = scmp.eq.s32.totalorder %s15, 0
    %p243 = por %p241, %p242
    %p244 = scmp.ne.s32.totalorder %s233, %s236
    %p245 = scmp.eq.s32.totalorder %s20, 1
    %p246 = por %p244, %p245
    %p247 = scmp.ne.s32.totalorder %s236, %s237
    %p248 = scmp.eq.s32.totalorder %s20, 0
    %p249 = por %p247, %p248
    %p250 = scmp.ne.s32.totalorder %s236, %s237
    %p251 = scmp.eq.s32.totalorder %s21, 1
    %p252 = por %p250, %p251
    %p254 = scmp.ne.s32.totalorder %s237, %s253
    %p255 = scmp.eq.s32.totalorder %s21, 0
    %p256 = por %p254, %p255
    %p257 = scmp.le.s32.totalorder 1, %s15
    %p258 = scmp.lt.s32.totalorder %s15, 3
    %p259 = pnand %p257, %p258
    %p260 = pneg %p259
    // Predicated region
    $region9: #{_bottleneck_forward_impl.1} parent=5 // pred_check
      _
    $region10: #{_bottleneck_forward_impl.1} parent=5 // pred_check_branch
      %262 = sbr.rel (%p259) target = $region12
    $region11: #{_bottleneck_forward_impl.1} parent=5 // pred_region
      %s263 = ssub.s32 %s15, 1
      // Predicated region
      $region13: #{_bottleneck_forward_impl.1} parent=11 // pred_check
        %p264 = pneg %p74
      $region14: #{_bottleneck_forward_impl.1} parent=11 // pred_check_branch
        %266 = sbr.rel (%p264) target = $region16
      $region15: #{_bottleneck_forward_impl.1} parent=11 // pred_region
        _
      $region16: #{_bottleneck_forward_impl.1} parent=11 // pred_fallthru
        _
      // Predicated region
      $region17: #{_bottleneck_forward_impl.1} parent=11 // pred_check
        %p267 = pneg %p95
      $region18: #{_bottleneck_forward_impl.1} parent=11 // pred_check_branch
        %269 = sbr.rel (%p267) target = $region20
      $region19: #{_bottleneck_forward_impl.1} parent=11 // pred_region
        _
      $region20: #{_bottleneck_forward_impl.1} parent=11 // pred_fallthru
        _
      // Predicated region
      $region21: #{_bottleneck_forward_impl.1} parent=11 // pred_check
        %p270 = pneg %p116
      $region22: #{_bottleneck_forward_impl.1} parent=11 // pred_check_branch
        %272 = sbr.rel (%p270) target = $region24
      $region23: #{_bottleneck_forward_impl.1} parent=11 // pred_region
        _
      $region24: #{_bottleneck_forward_impl.1} parent=11 // pred_fallthru
        _
      // Predicated region
      $region25: #{_bottleneck_forward_impl.1} parent=11 // pred_check
        %p273 = pneg %p137
      $region26: #{_bottleneck_forward_impl.1} parent=11 // pred_check_branch
        %275 = sbr.rel (%p273) target = $region28
      $region27: #{_bottleneck_forward_impl.1} parent=11 // pred_region
        _
      $region28: #{_bottleneck_forward_impl.1} parent=11 // pred_fallthru
        _
      // Predicated region
      $region29: #{_bottleneck_forward_impl.1} parent=11 // pred_check
        %p276 = pneg %p158
      $region30: #{_bottleneck_forward_impl.1} parent=11 // pred_check_branch
        %278 = sbr.rel (%p276) target = $region32
      $region31: #{_bottleneck_forward_impl.1} parent=11 // pred_region
        _
      $region32: #{_bottleneck_forward_impl.1} parent=11 // pred_fallthru
        _
      // Predicated region
      $region33: #{_bottleneck_forward_impl.1} parent=11 // pred_check
        %p279 = pneg %p179
      $region34: #{_bottleneck_forward_impl.1} parent=11 // pred_check_branch
        %281 = sbr.rel (%p279) target = $region36
      $region35: #{_bottleneck_forward_impl.1} parent=11 // pred_region
        _
      $region36: #{_bottleneck_forward_impl.1} parent=11 // pred_fallthru
        _
      // Predicated region
      $region37: #{_bottleneck_forward_impl.1} parent=11 // pred_check
        %p282 = pneg %p200
      $region38: #{_bottleneck_forward_impl.1} parent=11 // pred_check_branch
        %284 = sbr.rel (%p282) target = $region40
      $region39: #{_bottleneck_forward_impl.1} parent=11 // pred_region
        _
      $region40: #{_bottleneck_forward_impl.1} parent=11 // pred_fallthru
        _
      // Predicated region
      $region41: #{_bottleneck_forward_impl.1} parent=11 // pred_check
        %p285 = pneg %p221
      $region42: #{_bottleneck_forward_impl.1} parent=11 // pred_check_branch
        %287 = sbr.rel (%p285) target = $region44
      $region43: #{_bottleneck_forward_impl.1} parent=11 // pred_region
        _
      $region44: #{_bottleneck_forward_impl.1} parent=11 // pred_fallthru
        _
    $region12: #{_bottleneck_forward_impl.1} parent=5 // pred_fallthru
      _
    %p288 = scmp.lt.s32.totalorder %s15, 2
    // Predicated region
    $region45: #{_bottleneck_forward_impl.1} parent=5 // pred_check
      %p289 = pneg %p288
    $region46: #{_bottleneck_forward_impl.1} parent=5 // pred_check_branch
      %291 = sbr.rel (%p289) target = $region48
    $region47: #{_bottleneck_forward_impl.1} parent=5 // pred_region
      // Predicated region
      $region49: #{_bottleneck_forward_impl.1} parent=47 // pred_check
        %p292 = pneg %p47
      $region50: #{_bottleneck_forward_impl.1} parent=47 // pred_check_branch
        %294 = sbr.rel (%p292) target = $region52
      $region51: #{_bottleneck_forward_impl.1} parent=47 // pred_region
        %p295 = scmp.lt.s32.totalorder %s22, 1
        %s296 = scalar_select %p295, %s22, 1
        %s297 = smul.addr %s296, 72
        %s298 = smul.addr %s297, 4
        %s299 = scalar_lea.vmem %s0, %s298
      $region52: #{_bottleneck_forward_impl.1} parent=47 // pred_fallthru
        _
    $region48: #{_bottleneck_forward_impl.1} parent=5 // pred_fallthru
      _
    %p300 = scmp.le.s32.totalorder 1, %s15
    %p301 = scmp.lt.s32.totalorder %s15, 3
    %p302 = pnand %p300, %p301
    %p303 = pneg %p302
    // Predicated region
    $region53: #{_bottleneck_forward_impl.1} parent=5 // pred_check
      _
    $region54: #{_bottleneck_forward_impl.1} parent=5 // pred_check_branch
      %305 = sbr.rel (%p302) target = $region56
    $region55: #{_bottleneck_forward_impl.1} parent=5 // pred_region
      %s306 = ssub.s32 %s15, 1
      %p307 = scmp.lt.s32.totalorder %s24, 1
      %s308 = scalar_select %p307, %s24, 1
      %s309 = smul.addr %s308, 72
      %s310 = smul.addr %s309, 4
      %s311 = scalar_lea.vmem %s0, %s310
      %p312 = pneg %p53
      %p313 = pneg %p50
      %p314 = pneg %p74
      %p315 = pneg %p71
      %p316 = pneg %p95
      %p317 = pneg %p92
      %p318 = pneg %p116
      %p319 = pneg %p113
      %p320 = pneg %p137
      %p321 = pneg %p134
      %p322 = pneg %p158
      %p323 = pneg %p155
      %p324 = pneg %p179
      %p325 = pneg %p176
      %p326 = pneg %p200
      %p327 = pneg %p197
      %p328 = pneg %p221
      %p329 = pneg %p218
      %p330 = pneg %p249
      %p331 = pneg %p246
      %s332 = smul.u32 8, %s25
      %p333 = scmp.lt.s32.totalorder %s24, 1
      %s334 = scalar_select %p333, %s24, 1
      %p335 = scmp.lt.s32.totalorder %s332, 7
      %s336 = scalar_select %p335, %s332, 7
      %s337 = smul.addr %s334, 8
      %s338 = sadd.s32 %s336, %s337
      %s339 = smul.addr %s338, 4
      %s340 = scalar_lea.vmem %s9, %s339
      %p341 = scmp.lt.s32.totalorder %s24, 1
      %s342 = scalar_select %p341, %s24, 1
      %s343 = smul.addr %s342, 72
      %s344 = smul.addr %s343, 4
      %s345 = scalar_lea.vmem %s0, %s344
      %s346 = smul.u32 8, %s25
      %p347 = scmp.lt.s32.totalorder %s24, 1
      %s348 = scalar_select %p347, %s24, 1
      %p349 = scmp.lt.s32.totalorder %s346, 7
      %s350 = scalar_select %p349, %s346, 7
      %s351 = smul.addr %s348, 8
      %s352 = sadd.s32 %s350, %s351
      %s353 = smul.addr %s352, 4
      %s354 = scalar_lea.vmem %s9, %s353
      %s355 = smul.u32 8, %s25
      %s357 = smul.u32 %s25, 8
      %v358 = vld [vmem:[%s1] sm:$0xf]
      %v359 = vld [vmem:[%s1 + $0x4] sm:$0xf]
      %v360 = vld [vmem:[%s1 + $0x8] sm:$0xf]
      %v361 = vld [vmem:[%s1 + $0xc] sm:$0xf]
      %v362 = vld [vmem:[%s1 + $0x10] sm:$0xf]
      %v363 = vld [vmem:[%s1 + $0x14] sm:$0xf]
      %v364 = vld [vmem:[%s1 + $0x18] sm:$0xf]
      %v365 = vld [vmem:[%s1 + $0x1c] sm:$0xf]
      %v366 = vld [vmem:[%s1 + $0x20] sm:$0xf]
      %v367 = vld [vmem:[%s1 + $0x24] sm:$0xf]
      %v368 = vld [vmem:[%s1 + $0x28] sm:$0xf]
      %v369 = vld [vmem:[%s1 + $0x2c] sm:$0xf]
      %v370 = vld [vmem:[%s1 + $0x30] sm:$0xf]
      %v371 = vld [vmem:[%s1 + $0x34] sm:$0xf]
      %v372 = vld [vmem:[%s1 + $0x38] sm:$0xf]
      %v373 = vld [vmem:[%s1 + $0x3c] sm:$0xf]
      %v374 = vld [vmem:[%s2] sm:$0x1]
      %s375 = smul.u32 %s357, 2
      %s376 = smul.addr %s375, 4
      %s377 = scalar_lea.vmem %s345, %s376
      %v378 = vld [vmem:[%s377] sm:$0xf]
      %v379 = vld [vmem:[%s377 + $0x4] sm:$0x1]
      %v380 = vld [vmem:[%s377 + $0x8] sm:$0xf]
      %v381 = vld [vmem:[%s377 + $0xc] sm:$0x1]
      %v382 = vld [vmem:[%s377 + $0x10] sm:$0xf]
      %v383 = vld [vmem:[%s377 + $0x14] sm:$0x1]
      %v384 = vld [vmem:[%s377 + $0x18] sm:$0xf]
      %v385 = vld [vmem:[%s377 + $0x1c] sm:$0x1]
      %v386 = vld [vmem:[%s377 + $0x20] sm:$0xf]
      %v387 = vld [vmem:[%s377 + $0x24] sm:$0x1]
      %v388 = vld [vmem:[%s377 + $0x28] sm:$0xf]
      %v389 = vld [vmem:[%s377 + $0x2c] sm:$0x1]
      %v390 = vld [vmem:[%s377 + $0x30] sm:$0xf]
      %v391 = vld [vmem:[%s377 + $0x34] sm:$0x1]
      %v392 = vld [vmem:[%s377 + $0x38] sm:$0xf]
      %v393 = vld [vmem:[%s377 + $0x3c] sm:$0x1]
      %v394 = vld [vmem:[%s377 + $0x40] sm:$0xf]
      %v395 = vld [vmem:[%s377 + $0x44] sm:$0x1]
      %v414 = vrot.slane %v378, 3
      %v415 = vrot.slane %v379, 3
      %v416 = vrot.slane %v380, 3
      %v417 = vrot.slane %v381, 3
      %v418 = vrot.slane %v382, 3
      %v419 = vrot.slane %v383, 3
      %v420 = vrot.slane %v384, 3
      %v421 = vrot.slane %v385, 3
      %v422 = vrot.slane %v386, 3
      %v423 = vrot.slane %v387, 3
      %v424 = vrot.slane %v388, 3
      %v425 = vrot.slane %v389, 3
      %v426 = vrot.slane %v390, 3
      %v427 = vrot.slane %v391, 3
      %v428 = vrot.slane %v392, 3
      %v429 = vrot.slane %v393, 3
      %v430 = vrot.slane %v394, 3
      %v431 = vrot.slane %v395, 3
      %vm432 = vcmask 1040384
      %v435 = vsel %vm432, %v378, %v414
      %vm437 = vcmask 1041409
      %v438 = vsel %vm437, %v378, %v414
      %v440 = vrot.slane %v438, 1
      %vm441 = vcmask 1042434
      %v442 = vsel %vm441, %v378, %v414
      %v444 = vrot.slane %v442, 2
      %vm445 = vcmask 1043459
      %v446 = vsel %vm445, %v378, %v414
      %v448 = vrot.slane %v446, 3
      %v451 = vsel %vm432, %v379, %v415
      %v455 = vsel %vm432, %v380, %v416
      %v457 = vsel %vm437, %v380, %v416
      %v459 = vrot.slane %v457, 1
      %v460 = vsel %vm441, %v380, %v416
      %v462 = vrot.slane %v460, 2
      %v463 = vsel %vm445, %v380, %v416
      %v465 = vrot.slane %v463, 3
      %v468 = vsel %vm432, %v381, %v417
      %v472 = vsel %vm432, %v382, %v418
      %v474 = vsel %vm437, %v382, %v418
      %v476 = vrot.slane %v474, 1
      %v477 = vsel %vm441, %v382, %v418
      %v479 = vrot.slane %v477, 2
      %v480 = vsel %vm445, %v382, %v418
      %v482 = vrot.slane %v480, 3
      %v485 = vsel %vm432, %v383, %v419
      %v489 = vsel %vm432, %v384, %v420
      %v491 = vsel %vm437, %v384, %v420
      %v493 = vrot.slane %v491, 1
      %v494 = vsel %vm441, %v384, %v420
      %v496 = vrot.slane %v494, 2
      %v497 = vsel %vm445, %v384, %v420
      %v499 = vrot.slane %v497, 3
      %v502 = vsel %vm432, %v385, %v421
      %v506 = vsel %vm432, %v386, %v422
      %v508 = vsel %vm437, %v386, %v422
      %v510 = vrot.slane %v508, 1
      %v511 = vsel %vm441, %v386, %v422
      %v513 = vrot.slane %v511, 2
      %v514 = vsel %vm445, %v386, %v422
      %v516 = vrot.slane %v514, 3
      %v519 = vsel %vm432, %v387, %v423
      %v523 = vsel %vm432, %v388, %v424
      %v525 = vsel %vm437, %v388, %v424
      %v527 = vrot.slane %v525, 1
      %v528 = vsel %vm441, %v388, %v424
      %v530 = vrot.slane %v528, 2
      %v531 = vsel %vm445, %v388, %v424
      %v533 = vrot.slane %v531, 3
      %v536 = vsel %vm432, %v389, %v425
      %v540 = vsel %vm432, %v390, %v426
      %v542 = vsel %vm437, %v390, %v426
      %v544 = vrot.slane %v542, 1
      %v545 = vsel %vm441, %v390, %v426
      %v547 = vrot.slane %v545, 2
      %v548 = vsel %vm445, %v390, %v426
      %v550 = vrot.slane %v548, 3
      %v553 = vsel %vm432, %v391, %v427
      %v557 = vsel %vm432, %v392, %v428
      %v559 = vsel %vm437, %v392, %v428
      %v561 = vrot.slane %v559, 1
      %v562 = vsel %vm441, %v392, %v428
      %v564 = vrot.slane %v562, 2
      %v565 = vsel %vm445, %v392, %v428
      %v567 = vrot.slane %v565, 3
      %v570 = vsel %vm432, %v393, %v429
      %v574 = vsel %vm432, %v394, %v430
      %v576 = vsel %vm437, %v394, %v430
      %v578 = vrot.slane %v576, 1
      %v579 = vsel %vm441, %v394, %v430
      %v581 = vrot.slane %v579, 2
      %v582 = vsel %vm445, %v394, %v430
      %v584 = vrot.slane %v582, 3
      %v587 = vsel %vm432, %v395, %v431
      %v589 = vunpack.i.l.s16 %v435
      %v590 = vunpack.i.h.s16 %v435
      %v591 = vunpack.i.l.s16 %v440
      %v592 = vunpack.i.h.s16 %v440
      %v593 = vunpack.i.l.s16 %v444
      %v594 = vunpack.i.h.s16 %v444
      %v595 = vunpack.i.l.s16 %v448
      %v596 = vunpack.i.h.s16 %v448
      %v597 = vunpack.i.l.s16 %v451
      %v598 = vunpack.i.l.s16 %v455
      %v599 = vunpack.i.h.s16 %v455
      %v600 = vunpack.i.l.s16 %v459
      %v601 = vunpack.i.h.s16 %v459
      %v602 = vunpack.i.l.s16 %v462
      %v603 = vunpack.i.h.s16 %v462
      %v604 = vunpack.i.l.s16 %v465
      %v605 = vunpack.i.h.s16 %v465
      %v606 = vunpack.i.l.s16 %v468
      %v607 = vunpack.i.l.s16 %v472
      %v608 = vunpack.i.h.s16 %v472
      %v609 = vunpack.i.l.s16 %v476
      %v610 = vunpack.i.h.s16 %v476
      %v611 = vunpack.i.l.s16 %v479
      %v612 = vunpack.i.h.s16 %v479
      %v613 = vunpack.i.l.s16 %v482
      %v614 = vunpack.i.h.s16 %v482
      %v615 = vunpack.i.l.s16 %v485
      %v616 = vunpack.i.l.s16 %v489
      %v617 = vunpack.i.h.s16 %v489
      %v618 = vunpack.i.l.s16 %v493
      %v619 = vunpack.i.h.s16 %v493
      %v620 = vunpack.i.l.s16 %v496
      %v621 = vunpack.i.h.s16 %v496
      %v622 = vunpack.i.l.s16 %v499
      %v623 = vunpack.i.h.s16 %v499
      %v624 = vunpack.i.l.s16 %v502
      %v625 = vunpack.i.l.s16 %v506
      %v626 = vunpack.i.h.s16 %v506
      %v627 = vunpack.i.l.s16 %v510
      %v628 = vunpack.i.h.s16 %v510
      %v629 = vunpack.i.l.s16 %v513
      %v630 = vunpack.i.h.s16 %v513
      %v631 = vunpack.i.l.s16 %v516
      %v632 = vunpack.i.h.s16 %v516
      %v633 = vunpack.i.l.s16 %v519
      %v634 = vunpack.i.l.s16 %v523
      %v635 = vunpack.i.h.s16 %v523
      %v636 = vunpack.i.l.s16 %v527
      %v637 = vunpack.i.h.s16 %v527
      %v638 = vunpack.i.l.s16 %v530
      %v639 = vunpack.i.h.s16 %v530
      %v640 = vunpack.i.l.s16 %v533
      %v641 = vunpack.i.h.s16 %v533
      %v642 = vunpack.i.l.s16 %v536
      %v643 = vunpack.i.l.s16 %v540
      %v644 = vunpack.i.h.s16 %v540
      %v645 = vunpack.i.l.s16 %v544
      %v646 = vunpack.i.h.s16 %v544
      %v647 = vunpack.i.l.s16 %v547
      %v648 = vunpack.i.h.s16 %v547
      %v649 = vunpack.i.l.s16 %v550
      %v650 = vunpack.i.h.s16 %v550
      %v651 = vunpack.i.l.s16 %v553
      %v652 = vunpack.i.l.s16 %v557
      %v653 = vunpack.i.h.s16 %v557
      %v654 = vunpack.i.l.s16 %v561
      %v655 = vunpack.i.h.s16 %v561
      %v656 = vunpack.i.l.s16 %v564
      %v657 = vunpack.i.h.s16 %v564
      %v658 = vunpack.i.l.s16 %v567
      %v659 = vunpack.i.h.s16 %v567
      %v660 = vunpack.i.l.s16 %v570
      %v661 = vunpack.i.l.s16 %v574
      %v662 = vunpack.i.h.s16 %v574
      %v663 = vunpack.i.l.s16 %v578
      %v664 = vunpack.i.h.s16 %v578
      %v665 = vunpack.i.l.s16 %v581
      %v666 = vunpack.i.h.s16 %v581
      %v667 = vunpack.i.l.s16 %v584
      %v668 = vunpack.i.h.s16 %v584
      %v669 = vunpack.i.l.s16 %v587
      %v671 = vperm.slane %v374, 0
      %v673 = vpack.i.b16 %v590, %v589
      %v674 = vpack.i.b16 %v592, %v591
      %v675 = vpack.i.b16 %v594, %v593
      %v676 = vpack.i.b16 %v596, %v595
      %v677 = vpack.i.b16 %v598, %v597
      %v678 = vpack.i.b16 %v600, %v599
      %v679 = vpack.i.b16 %v602, %v601
      %v680 = vpack.i.b16 %v604, %v603
      %v681 = vpack.i.b16 %v606, %v605
      %v682 = vpack.i.b16 %v608, %v607
      %v683 = vpack.i.b16 %v610, %v609
      %v684 = vpack.i.b16 %v612, %v611
      %v685 = vpack.i.b16 %v614, %v613
      %v686 = vpack.i.b16 %v616, %v615
      %v687 = vpack.i.b16 %v618, %v617
      %v688 = vpack.i.b16 %v620, %v619
      %v689 = vpack.i.b16 %v622, %v621
      %v690 = vpack.i.b16 %v624, %v623
      %v691 = vpack.i.b16 %v626, %v625
      %v692 = vpack.i.b16 %v628, %v627
      %v693 = vpack.i.b16 %v630, %v629
      %v694 = vpack.i.b16 %v632, %v631
      %v695 = vpack.i.b16 %v634, %v633
      %v696 = vpack.i.b16 %v636, %v635
      %v697 = vpack.i.b16 %v638, %v637
      %v698 = vpack.i.b16 %v640, %v639
      %v699 = vpack.i.b16 %v642, %v641
      %v700 = vpack.i.b16 %v644, %v643
      %v701 = vpack.i.b16 %v646, %v645
      %v702 = vpack.i.b16 %v648, %v647
      %v703 = vpack.i.b16 %v650, %v649
      %v704 = vpack.i.b16 %v652, %v651
      %v705 = vpack.i.b16 %v654, %v653
      %v706 = vpack.i.b16 %v656, %v655
      %v707 = vpack.i.b16 %v658, %v657
      %v708 = vpack.i.b16 %v660, %v659
      %v709 = vpack.i.b16 %v662, %v661
      %v710 = vpack.i.b16 %v664, %v663
      %v711 = vpack.i.b16 %v666, %v665
      %v712 = vpack.i.b16 %v668, %v667
      %715 = vst [vmem:[#allocation1] ss:$9 sm:$0xff] %v673
      %s717 = scalar_lea.vmem [#allocation1], 1
      %718 = vst [vmem:[%s717] ss:$9 sm:$0xff] %v674
      %s720 = scalar_lea.vmem [#allocation1], 2
      %721 = vst [vmem:[%s720] ss:$9 sm:$0xff] %v675
      %s723 = scalar_lea.vmem [#allocation1], 3
      %724 = vst [vmem:[%s723] ss:$9 sm:$0xff] %v676
      %s726 = scalar_lea.vmem [#allocation1], 4
      %727 = vst [vmem:[%s726] ss:$9 sm:$0xff] %v677
      %s729 = scalar_lea.vmem [#allocation1], 5
      %730 = vst [vmem:[%s729] ss:$9 sm:$0xff] %v678
      %s732 = scalar_lea.vmem [#allocation1], 6
      %733 = vst [vmem:[%s732] ss:$9 sm:$0xff] %v679
      %s735 = scalar_lea.vmem [#allocation1], 7
      %736 = vst [vmem:[%s735] ss:$9 sm:$0xff] %v680
      %v737 = vld [vmem:[#allocation1] sm:$0xff]
      %739 = vst [vmem:[#allocation1] ss:$9 sm:$0xff] %v681
      %741 = vst [vmem:[%s717] ss:$9 sm:$0xff] %v682
      %743 = vst [vmem:[%s720] ss:$9 sm:$0xff] %v683
      %745 = vst [vmem:[%s723] ss:$9 sm:$0xff] %v684
      %747 = vst [vmem:[%s726] ss:$9 sm:$0xff] %v685
      %749 = vst [vmem:[%s729] ss:$9 sm:$0xff] %v686
      %751 = vst [vmem:[%s732] ss:$9 sm:$0xff] %v687
      %753 = vst [vmem:[%s735] ss:$9 sm:$0xff] %v688
      %v754 = vld [vmem:[#allocation1] sm:$0xff]
      %756 = vst [vmem:[#allocation1] ss:$9 sm:$0xff] %v689
      %758 = vst [vmem:[%s717] ss:$9 sm:$0xff] %v690
      %760 = vst [vmem:[%s720] ss:$9 sm:$0xff] %v691
      %762 = vst [vmem:[%s723] ss:$9 sm:$0xff] %v692
      %764 = vst [vmem:[%s726] ss:$9 sm:$0xff] %v693
      %766 = vst [vmem:[%s729] ss:$9 sm:$0xff] %v694
      %768 = vst [vmem:[%s732] ss:$9 sm:$0xff] %v695
      %770 = vst [vmem:[%s735] ss:$9 sm:$0xff] %v696
      %v771 = vld [vmem:[#allocation1] sm:$0xff]
      %773 = vst [vmem:[#allocation1] ss:$9 sm:$0xff] %v697
      %775 = vst [vmem:[%s717] ss:$9 sm:$0xff] %v698
      %777 = vst [vmem:[%s720] ss:$9 sm:$0xff] %v699
      %779 = vst [vmem:[%s723] ss:$9 sm:$0xff] %v700
      %781 = vst [vmem:[%s726] ss:$9 sm:$0xff] %v701
      %783 = vst [vmem:[%s729] ss:$9 sm:$0xff] %v702
      %785 = vst [vmem:[%s732] ss:$9 sm:$0xff] %v703
      %787 = vst [vmem:[%s735] ss:$9 sm:$0xff] %v704
      %v788 = vld [vmem:[#allocation1] sm:$0xff]
      %790 = vst [vmem:[#allocation1] ss:$9 sm:$0xff] %v705
      %792 = vst [vmem:[%s717] ss:$9 sm:$0xff] %v706
      %794 = vst [vmem:[%s720] ss:$9 sm:$0xff] %v707
      %796 = vst [vmem:[%s723] ss:$9 sm:$0xff] %v708
      %798 = vst [vmem:[%s726] ss:$9 sm:$0xff] %v709
      %800 = vst [vmem:[%s729] ss:$9 sm:$0xff] %v710
      %802 = vst [vmem:[%s732] ss:$9 sm:$0xff] %v711
      %804 = vst [vmem:[%s735] ss:$9 sm:$0xff] %v712
      %v805 = vld [vmem:[#allocation1] sm:$0xff]
      %807 = vst [vmem:[#allocation1] ss:$9 sm:$0xff] %v669
      %v808 = vld [vmem:[#allocation1] sm:$0xff]
      %v831 = vunpack.c.l.b16 %v358
      %v832 = vunpack.c.l.b16 %v359
      %v833 = vunpack.c.l.b16 %v360
      %v834 = vunpack.c.l.b16 %v361
      %v835 = vunpack.c.l.b16 %v362
      %v836 = vunpack.c.l.b16 %v363
      %v837 = vunpack.c.l.b16 %v364
      %v838 = vunpack.c.l.b16 %v365
      %v839 = vunpack.c.l.b16 %v366
      %v840 = vunpack.c.l.b16 %v367
      %v841 = vunpack.c.l.b16 %v368
      %v842 = vunpack.c.l.b16 %v369
      %v843 = vunpack.c.l.b16 %v370
      %v844 = vunpack.c.l.b16 %v371
      %v845 = vunpack.c.l.b16 %v372
      %v846 = vunpack.c.l.b16 %v373
      %v847 = vpack.c.b16 %v832, %v831
      %v848 = vpack.c.b16 %v834, %v833
      %v849 = vpack.c.b16 %v836, %v835
      %v850 = vpack.c.b16 %v838, %v837
      %v851 = vpack.c.b16 %v840, %v839
      %v852 = vpack.c.b16 %v842, %v841
      %v853 = vpack.c.b16 %v844, %v843
      %v854 = vpack.c.b16 %v846, %v845
      %863 = vmatpush.bf16.msra.mxu0 %v854
      %864 = vmatpush.bf16.msra.mxu0 %v853
      %865 = vmatpush.bf16.msra.mxu0 %v852
      %866 = vmatpush.bf16.msra.mxu0 %v851
      %867 = vmatpush.bf16.msra.mxu0 %v850
      %868 = vmatpush.bf16.msra.mxu0 %v849
      %869 = vmatpush.bf16.msra.mxu0 %v848
      %870 = vmatpush.bf16.msra.mxu0 %v847
      %871 = vmatmul.bf16.gmra.mxu0 %v737
      %v872 = vpop.f32.mrf.mxu0
      %v873 = vadd.f32 %v671, %v872
      %v874 = vpop.f32.mrf.mxu0
      %v875 = vadd.f32 %v671, %v874
      %876 = vmatmul.bf16.gmra.mxu0 %v754
      %v877 = vpop.f32.mrf.mxu0
      %v878 = vadd.f32 %v671, %v877
      %v879 = vpop.f32.mrf.mxu0
      %v880 = vadd.f32 %v671, %v879
      %881 = vmatmul.bf16.gmra.mxu0 %v771
      %v882 = vpop.f32.mrf.mxu0
      %v883 = vadd.f32 %v671, %v882
      %v884 = vpop.f32.mrf.mxu0
      %v885 = vadd.f32 %v671, %v884
      %886 = vmatmul.bf16.gmra.mxu0 %v788
      %v887 = vpop.f32.mrf.mxu0
      %v888 = vadd.f32 %v671, %v887
      %v889 = vpop.f32.mrf.mxu0
      %v890 = vadd.f32 %v671, %v889
      %891 = vmatmul.bf16.gmra.mxu0 %v805
      %v892 = vpop.f32.mrf.mxu0
      %v893 = vadd.f32 %v671, %v892
      %v894 = vpop.f32.mrf.mxu0
      %v895 = vadd.f32 %v671, %v894
      %896 = vmatmul.bf16.gmra.mxu0 %v808
      %v897 = vpop.f32.mrf.mxu0
      %v898 = vadd.f32 %v671, %v897
      %v899 = vpop.f32.mrf.mxu0
      %900 = vdwg.mxu0
      %v901 = vmax.f32 %v873, 0.0
      %v902 = vmax.f32 %v875, 0.0
      %v903 = vmax.f32 %v878, 0.0
      %v904 = vmax.f32 %v880, 0.0
      %v905 = vmax.f32 %v883, 0.0
      %v906 = vmax.f32 %v885, 0.0
      %v907 = vmax.f32 %v888, 0.0
      %v908 = vmax.f32 %v890, 0.0
      %v909 = vmax.f32 %v893, 0.0
      %v910 = vmax.f32 %v895, 0.0
      %v911 = vmax.f32 %v898, 0.0
      %v923 = vrot.slane %v901, 1
      %v924 = vrot.slane %v901, 2
      %v925 = vrot.slane %v901, 3
      %v926 = vrot.slane %v901, 4
      %v927 = vrot.slane %v901, 5
      %v928 = vrot.slane %v901, 6
      %v929 = vrot.slane %v901, 7
      %v930 = vrot.slane %v902, 1
      %v931 = vrot.slane %v902, 2
      %v932 = vrot.slane %v902, 3
      %v933 = vrot.slane %v902, 4
      %v934 = vrot.slane %v902, 5
      %v935 = vrot.slane %v902, 6
      %v936 = vrot.slane %v902, 7
      %v937 = vrot.slane %v903, 1
      %v938 = vrot.slane %v903, 2
      %v939 = vrot.slane %v903, 3
      %v940 = vrot.slane %v903, 4
      %v941 = vrot.slane %v903, 5
      %v942 = vrot.slane %v903, 6
      %v943 = vrot.slane %v903, 7
      %v944 = vrot.slane %v904, 1
      %v945 = vrot.slane %v904, 2
      %v946 = vrot.slane %v904, 3
      %v947 = vrot.slane %v904, 4
      %v948 = vrot.slane %v904, 5
      %v949 = vrot.slane %v904, 6
      %v950 = vrot.slane %v904, 7
      %v951 = vrot.slane %v905, 1
      %v952 = vrot.slane %v905, 2
      %v953 = vrot.slane %v905, 3
      %v954 = vrot.slane %v905, 4
      %v955 = vrot.slane %v905, 5
      %v956 = vrot.slane %v905, 6
      %v957 = vrot.slane %v905, 7
      %v958 = vrot.slane %v906, 1
      %v959 = vrot.slane %v906, 2
      %v960 = vrot.slane %v906, 3
      %v961 = vrot.slane %v906, 4
      %v962 = vrot.slane %v906, 5
      %v963 = vrot.slane %v906, 6
      %v964 = vrot.slane %v906, 7
      %v965 = vrot.slane %v907, 1
      %v966 = vrot.slane %v907, 2
      %v967 = vrot.slane %v907, 3
      %v968 = vrot.slane %v907, 4
      %v969 = vrot.slane %v907, 5
      %v970 = vrot.slane %v907, 6
      %v971 = vrot.slane %v907, 7
      %v972 = vrot.slane %v908, 1
      %v973 = vrot.slane %v908, 2
      %v974 = vrot.slane %v908, 3
      %v975 = vrot.slane %v908, 4
      %v976 = vrot.slane %v908, 5
      %v977 = vrot.slane %v908, 6
      %v978 = vrot.slane %v908, 7
      %v979 = vrot.slane %v909, 1
      %v980 = vrot.slane %v909, 2
      %v981 = vrot.slane %v909, 3
      %v982 = vrot.slane %v909, 4
      %v983 = vrot.slane %v909, 5
      %v984 = vrot.slane %v909, 6
      %v985 = vrot.slane %v909, 7
      %v986 = vrot.slane %v910, 1
      %v987 = vrot.slane %v910, 2
      %v988 = vrot.slane %v910, 3
      %v989 = vrot.slane %v910, 4
      %v990 = vrot.slane %v910, 5
      %v991 = vrot.slane %v910, 6
      %v992 = vrot.slane %v910, 7
      %993 = vst [vmem:[#allocation1] ss:$9 sm:$0xff] %v901
      %s994 = scalar_lea.vmem [#allocation1], 1
      %995 = vst [vmem:[%s994] ss:$9 sm:$0xff] %v923
      %s996 = scalar_lea.vmem [#allocation1], 2
      %997 = vst [vmem:[%s996] ss:$9 sm:$0xff] %v924
      %s998 = scalar_lea.vmem [#allocation1], 3
      %999 = vst [vmem:[%s998] ss:$9 sm:$0xff] %v925
      %s1000 = scalar_lea.vmem [#allocation1], 4
      %1001 = vst [vmem:[%s1000] ss:$9 sm:$0xff] %v926
      %s1002 = scalar_lea.vmem [#allocation1], 5
      %1003 = vst [vmem:[%s1002] ss:$9 sm:$0xff] %v927
      %s1004 = scalar_lea.vmem [#allocation1], 6
      %1005 = vst [vmem:[%s1004] ss:$9 sm:$0xff] %v928
      %s1006 = scalar_lea.vmem [#allocation1], 7
      %1007 = vst [vmem:[%s1006] ss:$9 sm:$0xff] %v929
      %v1008 = vld [vmem:[#allocation1] sm:$0xff]
      %1009 = vst [vmem:[#allocation1] ss:$9 sm:$0xff] %v902
      %v1010 = vld [vmem:[#allocation1] sm:$0xff]
      %1011 = vst [vmem:[#allocation1] ss:$9 sm:$0xff] %v930
      %1012 = vst [vmem:[%s994] ss:$9 sm:$0xff] %v931
      %1013 = vst [vmem:[%s996] ss:$9 sm:$0xff] %v932
      %1014 = vst [vmem:[%s998] ss:$9 sm:$0xff] %v933
      %1015 = vst [vmem:[%s1000] ss:$9 sm:$0xff] %v934
      %1016 = vst [vmem:[%s1002] ss:$9 sm:$0xff] %v935
      %1017 = vst [vmem:[%s1004] ss:$9 sm:$0xff] %v936
      %1018 = vst [vmem:[%s1006] ss:$9 sm:$0xff] %v903
      %v1019 = vld [vmem:[#allocation1] sm:$0xff]
      %1020 = vst [vmem:[#allocation1] ss:$9 sm:$0xff] %v937
      %v1021 = vld [vmem:[#allocation1] sm:$0xff]
      %1022 = vst [vmem:[#allocation1] ss:$9 sm:$0xff] %v938
      %1023 = vst [vmem:[%s994] ss:$9 sm:$0xff] %v939
      %1024 = vst [vmem:[%s996] ss:$9 sm:$0xff] %v940
      %1025 = vst [vmem:[%s998] ss:$9 sm:$0xff] %v941
      %1026 = vst [vmem:[%s1000] ss:$9 sm:$0xff] %v942
      %1027 = vst [vmem:[%s1002] ss:$9 sm:$0xff] %v943
      %1028 = vst [vmem:[%s1004] ss:$9 sm:$0xff] %v904
      %1029 = vst [vmem:[%s1006] ss:$9 sm:$0xff] %v944
      %v1030 = vld [vmem:[#allocation1] sm:$0xff]
      %1031 = vst [vmem:[#allocation1] ss:$9 sm:$0xff] %v945
      %v1032 = vld [vmem:[#allocation1] sm:$0xff]
      %1033 = vst [vmem:[#allocation1] ss:$9 sm:$0xff] %v946
      %1034 = vst [vmem:[%s994] ss:$9 sm:$0xff] %v947
      %1035 = vst [vmem:[%s996] ss:$9 sm:$0xff] %v948
      %1036 = vst [vmem:[%s998] ss:$9 sm:$0xff] %v949
      %1037 = vst [vmem:[%s1000] ss:$9 sm:$0xff] %v950
      %1038 = vst [vmem:[%s1002] ss:$9 sm:$0xff] %v905
      %1039 = vst [vmem:[%s1004] ss:$9 sm:$0xff] %v951
      %1040 = vst [vmem:[%s1006] ss:$9 sm:$0xff] %v952
      %v1041 = vld [vmem:[#allocation1] sm:$0xff]
      %1042 = vst [vmem:[#allocation1] ss:$9 sm:$0xff] %v953
      %v1043 = vld [vmem:[#allocation1] sm:$0xff]
      %1044 = vst [vmem:[#allocation1] ss:$9 sm:$0xff] %v954
      %1045 = vst [vmem:[%s994] ss:$9 sm:$0xff] %v955
      %1046 = vst [vmem:[%s996] ss:$9 sm:$0xff] %v956
      %1047 = vst [vmem:[%s998] ss:$9 sm:$0xff] %v957
      %1048 = vst [vmem:[%s1000] ss:$9 sm:$0xff] %v906
      %1049 = vst [vmem:[%s1002] ss:$9 sm:$0xff] %v958
      %1050 = vst [vmem:[%s1004] ss:$9 sm:$0xff] %v959
      %1051 = vst [vmem:[%s1006] ss:$9 sm:$0xff] %v960
      %v1052 = vld [vmem:[#allocation1] sm:$0xff]
      %1053 = vst [vmem:[#allocation1] ss:$9 sm:$0xff] %v961
      %v1054 = vld [vmem:[#allocation1] sm:$0xff]
      %1055 = vst [vmem:[#allocation1] ss:$9 sm:$0xff] %v962
      %1056 = vst [vmem:[%s994] ss:$9 sm:$0xff] %v963
      %1057 = vst [vmem:[%s996] ss:$9 sm:$0xff] %v964
      %1058 = vst [vmem:[%s998] ss:$9 sm:$0xff] %v907
      %1059 = vst [vmem:[%s1000] ss:$9 sm:$0xff] %v965
      %1060 = vst [vmem:[%s1002] ss:$9 sm:$0xff] %v966
      %1061 = vst [vmem:[%s1004] ss:$9 sm:$0xff] %v967
      %1062 = vst [vmem:[%s1006] ss:$9 sm:$0xff] %v968
      %v1063 = vld [vmem:[#allocation1] sm:$0xff]
      %1064 = vst [vmem:[#allocation1] ss:$9 sm:$0xff] %v969
      %v1065 = vld [vmem:[#allocation1] sm:$0xff]
      %1066 = vst [vmem:[#allocation1] ss:$9 sm:$0xff] %v970
      %1067 = vst [vmem:[%s994] ss:$9 sm:$0xff] %v971
      %1068 = vst [vmem:[%s996] ss:$9 sm:$0xff] %v908
      %1069 = vst [vmem:[%s998] ss:$9 sm:$0xff] %v972
      %1070 = vst [vmem:[%s1000] ss:$9 sm:$0xff] %v973
      %1071 = vst [vmem:[%s1002] ss:$9 sm:$0xff] %v974
      %1072 = vst [vmem:[%s1004] ss:$9 sm:$0xff] %v975
      %1073 = vst [vmem:[%s1006] ss:$9 sm:$0xff] %v976
      %v1074 = vld [vmem:[#allocation1] sm:$0xff]
      %1075 = vst [vmem:[#allocation1] ss:$9 sm:$0xff] %v977
      %v1076 = vld [vmem:[#allocation1] sm:$0xff]
      %1077 = vst [vmem:[#allocation1] ss:$9 sm:$0xff] %v978
      %1078 = vst [vmem:[%s994] ss:$9 sm:$0xff] %v909
      %1079 = vst [vmem:[%s996] ss:$9 sm:$0xff] %v979
      %1080 = vst [vmem:[%s998] ss:$9 sm:$0xff] %v980
      %1081 = vst [vmem:[%s1000] ss:$9 sm:$0xff] %v981
      %1082 = vst [vmem:[%s1002] ss:$9 sm:$0xff] %v982
      %1083 = vst [vmem:[%s1004] ss:$9 sm:$0xff] %v983
      %1084 = vst [vmem:[%s1006] ss:$9 sm:$0xff] %v984
      %v1085 = vld [vmem:[#allocation1] sm:$0xff]
      %1086 = vst [vmem:[#allocation1] ss:$9 sm:$0xff] %v985
      %v1087 = vld [vmem:[#allocation1] sm:$0xff]
      %1088 = vst [vmem:[#allocation1] ss:$9 sm:$0xff] %v910
      %1089 = vst [vmem:[%s994] ss:$9 sm:$0xff] %v986
      %1090 = vst [vmem:[%s996] ss:$9 sm:$0xff] %v987
      %1091 = vst [vmem:[%s998] ss:$9 sm:$0xff] %v988
      %1092 = vst [vmem:[%s1000] ss:$9 sm:$0xff] %v989
      %1093 = vst [vmem:[%s1002] ss:$9 sm:$0xff] %v990
      %1094 = vst [vmem:[%s1004] ss:$9 sm:$0xff] %v991
      %1095 = vst [vmem:[%s1006] ss:$9 sm:$0xff] %v992
      %v1096 = vld [vmem:[#allocation1] sm:$0xff]
      %1097 = vst [vmem:[#allocation1] ss:$9 sm:$0xff] %v911
      %v1098 = vld [vmem:[#allocation1] sm:$0xff]
      %v1117 = vpack.c.bf16 %v1008, %v1008
      %v1118 = vpack.c.bf16 %v1010, %v1010
      %v1119 = vpack.c.bf16 %v1019, %v1019
      %v1120 = vpack.c.bf16 %v1021, %v1021
      %v1121 = vpack.c.bf16 %v1030, %v1030
      %v1122 = vpack.c.bf16 %v1032, %v1032
      %v1123 = vpack.c.bf16 %v1041, %v1041
      %v1124 = vpack.c.bf16 %v1043, %v1043
      %v1125 = vpack.c.bf16 %v1052, %v1052
      %v1126 = vpack.c.bf16 %v1054, %v1054
      %v1127 = vpack.c.bf16 %v1063, %v1063
      %v1128 = vpack.c.bf16 %v1065, %v1065
      %v1129 = vpack.c.bf16 %v1074, %v1074
      %v1130 = vpack.c.bf16 %v1076, %v1076
      %v1131 = vpack.c.bf16 %v1085, %v1085
      %v1132 = vpack.c.bf16 %v1087, %v1087
      %v1133 = vpack.c.bf16 %v1096, %v1096
      %v1134 = vpack.c.bf16 %v1098, %v1098
      %1135 = vst [vmem:[#allocation2] sm:$0xf] %v1117
      %vm1136 = vcmask 1040384
      %vm1137 = vsmask.f32 256
      %vm1138 = vmand %vm1136, %vm1137
      %v1139 = vld [vmem:[#allocation2 + $0x4] sm:$0x1]
      %v1140 = vsel %vm1138, %v1118, %v1139
      %1141 = vst [vmem:[#allocation2 + $0x4] sm:$0x1] %v1140
      %1142 = vst [vmem:[#allocation2 + $0x8] sm:$0xf] %v1119
      %v1143 = vld [vmem:[#allocation2 + $0xc] sm:$0x1]
      %v1144 = vsel %vm1138, %v1120, %v1143
      %1145 = vst [vmem:[#allocation2 + $0xc] sm:$0x1] %v1144
      %1146 = vst [vmem:[#allocation2 + $0x10] sm:$0xf] %v1121
      %v1147 = vld [vmem:[#allocation2 + $0x14] sm:$0x1]
      %v1148 = vsel %vm1138, %v1122, %v1147
      %1149 = vst [vmem:[#allocation2 + $0x14] sm:$0x1] %v1148
      %1150 = vst [vmem:[#allocation2 + $0x18] sm:$0xf] %v1123
      %v1151 = vld [vmem:[#allocation2 + $0x1c] sm:$0x1]
      %v1152 = vsel %vm1138, %v1124, %v1151
      %1153 = vst [vmem:[#allocation2 + $0x1c] sm:$0x1] %v1152
      %1154 = vst [vmem:[#allocation2 + $0x20] sm:$0xf] %v1125
      %v1155 = vld [vmem:[#allocation2 + $0x24] sm:$0x1]
      %v1156 = vsel %vm1138, %v1126, %v1155
      %1157 = vst [vmem:[#allocation2 + $0x24] sm:$0x1] %v1156
      %1158 = vst [vmem:[#allocation2 + $0x28] sm:$0xf] %v1127
      %v1159 = vld [vmem:[#allocation2 + $0x2c] sm:$0x1]
      %v1160 = vsel %vm1138, %v1128, %v1159
      %1161 = vst [vmem:[#allocation2 + $0x2c] sm:$0x1] %v1160
      %1162 = vst [vmem:[#allocation2 + $0x30] sm:$0xf] %v1129
      %v1163 = vld [vmem:[#allocation2 + $0x34] sm:$0x1]
      %v1164 = vsel %vm1138, %v1130, %v1163
      %1165 = vst [vmem:[#allocation2 + $0x34] sm:$0x1] %v1164
      %1166 = vst [vmem:[#allocation2 + $0x38] sm:$0xf] %v1131
      %v1167 = vld [vmem:[#allocation2 + $0x3c] sm:$0x1]
      %v1168 = vsel %vm1138, %v1132, %v1167
      %1169 = vst [vmem:[#allocation2 + $0x3c] sm:$0x1] %v1168
      %1170 = vst [vmem:[#allocation2 + $0x40] sm:$0xf] %v1133
      %v1171 = vld [vmem:[#allocation2 + $0x44] sm:$0x1]
      %v1172 = vsel %vm1138, %v1134, %v1171
      %1173 = vst [vmem:[#allocation2 + $0x44] sm:$0x1] %v1172
      %s1174 = sadd.s32 %s375, 18
      %s1175 = smul.addr %s1174, 4
      %s1176 = scalar_lea.vmem %s345, %s1175
      %v1177 = vld [vmem:[%s1176] sm:$0xf]
      %v1178 = vld [vmem:[%s1176 + $0x4] sm:$0x1]
      %v1179 = vld [vmem:[%s1176 + $0x8] sm:$0xf]
      %v1180 = vld [vmem:[%s1176 + $0xc] sm:$0x1]
      %v1181 = vld [vmem:[%s1176 + $0x10] sm:$0xf]
      %v1182 = vld [vmem:[%s1176 + $0x14] sm:$0x1]
      %v1183 = vld [vmem:[%s1176 + $0x18] sm:$0xf]
      %v1184 = vld [vmem:[%s1176 + $0x1c] sm:$0x1]
      %v1185 = vld [vmem:[%s1176 + $0x20] sm:$0xf]
      %v1186 = vld [vmem:[%s1176 + $0x24] sm:$0x1]
      %v1187 = vld [vmem:[%s1176 + $0x28] sm:$0xf]
      %v1188 = vld [vmem:[%s1176 + $0x2c] sm:$0x1]
      %v1189 = vld [vmem:[%s1176 + $0x30] sm:$0xf]
      %v1190 = vld [vmem:[%s1176 + $0x34] sm:$0x1]
      %v1191 = vld [vmem:[%s1176 + $0x38] sm:$0xf]
      %v1192 = vld [vmem:[%s1176 + $0x3c] sm:$0x1]
      %v1193 = vld [vmem:[%s1176 + $0x40] sm:$0xf]
      %v1194 = vld [vmem:[%s1176 + $0x44] sm:$0x1]
      %v1213 = vrot.slane %v1177, 3
      %v1214 = vrot.slane %v1178, 3
      %v1215 = vrot.slane %v1179, 3
      %v1216 = vrot.slane %v1180, 3
      %v1217 = vrot.slane %v1181, 3
      %v1218 = vrot.slane %v1182, 3
      %v1219 = vrot.slane %v1183, 3
      %v1220 = vrot.slane %v1184, 3
      %v1221 = vrot.slane %v1185, 3
      %v1222 = vrot.slane %v1186, 3
      %v1223 = vrot.slane %v1187, 3
      %v1224 = vrot.slane %v1188, 3
      %v1225 = vrot.slane %v1189, 3
      %v1226 = vrot.slane %v1190, 3
      %v1227 = vrot.slane %v1191, 3
      %v1228 = vrot.slane %v1192, 3
      %v1229 = vrot.slane %v1193, 3
      %v1230 = vrot.slane %v1194, 3
      %v1233 = vsel %vm432, %v1177, %v1213
      %v1235 = vsel %vm437, %v1177, %v1213
      %v1237 = vrot.slane %v1235, 1
      %v1238 = vsel %vm441, %v1177, %v1213
      %v1240 = vrot.slane %v1238, 2
      %v1241 = vsel %vm445, %v1177, %v1213
      %v1243 = vrot.slane %v1241, 3
      %v1246 = vsel %vm432, %v1178, %v1214
      %v1250 = vsel %vm432, %v1179, %v1215
      %v1252 = vsel %vm437, %v1179, %v1215
      %v1254 = vrot.slane %v1252, 1
      %v1255 = vsel %vm441, %v1179, %v1215
      %v1257 = vrot.slane %v1255, 2
      %v1258 = vsel %vm445, %v1179, %v1215
      %v1260 = vrot.slane %v1258, 3
      %v1263 = vsel %vm432, %v1180, %v1216
      %v1267 = vsel %vm432, %v1181, %v1217
      %v1269 = vsel %vm437, %v1181, %v1217
      %v1271 = vrot.slane %v1269, 1
      %v1272 = vsel %vm441, %v1181, %v1217
      %v1274 = vrot.slane %v1272, 2
      %v1275 = vsel %vm445, %v1181, %v1217
      %v1277 = vrot.slane %v1275, 3
      %v1280 = vsel %vm432, %v1182, %v1218
      %v1284 = vsel %vm432, %v1183, %v1219
      %v1286 = vsel %vm437, %v1183, %v1219
      %v1288 = vrot.slane %v1286, 1
      %v1289 = vsel %vm441, %v1183, %v1219
      %v1291 = vrot.slane %v1289, 2
      %v1292 = vsel %vm445, %v1183, %v1219
      %v1294 = vrot.slane %v1292, 3
      %v1297 = vsel %vm432, %v1184, %v1220
      %v1301 = vsel %vm432, %v1185, %v1221
      %v1303 = vsel %vm437, %v1185, %v1221
      %v1305 = vrot.slane %v1303, 1
      %v1306 = vsel %vm441, %v1185, %v1221
      %v1308 = vrot.slane %v1306, 2
      %v1309 = vsel %vm445, %v1185, %v1221
      %v1311 = vrot.slane %v1309, 3
      %v1314 = vsel %vm432, %v1186, %v1222
      %v1318 = vsel %vm432, %v1187, %v1223
      %v1320 = vsel %vm437, %v1187, %v1223
      %v1322 = vrot.slane %v1320, 1
      %v1323 = vsel %vm441, %v1187, %v1223
      %v1325 = vrot.slane %v1323, 2
      %v1326 = vsel %vm445, %v1187, %v1223
      %v1328 = vrot.slane %v1326, 3
      %v1331 = vsel %vm432, %v1188, %v1224
      %v1335 = vsel %vm432, %v1189, %v1225
      %v1337 = vsel %vm437, %v1189, %v1225
      %v1339 = vrot.slane %v1337, 1
      %v1340 = vsel %vm441, %v1189, %v1225
      %v1342 = vrot.slane %v1340, 2
      %v1343 = vsel %vm445, %v1189, %v1225
      %v1345 = vrot.slane %v1343, 3
      %v1348 = vsel %vm432, %v1190, %v1226
      %v1352 = vsel %vm432, %v1191, %v1227
      %v1354 = vsel %vm437, %v1191, %v1227
      %v1356 = vrot.slane %v1354, 1
      %v1357 = vsel %vm441, %v1191, %v1227
      %v1359 = vrot.slane %v1357, 2
      %v1360 = vsel %vm445, %v1191, %v1227
      %v1362 = vrot.slane %v1360, 3
      %v1365 = vsel %vm432, %v1192, %v1228
      %v1369 = vsel %vm432, %v1193, %v1229
      %v1371 = vsel %vm437, %v1193, %v1229
      %v1373 = vrot.slane %v1371, 1
      %v1374 = vsel %vm441, %v1193, %v1229
      %v1376 = vrot.slane %v1374, 2
      %v1377 = vsel %vm445, %v1193, %v1229
      %v1379 = vrot.slane %v1377, 3
      %v1382 = vsel %vm432, %v1194, %v1230
      %v1384 = vunpack.i.l.s16 %v1233
      %v1385 = vunpack.i.h.s16 %v1233
      %v1386 = vunpack.i.l.s16 %v1237
      %v1387 = vunpack.i.h.s16 %v1237
      %v1388 = vunpack.i.l.s16 %v1240
      %v1389 = vunpack.i.h.s16 %v1240
      %v1390 = vunpack.i.l.s16 %v1243
      %v1391 = vunpack.i.h.s16 %v1243
      %v1392 = vunpack.i.l.s16 %v1246
      %v1393 = vunpack.i.l.s16 %v1250
      %v1394 = vunpack.i.h.s16 %v1250
      %v1395 = vunpack.i.l.s16 %v1254
      %v1396 = vunpack.i.h.s16 %v1254
      %v1397 = vunpack.i.l.s16 %v1257
      %v1398 = vunpack.i.h.s16 %v1257
      %v1399 = vunpack.i.l.s16 %v1260
      %v1400 = vunpack.i.h.s16 %v1260
      %v1401 = vunpack.i.l.s16 %v1263
      %v1402 = vunpack.i.l.s16 %v1267
      %v1403 = vunpack.i.h.s16 %v1267
      %v1404 = vunpack.i.l.s16 %v1271
      %v1405 = vunpack.i.h.s16 %v1271
      %v1406 = vunpack.i.l.s16 %v1274
      %v1407 = vunpack.i.h.s16 %v1274
      %v1408 = vunpack.i.l.s16 %v1277
      %v1409 = vunpack.i.h.s16 %v1277
      %v1410 = vunpack.i.l.s16 %v1280
      %v1411 = vunpack.i.l.s16 %v1284
      %v1412 = vunpack.i.h.s16 %v1284
      %v1413 = vunpack.i.l.s16 %v1288
      %v1414 = vunpack.i.h.s16 %v1288
      %v1415 = vunpack.i.l.s16 %v1291
      %v1416 = vunpack.i.h.s16 %v1291
      %v1417 = vunpack.i.l.s16 %v1294
      %v1418 = vunpack.i.h.s16 %v1294
      %v1419 = vunpack.i.l.s16 %v1297
      %v1420 = vunpack.i.l.s16 %v1301
      %v1421 = vunpack.i.h.s16 %v1301
      %v1422 = vunpack.i.l.s16 %v1305
      %v1423 = vunpack.i.h.s16 %v1305
      %v1424 = vunpack.i.l.s16 %v1308
      %v1425 = vunpack.i.h.s16 %v1308
      %v1426 = vunpack.i.l.s16 %v1311
      %v1427 = vunpack.i.h.s16 %v1311
      %v1428 = vunpack.i.l.s16 %v1314
      %v1429 = vunpack.i.l.s16 %v1318
      %v1430 = vunpack.i.h.s16 %v1318
      %v1431 = vunpack.i.l.s16 %v1322
      %v1432 = vunpack.i.h.s16 %v1322
      %v1433 = vunpack.i.l.s16 %v1325
      %v1434 = vunpack.i.h.s16 %v1325
      %v1435 = vunpack.i.l.s16 %v1328
      %v1436 = vunpack.i.h.s16 %v1328
      %v1437 = vunpack.i.l.s16 %v1331
      %v1438 = vunpack.i.l.s16 %v1335
      %v1439 = vunpack.i.h.s16 %v1335
      %v1440 = vunpack.i.l.s16 %v1339
      %v1441 = vunpack.i.h.s16 %v1339
      %v1442 = vunpack.i.l.s16 %v1342
      %v1443 = vunpack.i.h.s16 %v1342
      %v1444 = vunpack.i.l.s16 %v1345
      %v1445 = vunpack.i.h.s16 %v1345
      %v1446 = vunpack.i.l.s16 %v1348
      %v1447 = vunpack.i.l.s16 %v1352
      %v1448 = vunpack.i.h.s16 %v1352
      %v1449 = vunpack.i.l.s16 %v1356
      %v1450 = vunpack.i.h.s16 %v1356
      %v1451 = vunpack.i.l.s16 %v1359
      %v1452 = vunpack.i.h.s16 %v1359
      %v1453 = vunpack.i.l.s16 %v1362
      %v1454 = vunpack.i.h.s16 %v1362
      %v1455 = vunpack.i.l.s16 %v1365
      %v1456 = vunpack.i.l.s16 %v1369
      %v1457 = vunpack.i.h.s16 %v1369
      %v1458 = vunpack.i.l.s16 %v1373
      %v1459 = vunpack.i.h.s16 %v1373
      %v1460 = vunpack.i.l.s16 %v1376
      %v1461 = vunpack.i.h.s16 %v1376
      %v1462 = vunpack.i.l.s16 %v1379
      %v1463 = vunpack.i.h.s16 %v1379
      %v1464 = vunpack.i.l.s16 %v1382
      %v1465 = vpack.i.b16 %v1385, %v1384
      %v1466 = vpack.i.b16 %v1387, %v1386
      %v1467 = vpack.i.b16 %v1389, %v1388
      %v1468 = vpack.i.b16 %v1391, %v1390
      %v1469 = vpack.i.b16 %v1393, %v1392
      %v1470 = vpack.i.b16 %v1395, %v1394
      %v1471 = vpack.i.b16 %v1397, %v1396
      %v1472 = vpack.i.b16 %v1399, %v1398
      %v1473 = vpack.i.b16 %v1401, %v1400
      %v1474 = vpack.i.b16 %v1403, %v1402
      %v1475 = vpack.i.b16 %v1405, %v1404
      %v1476 = vpack.i.b16 %v1407, %v1406
      %v1477 = vpack.i.b16 %v1409, %v1408
      %v1478 = vpack.i.b16 %v1411, %v1410
      %v1479 = vpack.i.b16 %v1413, %v1412
      %v1480 = vpack.i.b16 %v1415, %v1414
      %v1481 = vpack.i.b16 %v1417, %v1416
      %v1482 = vpack.i.b16 %v1419, %v1418
      %v1483 = vpack.i.b16 %v1421, %v1420
      %v1484 = vpack.i.b16 %v1423, %v1422
      %v1485 = vpack.i.b16 %v1425, %v1424
      %v1486 = vpack.i.b16 %v1427, %v1426
      %v1487 = vpack.i.b16 %v1429, %v1428
      %v1488 = vpack.i.b16 %v1431, %v1430
      %v1489 = vpack.i.b16 %v1433, %v1432
      %v1490 = vpack.i.b16 %v1435, %v1434
      %v1491 = vpack.i.b16 %v1437, %v1436
      %v1492 = vpack.i.b16 %v1439, %v1438
      %v1493 = vpack.i.b16 %v1441, %v1440
      %v1494 = vpack.i.b16 %v1443, %v1442
      %v1495 = vpack.i.b16 %v1445, %v1444
      %v1496 = vpack.i.b16 %v1447, %v1446
      %v1497 = vpack.i.b16 %v1449, %v1448
      %v1498 = vpack.i.b16 %v1451, %v1450
      %v1499 = vpack.i.b16 %v1453, %v1452
      %v1500 = vpack.i.b16 %v1455, %v1454
      %v1501 = vpack.i.b16 %v1457, %v1456
      %v1502 = vpack.i.b16 %v1459, %v1458
      %v1503 = vpack.i.b16 %v1461, %v1460
      %v1504 = vpack.i.b16 %v1463, %v1462
      %1507 = vst [vmem:[#allocation1] ss:$9 sm:$0xff] %v1465
      %s1509 = scalar_lea.vmem [#allocation1], 1
      %1510 = vst [vmem:[%s1509] ss:$9 sm:$0xff] %v1466
      %s1512 = scalar_lea.vmem [#allocation1], 2
      %1513 = vst [vmem:[%s1512] ss:$9 sm:$0xff] %v1467
      %s1515 = scalar_lea.vmem [#allocation1], 3
      %1516 = vst [vmem:[%s1515] ss:$9 sm:$0xff] %v1468
      %s1518 = scalar_lea.vmem [#allocation1], 4
      %1519 = vst [vmem:[%s1518] ss:$9 sm:$0xff] %v1469
      %s1521 = scalar_lea.vmem [#allocation1], 5
      %1522 = vst [vmem:[%s1521] ss:$9 sm:$0xff] %v1470
      %s1524 = scalar_lea.vmem [#allocation1], 6
      %1525 = vst [vmem:[%s1524] ss:$9 sm:$0xff] %v1471
      %s1527 = scalar_lea.vmem [#allocation1], 7
      %1528 = vst [vmem:[%s1527] ss:$9 sm:$0xff] %v1472
      %v1529 = vld [vmem:[#allocation1] sm:$0xff]
      %1531 = vst [vmem:[#allocation1] ss:$9 sm:$0xff] %v1473
      %1533 = vst [vmem:[%s1509] ss:$9 sm:$0xff] %v1474
      %1535 = vst [vmem:[%s1512] ss:$9 sm:$0xff] %v1475
      %1537 = vst [vmem:[%s1515] ss:$9 sm:$0xff] %v1476
      %1539 = vst [vmem:[%s1518] ss:$9 sm:$0xff] %v1477
      %1541 = vst [vmem:[%s1521] ss:$9 sm:$0xff] %v1478
      %1543 = vst [vmem:[%s1524] ss:$9 sm:$0xff] %v1479
      %1545 = vst [vmem:[%s1527] ss:$9 sm:$0xff] %v1480
      %v1546 = vld [vmem:[#allocation1] sm:$0xff]
      %1548 = vst [vmem:[#allocation1] ss:$9 sm:$0xff] %v1481
      %1550 = vst [vmem:[%s1509] ss:$9 sm:$0xff] %v1482
      %1552 = vst [vmem:[%s1512] ss:$9 sm:$0xff] %v1483
      %1554 = vst [vmem:[%s1515] ss:$9 sm:$0xff] %v1484
      %1556 = vst [vmem:[%s1518] ss:$9 sm:$0xff] %v1485
      %1558 = vst [vmem:[%s1521] ss:$9 sm:$0xff] %v1486
      %1560 = vst [vmem:[%s1524] ss:$9 sm:$0xff] %v1487
      %1562 = vst [vmem:[%s1527] ss:$9 sm:$0xff] %v1488
      %v1563 = vld [vmem:[#allocation1] sm:$0xff]
      %1565 = vst [vmem:[#allocation1] ss:$9 sm:$0xff] %v1489
      %1567 = vst [vmem:[%s1509] ss:$9 sm:$0xff] %v1490
      %1569 = vst [vmem:[%s1512] ss:$9 sm:$0xff] %v1491
      %1571 = vst [vmem:[%s1515] ss:$9 sm:$0xff] %v1492
      %1573 = vst [vmem:[%s1518] ss:$9 sm:$0xff] %v1493
      %1575 = vst [vmem:[%s1521] ss:$9 sm:$0xff] %v1494
      %1577 = vst [vmem:[%s1524] ss:$9 sm:$0xff] %v1495
      %1579 = vst [vmem:[%s1527] ss:$9 sm:$0xff] %v1496
      %v1580 = vld [vmem:[#allocation1] sm:$0xff]
      %1582 = vst [vmem:[#allocation1] ss:$9 sm:$0xff] %v1497
      %1584 = vst [vmem:[%s1509] ss:$9 sm:$0xff] %v1498
      %1586 = vst [vmem:[%s1512] ss:$9 sm:$0xff] %v1499
      %1588 = vst [vmem:[%s1515] ss:$9 sm:$0xff] %v1500
      %1590 = vst [vmem:[%s1518] ss:$9 sm:$0xff] %v1501
      %1592 = vst [vmem:[%s1521] ss:$9 sm:$0xff] %v1502
      %1594 = vst [vmem:[%s1524] ss:$9 sm:$0xff] %v1503
      %1596 = vst [vmem:[%s1527] ss:$9 sm:$0xff] %v1504
      %v1597 = vld [vmem:[#allocation1] sm:$0xff]
      %1599 = vst [vmem:[#allocation1] ss:$9 sm:$0xff] %v1464
      %v1600 = vld [vmem:[#allocation1] sm:$0xff]
      %1607 = vmatpush.bf16.msra.mxu0 %v854
      %1608 = vmatpush.bf16.msra.mxu0 %v853
      %1609 = vmatpush.bf16.msra.mxu0 %v852
      %1610 = vmatpush.bf16.msra.mxu0 %v851
      %1611 = vmatpush.bf16.msra.mxu0 %v850
      %1612 = vmatpush.bf16.msra.mxu0 %v849
      %1613 = vmatpush.bf16.msra.mxu0 %v848
      %1614 = vmatpush.bf16.msra.mxu0 %v847
      %1615 = vmatmul.bf16.gmra.mxu0 %v1529
      %v1616 = vpop.f32.mrf.mxu0
      %v1617 = vadd.f32 %v671, %v1616
      %v1618 = vpop.f32.mrf.mxu0
      %v1619 = vadd.f32 %v671, %v1618
      %1620 = vmatmul.bf16.gmra.mxu0 %v1546
      %v1621 = vpop.f32.mrf.mxu0
      %v1622 = vadd.f32 %v671, %v1621
      %v1623 = vpop.f32.mrf.mxu0
      %v1624 = vadd.f32 %v671, %v1623
      %1625 = vmatmul.bf16.gmra.mxu0 %v1563
      %v1626 = vpop.f32.mrf.mxu0
      %v1627 = vadd.f32 %v671, %v1626
      %v1628 = vpop.f32.mrf.mxu0
      %v1629 = vadd.f32 %v671, %v1628
      %1630 = vmatmul.bf16.gmra.mxu0 %v1580
      %v1631 = vpop.f32.mrf.mxu0
      %v1632 = vadd.f32 %v671, %v1631
      %v1633 = vpop.f32.mrf.mxu0
      %v1634 = vadd.f32 %v671, %v1633
      %1635 = vmatmul.bf16.gmra.mxu0 %v1597
      %v1636 = vpop.f32.mrf.mxu0
      %v1637 = vadd.f32 %v671, %v1636
      %v1638 = vpop.f32.mrf.mxu0
      %v1639 = vadd.f32 %v671, %v1638
      %1640 = vmatmul.bf16.gmra.mxu0 %v1600
      %v1641 = vpop.f32.mrf.mxu0
      %v1642 = vadd.f32 %v671, %v1641
      %v1643 = vpop.f32.mrf.mxu0
      %1644 = vdwg.mxu0
      %v1645 = vmax.f32 %v1617, 0.0
      %v1646 = vmax.f32 %v1619, 0.0
      %v1647 = vmax.f32 %v1622, 0.0
      %v1648 = vmax.f32 %v1624, 0.0
      %v1649 = vmax.f32 %v1627, 0.0
      %v1650 = vmax.f32 %v1629, 0.0
      %v1651 = vmax.f32 %v1632, 0.0
      %v1652 = vmax.f32 %v1634, 0.0
      %v1653 = vmax.f32 %v1637, 0.0
      %v1654 = vmax.f32 %v1639, 0.0
      %v1655 = vmax.f32 %v1642, 0.0
      %v1667 = vrot.slane %v1645, 1
      %v1668 = vrot.slane %v1645, 2
      %v1669 = vrot.slane %v1645, 3
      %v1670 = vrot.slane %v1645, 4
      %v1671 = vrot.slane %v1645, 5
      %v1672 = vrot.slane %v1645, 6
      %v1673 = vrot.slane %v1645, 7
      %v1674 = vrot.slane %v1646, 1
      %v1675 = vrot.slane %v1646, 2
      %v1676 = vrot.slane %v1646, 3
      %v1677 = vrot.slane %v1646, 4
      %v1678 = vrot.slane %v1646, 5
      %v1679 = vrot.slane %v1646, 6
      %v1680 = vrot.slane %v1646, 7
      %v1681 = vrot.slane %v1647, 1
      %v1682 = vrot.slane %v1647, 2
      %v1683 = vrot.slane %v1647, 3
      %v1684 = vrot.slane %v1647, 4
      %v1685 = vrot.slane %v1647, 5
      %v1686 = vrot.slane %v1647, 6
      %v1687 = vrot.slane %v1647, 7
      %v1688 = vrot.slane %v1648, 1
      %v1689 = vrot.slane %v1648, 2
      %v1690 = vrot.slane %v1648, 3
      %v1691 = vrot.slane %v1648, 4
      %v1692 = vrot.slane %v1648, 5
      %v1693 = vrot.slane %v1648, 6
      %v1694 = vrot.slane %v1648, 7
      %v1695 = vrot.slane %v1649, 1
      %v1696 = vrot.slane %v1649, 2
      %v1697 = vrot.slane %v1649, 3
      %v1698 = vrot.slane %v1649, 4
      %v1699 = vrot.slane %v1649, 5
      %v1700 = vrot.slane %v1649, 6
      %v1701 = vrot.slane %v1649, 7
      %v1702 = vrot.slane %v1650, 1
      %v1703 = vrot.slane %v1650, 2
      %v1704 = vrot.slane %v1650, 3
      %v1705 = vrot.slane %v1650, 4
      %v1706 = vrot.slane %v1650, 5
      %v1707 = vrot.slane %v1650, 6
      %v1708 = vrot.slane %v1650, 7
      %v1709 = vrot.slane %v1651, 1
      %v1710 = vrot.slane %v1651, 2
      %v1711 = vrot.slane %v1651, 3
      %v1712 = vrot.slane %v1651, 4
      %v1713 = vrot.slane %v1651, 5
      %v1714 = vrot.slane %v1651, 6
      %v1715 = vrot.slane %v1651, 7
      %v1716 = vrot.slane %v1652, 1
      %v1717 = vrot.slane %v1652, 2
      %v1718 = vrot.slane %v1652, 3
      %v1719 = vrot.slane %v1652, 4
      %v1720 = vrot.slane %v1652, 5
      %v1721 = vrot.slane %v1652, 6
      %v1722 = vrot.slane %v1652, 7
      %v1723 = vrot.slane %v1653, 1
      %v1724 = vrot.slane %v1653, 2
      %v1725 = vrot.slane %v1653, 3
      %v1726 = vrot.slane %v1653, 4
      %v1727 = vrot.slane %v1653, 5
      %v1728 = vrot.slane %v1653, 6
      %v1729 = vrot.slane %v1653, 7
      %v1730 = vrot.slane %v1654, 1
      %v1731 = vrot.slane %v1654, 2
      %v1732 = vrot.slane %v1654, 3
      %v1733 = vrot.slane %v1654, 4
      %v1734 = vrot.slane %v1654, 5
      %v1735 = vrot.slane %v1654, 6
      %v1736 = vrot.slane %v1654, 7
      %1737 = vst [vmem:[#allocation1] ss:$9 sm:$0xff] %v1645
      %s1738 = scalar_lea.vmem [#allocation1], 1
      %1739 = vst [vmem:[%s1738] ss:$9 sm:$0xff] %v1667
      %s1740 = scalar_lea.vmem [#allocation1], 2
      %1741 = vst [vmem:[%s1740] ss:$9 sm:$0xff] %v1668
      %s1742 = scalar_lea.vmem [#allocation1], 3
      %1743 = vst [vmem:[%s1742] ss:$9 sm:$0xff] %v1669
      %s1744 = scalar_lea.vmem [#allocation1], 4
      %1745 = vst [vmem:[%s1744] ss:$9 sm:$0xff] %v1670
      %s1746 = scalar_lea.vmem [#allocation1], 5
      %1747 = vst [vmem:[%s1746] ss:$9 sm:$0xff] %v1671
      %s1748 = scalar_lea.vmem [#allocation1], 6
      %1749 = vst [vmem:[%s1748] ss:$9 sm:$0xff] %v1672
      %s1750 = scalar_lea.vmem [#allocation1], 7
      %1751 = vst [vmem:[%s1750] ss:$9 sm:$0xff] %v1673
      %v1752 = vld [vmem:[#allocation1] sm:$0xff]
      %1753 = vst [vmem:[#allocation1] ss:$9 sm:$0xff] %v1646
      %v1754 = vld [vmem:[#allocation1] sm:$0xff]
      %1755 = vst [vmem:[#allocation1] ss:$9 sm:$0xff] %v1674
      %1756 = vst [vmem:[%s1738] ss:$9 sm:$0xff] %v1675
      %1757 = vst [vmem:[%s1740] ss:$9 sm:$0xff] %v1676
      %1758 = vst [vmem:[%s1742] ss:$9 sm:$0xff] %v1677
      %1759 = vst [vmem:[%s1744] ss:$9 sm:$0xff] %v1678
      %1760 = vst [vmem:[%s1746] ss:$9 sm:$0xff] %v1679
      %1761 = vst [vmem:[%s1748] ss:$9 sm:$0xff] %v1680
      %1762 = vst [vmem:[%s1750] ss:$9 sm:$0xff] %v1647
      %v1763 = vld [vmem:[#allocation1] sm:$0xff]
      %1764 = vst [vmem:[#allocation1] ss:$9 sm:$0xff] %v1681
      %v1765 = vld [vmem:[#allocation1] sm:$0xff]
      %1766 = vst [vmem:[#allocation1] ss:$9 sm:$0xff] %v1682
      %1767 = vst [vmem:[%s1738] ss:$9 sm:$0xff] %v1683
      %1768 = vst [vmem:[%s1740] ss:$9 sm:$0xff] %v1684
      %1769 = vst [vmem:[%s1742] ss:$9 sm:$0xff] %v1685
      %1770 = vst [vmem:[%s1744] ss:$9 sm:$0xff] %v1686
      %1771 = vst [vmem:[%s1746] ss:$9 sm:$0xff] %v1687
      %1772 = vst [vmem:[%s1748] ss:$9 sm:$0xff] %v1648
      %1773 = vst [vmem:[%s1750] ss:$9 sm:$0xff] %v1688
      %v1774 = vld [vmem:[#allocation1] sm:$0xff]
      %1775 = vst [vmem:[#allocation1] ss:$9 sm:$0xff] %v1689
      %v1776 = vld [vmem:[#allocation1] sm:$0xff]
      %1777 = vst [vmem:[#allocation1] ss:$9 sm:$0xff] %v1690
      %1778 = vst [vmem:[%s1738] ss:$9 sm:$0xff] %v1691
      %1779 = vst [vmem:[%s1740] ss:$9 sm:$0xff] %v1692
      %1780 = vst [vmem:[%s1742] ss:$9 sm:$0xff] %v1693
      %1781 = vst [vmem:[%s1744] ss:$9 sm:$0xff] %v1694
      %1782 = vst [vmem:[%s1746] ss:$9 sm:$0xff] %v1649
      %1783 = vst [vmem:[%s1748] ss:$9 sm:$0xff] %v1695
      %1784 = vst [vmem:[%s1750] ss:$9 sm:$0xff] %v1696
      %v1785 = vld [vmem:[#allocation1] sm:$0xff]
      %1786 = vst [vmem:[#allocation1] ss:$9 sm:$0xff] %v1697
      %v1787 = vld [vmem:[#allocation1] sm:$0xff]
      %1788 = vst [vmem:[#allocation1] ss:$9 sm:$0xff] %v1698
      %1789 = vst [vmem:[%s1738] ss:$9 sm:$0xff] %v1699
      %1790 = vst [vmem:[%s1740] ss:$9 sm:$0xff] %v1700
      %1791 = vst [vmem:[%s1742] ss:$9 sm:$0xff] %v1701
      %1792 = vst [vmem:[%s1744] ss:$9 sm:$0xff] %v1650
      %1793 = vst [vmem:[%s1746] ss:$9 sm:$0xff] %v1702
      %1794 = vst [vmem:[%s1748] ss:$9 sm:$0xff] %v1703
      %1795 = vst [vmem:[%s1750] ss:$9 sm:$0xff] %v1704
      %v1796 = vld [vmem:[#allocation1] sm:$0xff]
      %1797 = vst [vmem:[#allocation1] ss:$9 sm:$0xff] %v1705
      %v1798 = vld [vmem:[#allocation1] sm:$0xff]
      %1799 = vst [vmem:[#allocation1] ss:$9 sm:$0xff] %v1706
      %1800 = vst [vmem:[%s1738] ss:$9 sm:$0xff] %v1707
      %1801 = vst [vmem:[%s1740] ss:$9 sm:$0xff] %v1708
      %1802 = vst [vmem:[%s1742] ss:$9 sm:$0xff] %v1651
      %1803 = vst [vmem:[%s1744] ss:$9 sm:$0xff] %v1709
      %1804 = vst [vmem:[%s1746] ss:$9 sm:$0xff] %v1710
      %1805 = vst [vmem:[%s1748] ss:$9 sm:$0xff] %v1711
      %1806 = vst [vmem:[%s1750] ss:$9 sm:$0xff] %v1712
      %v1807 = vld [vmem:[#allocation1] sm:$0xff]
      %1808 = vst [vmem:[#allocation1] ss:$9 sm:$0xff] %v1713
      %v1809 = vld [vmem:[#allocation1] sm:$0xff]
      %1810 = vst [vmem:[#allocation1] ss:$9 sm:$0xff] %v1714
      %1811 = vst [vmem:[%s1738] ss:$9 sm:$0xff] %v1715
      %1812 = vst [vmem:[%s1740] ss:$9 sm:$0xff] %v1652
      %1813 = vst [vmem:[%s1742] ss:$9 sm:$0xff] %v1716
      %1814 = vst [vmem:[%s1744] ss:$9 sm:$0xff] %v1717
      %1815 = vst [vmem:[%s1746] ss:$9 sm:$0xff] %v1718
      %1816 = vst [vmem:[%s1748] ss:$9 sm:$0xff] %v1719
      %1817 = vst [vmem:[%s1750] ss:$9 sm:$0xff] %v1720
      %v1818 = vld [vmem:[#allocation1] sm:$0xff]
      %1819 = vst [vmem:[#allocation1] ss:$9 sm:$0xff] %v1721
      %v1820 = vld [vmem:[#allocation1] sm:$0xff]
      %1821 = vst [vmem:[#allocation1] ss:$9 sm:$0xff] %v1722
      %1822 = vst [vmem:[%s1738] ss:$9 sm:$0xff] %v1653
      %1823 = vst [vmem:[%s1740] ss:$9 sm:$0xff] %v1723
      %1824 = vst [vmem:[%s1742] ss:$9 sm:$0xff] %v1724
      %1825 = vst [vmem:[%s1744] ss:$9 sm:$0xff] %v1725
      %1826 = vst [vmem:[%s1746] ss:$9 sm:$0xff] %v1726
      %1827 = vst [vmem:[%s1748] ss:$9 sm:$0xff] %v1727
      %1828 = vst [vmem:[%s1750] ss:$9 sm:$0xff] %v1728
      %v1829 = vld [vmem:[#allocation1] sm:$0xff]
      %1830 = vst [vmem:[#allocation1] ss:$9 sm:$0xff] %v1729
      %v1831 = vld [vmem:[#allocation1] sm:$0xff]
      %1832 = vst [vmem:[#allocation1] ss:$9 sm:$0xff] %v1654
      %1833 = vst [vmem:[%s1738] ss:$9 sm:$0xff] %v1730
      %1834 = vst [vmem:[%s1740] ss:$9 sm:$0xff] %v1731
      %1835 = vst [vmem:[%s1742] ss:$9 sm:$0xff] %v1732
      %1836 = vst [vmem:[%s1744] ss:$9 sm:$0xff] %v1733
      %1837 = vst [vmem:[%s1746] ss:$9 sm:$0xff] %v1734
      %1838 = vst [vmem:[%s1748] ss:$9 sm:$0xff] %v1735
      %1839 = vst [vmem:[%s1750] ss:$9 sm:$0xff] %v1736
      %v1840 = vld [vmem:[#allocation1] sm:$0xff]
      %1841 = vst [vmem:[#allocation1] ss:$9 sm:$0xff] %v1655
      %v1842 = vld [vmem:[#allocation1] sm:$0xff]
      %v1861 = vpack.c.bf16 %v1752, %v1752
      %v1862 = vpack.c.bf16 %v1754, %v1754
      %v1863 = vpack.c.bf16 %v1763, %v1763
      %v1864 = vpack.c.bf16 %v1765, %v1765
      %v1865 = vpack.c.bf16 %v1774, %v1774
      %v1866 = vpack.c.bf16 %v1776, %v1776
      %v1867 = vpack.c.bf16 %v1785, %v1785
      %v1868 = vpack.c.bf16 %v1787, %v1787
      %v1869 = vpack.c.bf16 %v1796, %v1796
      %v1870 = vpack.c.bf16 %v1798, %v1798
      %v1871 = vpack.c.bf16 %v1807, %v1807
      %v1872 = vpack.c.bf16 %v1809, %v1809
      %v1873 = vpack.c.bf16 %v1818, %v1818
      %v1874 = vpack.c.bf16 %v1820, %v1820
      %v1875 = vpack.c.bf16 %v1829, %v1829
      %v1876 = vpack.c.bf16 %v1831, %v1831
      %v1877 = vpack.c.bf16 %v1840, %v1840
      %v1878 = vpack.c.bf16 %v1842, %v1842
      %s1879 = scalar_lea.vmem [#allocation2], 72
      %1880 = vst [vmem:[%s1879] sm:$0xf] %v1861
      %v1881 = vld [vmem:[%s1879 + $0x4] sm:$0x1]
      %v1882 = vsel %vm1138, %v1862, %v1881
      %1883 = vst [vmem:[%s1879 + $0x4] sm:$0x1] %v1882
      %1884 = vst [vmem:[%s1879 + $0x8] sm:$0xf] %v1863
      %v1885 = vld [vmem:[%s1879 + $0xc] sm:$0x1]
      %v1886 = vsel %vm1138, %v1864, %v1885
      %1887 = vst [vmem:[%s1879 + $0xc] sm:$0x1] %v1886
      %1888 = vst [vmem:[%s1879 + $0x10] sm:$0xf] %v1865
      %v1889 = vld [vmem:[%s1879 + $0x14] sm:$0x1]
      %v1890 = vsel %vm1138, %v1866, %v1889
      %1891 = vst [vmem:[%s1879 + $0x14] sm:$0x1] %v1890
      %1892 = vst [vmem:[%s1879 + $0x18] sm:$0xf] %v1867
      %v1893 = vld [vmem:[%s1879 + $0x1c] sm:$0x1]
      %v1894 = vsel %vm1138, %v1868, %v1893
      %1895 = vst [vmem:[%s1879 + $0x1c] sm:$0x1] %v1894
      %1896 = vst [vmem:[%s1879 + $0x20] sm:$0xf] %v1869
      %v1897 = vld [vmem:[%s1879 + $0x24] sm:$0x1]
      %v1898 = vsel %vm1138, %v1870, %v1897
      %1899 = vst [vmem:[%s1879 + $0x24] sm:$0x1] %v1898
      %1900 = vst [vmem:[%s1879 + $0x28] sm:$0xf] %v1871
      %v1901 = vld [vmem:[%s1879 + $0x2c] sm:$0x1]
      %v1902 = vsel %vm1138, %v1872, %v1901
      %1903 = vst [vmem:[%s1879 + $0x2c] sm:$0x1] %v1902
      %1904 = vst [vmem:[%s1879 + $0x30] sm:$0xf] %v1873
      %v1905 = vld [vmem:[%s1879 + $0x34] sm:$0x1]
      %v1906 = vsel %vm1138, %v1874, %v1905
      %1907 = vst [vmem:[%s1879 + $0x34] sm:$0x1] %v1906
      %1908 = vst [vmem:[%s1879 + $0x38] sm:$0xf] %v1875
      %v1909 = vld [vmem:[%s1879 + $0x3c] sm:$0x1]
      %v1910 = vsel %vm1138, %v1876, %v1909
      %1911 = vst [vmem:[%s1879 + $0x3c] sm:$0x1] %v1910
      %1912 = vst [vmem:[%s1879 + $0x40] sm:$0xf] %v1877
      %v1913 = vld [vmem:[%s1879 + $0x44] sm:$0x1]
      %v1914 = vsel %vm1138, %v1878, %v1913
      %1915 = vst [vmem:[%s1879 + $0x44] sm:$0x1] %v1914
      %s1916 = sadd.s32 %s375, 36
      %s1917 = smul.addr %s1916, 4
      %s1918 = scalar_lea.vmem %s345, %s1917
      %v1919 = vld [vmem:[%s1918] sm:$0xf]
      %v1920 = vld [vmem:[%s1918 + $0x4] sm:$0x1]
      %v1921 = vld [vmem:[%s1918 + $0x8] sm:$0xf]
      %v1922 = vld [vmem:[%s1918 + $0xc] sm:$0x1]
      %v1923 = vld [vmem:[%s1918 + $0x10] sm:$0xf]
      %v1924 = vld [vmem:[%s1918 + $0x14] sm:$0x1]
      %v1925 = vld [vmem:[%s1918 + $0x18] sm:$0xf]
      %v1926 = vld [vmem:[%s1918 + $0x1c] sm:$0x1]
      %v1927 = vld [vmem:[%s1918 + $0x20] sm:$0xf]
      %v1928 = vld [vmem:[%s1918 + $0x24] sm:$0x1]
      %v1929 = vld [vmem:[%s1918 + $0x28] sm:$0xf]
      %v1930 = vld [vmem:[%s1918 + $0x2c] sm:$0x1]
      %v1931 = vld [vmem:[%s1918 + $0x30] sm:$0xf]
      %v1932 = vld [vmem:[%s1918 + $0x34] sm:$0x1]
      %v1933 = vld [vmem:[%s1918 + $0x38] sm:$0xf]
      %v1934 = vld [vmem:[%s1918 + $0x3c] sm:$0x1]
      %v1935 = vld [vmem:[%s1918 + $0x40] sm:$0xf]
      %v1936 = vld [vmem:[%s1918 + $0x44] sm:$0x1]
      %v1955 = vrot.slane %v1919, 3
      %v1956 = vrot.slane %v1920, 3
      %v1957 = vrot.slane %v1921, 3
      %v1958 = vrot.slane %v1922, 3
      %v1959 = vrot.slane %v1923, 3
      %v1960 = vrot.slane %v1924, 3
      %v1961 = vrot.slane %v1925, 3
      %v1962 = vrot.slane %v1926, 3
      %v1963 = vrot.slane %v1927, 3
      %v1964 = vrot.slane %v1928, 3
      %v1965 = vrot.slane %v1929, 3
      %v1966 = vrot.slane %v1930, 3
      %v1967 = vrot.slane %v1931, 3
      %v1968 = vrot.slane %v1932, 3
      %v1969 = vrot.slane %v1933, 3
      %v1970 = vrot.slane %v1934, 3
      %v1971 = vrot.slane %v1935, 3
      %v1972 = vrot.slane %v1936, 3
      %v1975 = vsel %vm432, %v1919, %v1955
      %v1977 = vsel %vm437, %v1919, %v1955
      %v1979 = vrot.slane %v1977, 1
      %v1980 = vsel %vm441, %v1919, %v1955
      %v1982 = vrot.slane %v1980, 2
      %v1983 = vsel %vm445, %v1919, %v1955
      %v1985 = vrot.slane %v1983, 3
      %v1988 = vsel %vm432, %v1920, %v1956
      %v1992 = vsel %vm432, %v1921, %v1957
      %v1994 = vsel %vm437, %v1921, %v1957
      %v1996 = vrot.slane %v1994, 1
      %v1997 = vsel %vm441, %v1921, %v1957
      %v1999 = vrot.slane %v1997, 2
      %v2000 = vsel %vm445, %v1921, %v1957
      %v2002 = vrot.slane %v2000, 3
      %v2005 = vsel %vm432, %v1922, %v1958
      %v2009 = vsel %vm432, %v1923, %v1959
      %v2011 = vsel %vm437, %v1923, %v1959
      %v2013 = vrot.slane %v2011, 1
      %v2014 = vsel %vm441, %v1923, %v1959
      %v2016 = vrot.slane %v2014, 2
      %v2017 = vsel %vm445, %v1923, %v1959
      %v2019 = vrot.slane %v2017, 3
      %v2022 = vsel %vm432, %v1924, %v1960
      %v2026 = vsel %vm432, %v1925, %v1961
      %v2028 = vsel %vm437, %v1925, %v1961
      %v2030 = vrot.slane %v2028, 1
      %v2031 = vsel %vm441, %v1925, %v1961
      %v2033 = vrot.slane %v2031, 2
      %v2034 = vsel %vm445, %v1925, %v1961
      %v2036 = vrot.slane %v2034, 3
      %v2039 = vsel %vm432, %v1926, %v1962
      %v2043 = vsel %vm432, %v1927, %v1963
      %v2045 = vsel %vm437, %v1927, %v1963
      %v2047 = vrot.slane %v2045, 1
      %v2048 = vsel %vm441, %v1927, %v1963
      %v2050 = vrot.slane %v2048, 2
      %v2051 = vsel %vm445, %v1927, %v1963
      %v2053 = vrot.slane %v2051, 3
      %v2056 = vsel %vm432, %v1928, %v1964
      %v2060 = vsel %vm432, %v1929, %v1965
      %v2062 = vsel %vm437, %v1929, %v1965
      %v2064 = vrot.slane %v2062, 1
      %v2065 = vsel %vm441, %v1929, %v1965
      %v2067 = vrot.slane %v2065, 2
      %v2068 = vsel %vm445, %v1929, %v1965
      %v2070 = vrot.slane %v2068, 3
      %v2073 = vsel %vm432, %v1930, %v1966
      %v2077 = vsel %vm432, %v1931, %v1967
      %v2079 = vsel %vm437, %v1931, %v1967
      %v2081 = vrot.slane %v2079, 1
      %v2082 = vsel %vm441, %v1931, %v1967
      %v2084 = vrot.slane %v2082, 2
      %v2085 = vsel %vm445, %v1931, %v1967
      %v2087 = vrot.slane %v2085, 3
      %v2090 = vsel %vm432, %v1932, %v1968
      %v2094 = vsel %vm432, %v1933, %v1969
      %v2096 = vsel %vm437, %v1933, %v1969
      %v2098 = vrot.slane %v2096, 1
      %v2099 = vsel %vm441, %v1933, %v1969
      %v2101 = vrot.slane %v2099, 2
      %v2102 = vsel %vm445, %v1933, %v1969
      %v2104 = vrot.slane %v2102, 3
      %v2107 = vsel %vm432, %v1934, %v1970
      %v2111 = vsel %vm432, %v1935, %v1971
      %v2113 = vsel %vm437, %v1935, %v1971
      %v2115 = vrot.slane %v2113, 1
      %v2116 = vsel %vm441, %v1935, %v1971
      %v2118 = vrot.slane %v2116, 2
      %v2119 = vsel %vm445, %v1935, %v1971
      %v2121 = vrot.slane %v2119, 3
      %v2124 = vsel %vm432, %v1936, %v1972
      %v2126 = vunpack.i.l.s16 %v1975
      %v2127 = vunpack.i.h.s16 %v1975
      %v2128 = vunpack.i.l.s16 %v1979
      %v2129 = vunpack.i.h.s16 %v1979
      %v2130 = vunpack.i.l.s16 %v1982
      %v2131 = vunpack.i.h.s16 %v1982
      %v2132 = vunpack.i.l.s16 %v1985
      %v2133 = vunpack.i.h.s16 %v1985
      %v2134 = vunpack.i.l.s16 %v1988
      %v2135 = vunpack.i.l.s16 %v1992
      %v2136 = vunpack.i.h.s16 %v1992
      %v2137 = vunpack.i.l.s16 %v1996
      %v2138 = vunpack.i.h.s16 %v1996
      %v2139 = vunpack.i.l.s16 %v1999
      %v2140 = vunpack.i.h.s16 %v1999
      %v2141 = vunpack.i.l.s16 %v2002
      %v2142 = vunpack.i.h.s16 %v2002
      %v2143 = vunpack.i.l.s16 %v2005
      %v2144 = vunpack.i.l.s16 %v2009
      %v2145 = vunpack.i.h.s16 %v2009
      %v2146 = vunpack.i.l.s16 %v2013
      %v2147 = vunpack.i.h.s16 %v2013
      %v2148 = vunpack.i.l.s16 %v2016
      %v2149 = vunpack.i.h.s16 %v2016
      %v2150 = vunpack.i.l.s16 %v2019
      %v2151 = vunpack.i.h.s16 %v2019
      %v2152 = vunpack.i.l.s16 %v2022
      %v2153 = vunpack.i.l.s16 %v2026
      %v2154 = vunpack.i.h.s16 %v2026
      %v2155 = vunpack.i.l.s16 %v2030
      %v2156 = vunpack.i.h.s16 %v2030
      %v2157 = vunpack.i.l.s16 %v2033
      %v2158 = vunpack.i.h.s16 %v2033
      %v2159 = vunpack.i.l.s16 %v2036
      %v2160 = vunpack.i.h.s16 %v2036
      %v2161 = vunpack.i.l.s16 %v2039
      %v2162 = vunpack.i.l.s16 %v2043
      %v2163 = vunpack.i.h.s16 %v2043
      %v2164 = vunpack.i.l.s16 %v2047
      %v2165 = vunpack.i.h.s16 %v2047
      %v2166 = vunpack.i.l.s16 %v2050
      %v2167 = vunpack.i.h.s16 %v2050
      %v2168 = vunpack.i.l.s16 %v2053
      %v2169 = vunpack.i.h.s16 %v2053
      %v2170 = vunpack.i.l.s16 %v2056
      %v2171 = vunpack.i.l.s16 %v2060
      %v2172 = vunpack.i.h.s16 %v2060
      %v2173 = vunpack.i.l.s16 %v2064
      %v2174 = vunpack.i.h.s16 %v2064
      %v2175 = vunpack.i.l.s16 %v2067
      %v2176 = vunpack.i.h.s16 %v2067
      %v2177 = vunpack.i.l.s16 %v2070
      %v2178 = vunpack.i.h.s16 %v2070
      %v2179 = vunpack.i.l.s16 %v2073
      %v2180 = vunpack.i.l.s16 %v2077
      %v2181 = vunpack.i.h.s16 %v2077
      %v2182 = vunpack.i.l.s16 %v2081
      %v2183 = vunpack.i.h.s16 %v2081
      %v2184 = vunpack.i.l.s16 %v2084
      %v2185 = vunpack.i.h.s16 %v2084
      %v2186 = vunpack.i.l.s16 %v2087
      %v2187 = vunpack.i.h.s16 %v2087
      %v2188 = vunpack.i.l.s16 %v2090
      %v2189 = vunpack.i.l.s16 %v2094
      %v2190 = vunpack.i.h.s16 %v2094
      %v2191 = vunpack.i.l.s16 %v2098
      %v2192 = vunpack.i.h.s16 %v2098
      %v2193 = vunpack.i.l.s16 %v2101
      %v2194 = vunpack.i.h.s16 %v2101
      %v2195 = vunpack.i.l.s16 %v2104
      %v2196 = vunpack.i.h.s16 %v2104
      %v2197 = vunpack.i.l.s16 %v2107
      %v2198 = vunpack.i.l.s16 %v2111
      %v2199 = vunpack.i.h.s16 %v2111
      %v2200 = vunpack.i.l.s16 %v2115
      %v2201 = vunpack.i.h.s16 %v2115
      %v2202 = vunpack.i.l.s16 %v2118
      %v2203 = vunpack.i.h.s16 %v2118
      %v2204 = vunpack.i.l.s16 %v2121
      %v2205 = vunpack.i.h.s16 %v2121
      %v2206 = vunpack.i.l.s16 %v2124
      %v2207 = vpack.i.b16 %v2127, %v2126
      %v2208 = vpack.i.b16 %v2129, %v2128
      %v2209 = vpack.i.b16 %v2131, %v2130
      %v2210 = vpack.i.b16 %v2133, %v2132
      %v2211 = vpack.i.b16 %v2135, %v2134
      %v2212 = vpack.i.b16 %v2137, %v2136
      %v2213 = vpack.i.b16 %v2139, %v2138
      %v2214 = vpack.i.b16 %v2141, %v2140
      %v2215 = vpack.i.b16 %v2143, %v2142
      %v2216 = vpack.i.b16 %v2145, %v2144
      %v2217 = vpack.i.b16 %v2147, %v2146
      %v2218 = vpack.i.b16 %v2149, %v2148
      %v2219 = vpack.i.b16 %v2151, %v2150
      %v2220 = vpack.i.b16 %v2153, %v2152
      %v2221 = vpack.i.b16 %v2155, %v2154
      %v2222 = vpack.i.b16 %v2157, %v2156
      %v2223 = vpack.i.b16 %v2159, %v2158
      %v2224 = vpack.i.b16 %v2161, %v2160
      %v2225 = vpack.i.b16 %v2163, %v2162
      %v2226 = vpack.i.b16 %v2165, %v2164
      %v2227 = vpack.i.b16 %v2167, %v2166
      %v2228 = vpack.i.b16 %v2169, %v2168
      %v2229 = vpack.i.b16 %v2171, %v2170
      %v2230 = vpack.i.b16 %v2173, %v2172
      %v2231 = vpack.i.b16 %v2175, %v2174
      %v2232 = vpack.i.b16 %v2177, %v2176
      %v2233 = vpack.i.b16 %v2179, %v2178
      %v2234 = vpack.i.b16 %v2181, %v2180
      %v2235 = vpack.i.b16 %v2183, %v2182
      %v2236 = vpack.i.b16 %v2185, %v2184
      %v2237 = vpack.i.b16 %v2187, %v2186
      %v2238 = vpack.i.b16 %v2189, %v2188
      %v2239 = vpack.i.b16 %v2191, %v2190
      %v2240 = vpack.i.b16 %v2193, %v2192
      %v2241 = vpack.i.b16 %v2195, %v2194
      %v2242 = vpack.i.b16 %v2197, %v2196
      %v2243 = vpack.i.b16 %v2199, %v2198
      %v2244 = vpack.i.b16 %v2201, %v2200
      %v2245 = vpack.i.b16 %v2203, %v2202
      %v2246 = vpack.i.b16 %v2205, %v2204
      %2249 = vst [vmem:[#allocation1] ss:$9 sm:$0xff] %v2207
      %s2251 = scalar_lea.vmem [#allocation1], 1
      %2252 = vst [vmem:[%s2251] ss:$9 sm:$0xff] %v2208
      %s2254 = scalar_lea.vmem [#allocation1], 2
      %2255 = vst [vmem:[%s2254] ss:$9 sm:$0xff] %v2209
      %s2257 = scalar_lea.vmem [#allocation1], 3
      %2258 = vst [vmem:[%s2257] ss:$9 sm:$0xff] %v2210
      %s2260 = scalar_lea.vmem [#allocation1], 4
      %2261 = vst [vmem:[%s2260] ss:$9 sm:$0xff] %v2211
      %s2263 = scalar_lea.vmem [#allocation1], 5
      %2264 = vst [vmem:[%s2263] ss:$9 sm:$0xff] %v2212
      %s2266 = scalar_lea.vmem [#allocation1], 6
      %2267 = vst [vmem:[%s2266] ss:$9 sm:$0xff] %v2213
      %s2269 = scalar_lea.vmem [#allocation1], 7
      %2270 = vst [vmem:[%s2269] ss:$9 sm:$0xff] %v2214
      %v2271 = vld [vmem:[#allocation1] sm:$0xff]
      %2273 = vst [vmem:[#allocation1] ss:$9 sm:$0xff] %v2215
      %2275 = vst [vmem:[%s2251] ss:$9 sm:$0xff] %v2216
      %2277 = vst [vmem:[%s2254] ss:$9 sm:$0xff] %v2217
      %2279 = vst [vmem:[%s2257] ss:$9 sm:$0xff] %v2218
      %2281 = vst [vmem:[%s2260] ss:$9 sm:$0xff] %v2219
      %2283 = vst [vmem:[%s2263] ss:$9 sm:$0xff] %v2220
      %2285 = vst [vmem:[%s2266] ss:$9 sm:$0xff] %v2221
      %2287 = vst [vmem:[%s2269] ss:$9 sm:$0xff] %v2222
      %v2288 = vld [vmem:[#allocation1] sm:$0xff]
      %2290 = vst [vmem:[#allocation1] ss:$9 sm:$0xff] %v2223
      %2292 = vst [vmem:[%s2251] ss:$9 sm:$0xff] %v2224
      %2294 = vst [vmem:[%s2254] ss:$9 sm:$0xff] %v2225
      %2296 = vst [vmem:[%s2257] ss:$9 sm:$0xff] %v2226
      %2298 = vst [vmem:[%s2260] ss:$9 sm:$0xff] %v2227
      %2300 = vst [vmem:[%s2263] ss:$9 sm:$0xff] %v2228
      %2302 = vst [vmem:[%s2266] ss:$9 sm:$0xff] %v2229
      %2304 = vst [vmem:[%s2269] ss:$9 sm:$0xff] %v2230
      %v2305 = vld [vmem:[#allocation1] sm:$0xff]
      %2307 = vst [vmem:[#allocation1] ss:$9 sm:$0xff] %v2231
      %2309 = vst [vmem:[%s2251] ss:$9 sm:$0xff] %v2232
      %2311 = vst [vmem:[%s2254] ss:$9 sm:$0xff] %v2233
      %2313 = vst [vmem:[%s2257] ss:$9 sm:$0xff] %v2234
      %2315 = vst [vmem:[%s2260] ss:$9 sm:$0xff] %v2235
      %2317 = vst [vmem:[%s2263] ss:$9 sm:$0xff] %v2236
      %2319 = vst [vmem:[%s2266] ss:$9 sm:$0xff] %v2237
      %2321 = vst [vmem:[%s2269] ss:$9 sm:$0xff] %v2238
      %v2322 = vld [vmem:[#allocation1] sm:$0xff]
      %2324 = vst [vmem:[#allocation1] ss:$9 sm:$0xff] %v2239
      %2326 = vst [vmem:[%s2251] ss:$9 sm:$0xff] %v2240
      %2328 = vst [vmem:[%s2254] ss:$9 sm:$0xff] %v2241
      %2330 = vst [vmem:[%s2257] ss:$9 sm:$0xff] %v2242
      %2332 = vst [vmem:[%s2260] ss:$9 sm:$0xff] %v2243
      %2334 = vst [vmem:[%s2263] ss:$9 sm:$0xff] %v2244
      %2336 = vst [vmem:[%s2266] ss:$9 sm:$0xff] %v2245
      %2338 = vst [vmem:[%s2269] ss:$9 sm:$0xff] %v2246
      %v2339 = vld [vmem:[#allocation1] sm:$0xff]
      %2341 = vst [vmem:[#allocation1] ss:$9 sm:$0xff] %v2206
      %v2342 = vld [vmem:[#allocation1] sm:$0xff]
      %2349 = vmatpush.bf16.msra.mxu0 %v854
      %2350 = vmatpush.bf16.msra.mxu0 %v853
      %2351 = vmatpush.bf16.msra.mxu0 %v852
      %2352 = vmatpush.bf16.msra.mxu0 %v851
      %2353 = vmatpush.bf16.msra.mxu0 %v850
      %2354 = vmatpush.bf16.msra.mxu0 %v849
      %2355 = vmatpush.bf16.msra.mxu0 %v848
      %2356 = vmatpush.bf16.msra.mxu0 %v847
      %2357 = vmatmul.bf16.gmra.mxu0 %v2271
      %v2358 = vpop.f32.mrf.mxu0
      %v2359 = vadd.f32 %v671, %v2358
      %v2360 = vpop.f32.mrf.mxu0
      %v2361 = vadd.f32 %v671, %v2360
      %2362 = vmatmul.bf16.gmra.mxu0 %v2288
      %v2363 = vpop.f32.mrf.mxu0
      %v2364 = vadd.f32 %v671, %v2363
      %v2365 = vpop.f32.mrf.mxu0
      %v2366 = vadd.f32 %v671, %v2365
      %2367 = vmatmul.bf16.gmra.mxu0 %v2305
      %v2368 = vpop.f32.mrf.mxu0
      %v2369 = vadd.f32 %v671, %v2368
      %v2370 = vpop.f32.mrf.mxu0
      %v2371 = vadd.f32 %v671, %v2370
      %2372 = vmatmul.bf16.gmra.mxu0 %v2322
      %v2373 = vpop.f32.mrf.mxu0
      %v2374 = vadd.f32 %v671, %v2373
      %v2375 = vpop.f32.mrf.mxu0
      %v2376 = vadd.f32 %v671, %v2375
      %2377 = vmatmul.bf16.gmra.mxu0 %v2339
      %v2378 = vpop.f32.mrf.mxu0
      %v2379 = vadd.f32 %v671, %v2378
      %v2380 = vpop.f32.mrf.mxu0
      %v2381 = vadd.f32 %v671, %v2380
      %2382 = vmatmul.bf16.gmra.mxu0 %v2342
      %v2383 = vpop.f32.mrf.mxu0
      %v2384 = vadd.f32 %v671, %v2383
      %v2385 = vpop.f32.mrf.mxu0
      %2386 = vdwg.mxu0
      %v2387 = vmax.f32 %v2359, 0.0
      %v2388 = vmax.f32 %v2361, 0.0
      %v2389 = vmax.f32 %v2364, 0.0
      %v2390 = vmax.f32 %v2366, 0.0
      %v2391 = vmax.f32 %v2369, 0.0
      %v2392 = vmax.f32 %v2371, 0.0
      %v2393 = vmax.f32 %v2374, 0.0
      %v2394 = vmax.f32 %v2376, 0.0
      %v2395 = vmax.f32 %v2379, 0.0
      %v2396 = vmax.f32 %v2381, 0.0
      %v2397 = vmax.f32 %v2384, 0.0
      %v2409 = vrot.slane %v2387, 1
      %v2410 = vrot.slane %v2387, 2
      %v2411 = vrot.slane %v2387, 3
      %v2412 = vrot.slane %v2387, 4
      %v2413 = vrot.slane %v2387, 5
      %v2414 = vrot.slane %v2387, 6
      %v2415 = vrot.slane %v2387, 7
      %v2416 = vrot.slane %v2388, 1
      %v2417 = vrot.slane %v2388, 2
      %v2418 = vrot.slane %v2388, 3
      %v2419 = vrot.slane %v2388, 4
      %v2420 = vrot.slane %v2388, 5
      %v2421 = vrot.slane %v2388, 6
      %v2422 = vrot.slane %v2388, 7
      %v2423 = vrot.slane %v2389, 1
      %v2424 = vrot.slane %v2389, 2
      %v2425 = vrot.slane %v2389, 3
      %v2426 = vrot.slane %v2389, 4
      %v2427 = vrot.slane %v2389, 5
      %v2428 = vrot.slane %v2389, 6
      %v2429 = vrot.slane %v2389, 7
      %v2430 = vrot.slane %v2390, 1
      %v2431 = vrot.slane %v2390, 2
      %v2432 = vrot.slane %v2390, 3
      %v2433 = vrot.slane %v2390, 4
      %v2434 = vrot.slane %v2390, 5
      %v2435 = vrot.slane %v2390, 6
      %v2436 = vrot.slane %v2390, 7
      %v2437 = vrot.slane %v2391, 1
      %v2438 = vrot.slane %v2391, 2
      %v2439 = vrot.slane %v2391, 3
      %v2440 = vrot.slane %v2391, 4
      %v2441 = vrot.slane %v2391, 5
      %v2442 = vrot.slane %v2391, 6
      %v2443 = vrot.slane %v2391, 7
      %v2444 = vrot.slane %v2392, 1
      %v2445 = vrot.slane %v2392, 2
      %v2446 = vrot.slane %v2392, 3
      %v2447 = vrot.slane %v2392, 4
      %v2448 = vrot.slane %v2392, 5
      %v2449 = vrot.slane %v2392, 6
      %v2450 = vrot.slane %v2392, 7
      %v2451 = vrot.slane %v2393, 1
      %v2452 = vrot.slane %v2393, 2
      %v2453 = vrot.slane %v2393, 3
      %v2454 = vrot.slane %v2393, 4
      %v2455 = vrot.slane %v2393, 5
      %v2456 = vrot.slane %v2393, 6
      %v2457 = vrot.slane %v2393, 7
      %v2458 = vrot.slane %v2394, 1
      %v2459 = vrot.slane %v2394, 2
      %v2460 = vrot.slane %v2394, 3
      %v2461 = vrot.slane %v2394, 4
      %v2462 = vrot.slane %v2394, 5
      %v2463 = vrot.slane %v2394, 6
      %v2464 = vrot.slane %v2394, 7
      %v2465 = vrot.slane %v2395, 1
      %v2466 = vrot.slane %v2395, 2
      %v2467 = vrot.slane %v2395, 3
      %v2468 = vrot.slane %v2395, 4
      %v2469 = vrot.slane %v2395, 5
      %v2470 = vrot.slane %v2395, 6
      %v2471 = vrot.slane %v2395, 7
      %v2472 = vrot.slane %v2396, 1
      %v2473 = vrot.slane %v2396, 2
      %v2474 = vrot.slane %v2396, 3
      %v2475 = vrot.slane %v2396, 4
      %v2476 = vrot.slane %v2396, 5
      %v2477 = vrot.slane %v2396, 6
      %v2478 = vrot.slane %v2396, 7
      %2479 = vst [vmem:[#allocation1] ss:$9 sm:$0xff] %v2387
      %s2480 = scalar_lea.vmem [#allocation1], 1
      %2481 = vst [vmem:[%s2480] ss:$9 sm:$0xff] %v2409
      %s2482 = scalar_lea.vmem [#allocation1], 2
      %2483 = vst [vmem:[%s2482] ss:$9 sm:$0xff] %v2410
      %s2484 = scalar_lea.vmem [#allocation1], 3
      %2485 = vst [vmem:[%s2484] ss:$9 sm:$0xff] %v2411
      %s2486 = scalar_lea.vmem [#allocation1], 4
      %2487 = vst [vmem:[%s2486] ss:$9 sm:$0xff] %v2412
      %s2488 = scalar_lea.vmem [#allocation1], 5
      %2489 = vst [vmem:[%s2488] ss:$9 sm:$0xff] %v2413
      %s2490 = scalar_lea.vmem [#allocation1], 6
      %2491 = vst [vmem:[%s2490] ss:$9 sm:$0xff] %v2414
      %s2492 = scalar_lea.vmem [#allocation1], 7
      %2493 = vst [vmem:[%s2492] ss:$9 sm:$0xff] %v2415
      %v2494 = vld [vmem:[#allocation1] sm:$0xff]
      %2495 = vst [vmem:[#allocation1] ss:$9 sm:$0xff] %v2388
      %v2496 = vld [vmem:[#allocation1] sm:$0xff]
      %2497 = vst [vmem:[#allocation1] ss:$9 sm:$0xff] %v2416
      %2498 = vst [vmem:[%s2480] ss:$9 sm:$0xff] %v2417
      %2499 = vst [vmem:[%s2482] ss:$9 sm:$0xff] %v2418
      %2500 = vst [vmem:[%s2484] ss:$9 sm:$0xff] %v2419
      %2501 = vst [vmem:[%s2486] ss:$9 sm:$0xff] %v2420
      %2502 = vst [vmem:[%s2488] ss:$9 sm:$0xff] %v2421
      %2503 = vst [vmem:[%s2490] ss:$9 sm:$0xff] %v2422
      %2504 = vst [vmem:[%s2492] ss:$9 sm:$0xff] %v2389
      %v2505 = vld [vmem:[#allocation1] sm:$0xff]
      %2506 = vst [vmem:[#allocation1] ss:$9 sm:$0xff] %v2423
      %v2507 = vld [vmem:[#allocation1] sm:$0xff]
      %2508 = vst [vmem:[#allocation1] ss:$9 sm:$0xff] %v2424
      %2509 = vst [vmem:[%s2480] ss:$9 sm:$0xff] %v2425
      %2510 = vst [vmem:[%s2482] ss:$9 sm:$0xff] %v2426
      %2511 = vst [vmem:[%s2484] ss:$9 sm:$0xff] %v2427
      %2512 = vst [vmem:[%s2486] ss:$9 sm:$0xff] %v2428
      %2513 = vst [vmem:[%s2488] ss:$9 sm:$0xff] %v2429
      %2514 = vst [vmem:[%s2490] ss:$9 sm:$0xff] %v2390
      %2515 = vst [vmem:[%s2492] ss:$9 sm:$0xff] %v2430
      %v2516 = vld [vmem:[#allocation1] sm:$0xff]
      %2517 = vst [vmem:[#allocation1] ss:$9 sm:$0xff] %v2431
      %v2518 = vld [vmem:[#allocation1] sm:$0xff]
      %2519 = vst [vmem:[#allocation1] ss:$9 sm:$0xff] %v2432
      %2520 = vst [vmem:[%s2480] ss:$9 sm:$0xff] %v2433
      %2521 = vst [vmem:[%s2482] ss:$9 sm:$0xff] %v2434
      %2522 = vst [vmem:[%s2484] ss:$9 sm:$0xff] %v2435
      %2523 = vst [vmem:[%s2486] ss:$9 sm:$0xff] %v2436
      %2524 = vst [vmem:[%s2488] ss:$9 sm:$0xff] %v2391
      %2525 = vst [vmem:[%s2490] ss:$9 sm:$0xff] %v2437
      %2526 = vst [vmem:[%s2492] ss:$9 sm:$0xff] %v2438
      %v2527 = vld [vmem:[#allocation1] sm:$0xff]
      %2528 = vst [vmem:[#allocation1] ss:$9 sm:$0xff] %v2439
      %v2529 = vld [vmem:[#allocation1] sm:$0xff]
      %2530 = vst [vmem:[#allocation1] ss:$9 sm:$0xff] %v2440
      %2531 = vst [vmem:[%s2480] ss:$9 sm:$0xff] %v2441
      %2532 = vst [vmem:[%s2482] ss:$9 sm:$0xff] %v2442
      %2533 = vst [vmem:[%s2484] ss:$9 sm:$0xff] %v2443
      %2534 = vst [vmem:[%s2486] ss:$9 sm:$0xff] %v2392
      %2535 = vst [vmem:[%s2488] ss:$9 sm:$0xff] %v2444
      %2536 = vst [vmem:[%s2490] ss:$9 sm:$0xff] %v2445
      %2537 = vst [vmem:[%s2492] ss:$9 sm:$0xff] %v2446
      %v2538 = vld [vmem:[#allocation1] sm:$0xff]
      %2539 = vst [vmem:[#allocation1] ss:$9 sm:$0xff] %v2447
      %v2540 = vld [vmem:[#allocation1] sm:$0xff]
      %2541 = vst [vmem:[#allocation1] ss:$9 sm:$0xff] %v2448
      %2542 = vst [vmem:[%s2480] ss:$9 sm:$0xff] %v2449
      %2543 = vst [vmem:[%s2482] ss:$9 sm:$0xff] %v2450
      %2544 = vst [vmem:[%s2484] ss:$9 sm:$0xff] %v2393
      %2545 = vst [vmem:[%s2486] ss:$9 sm:$0xff] %v2451
      %2546 = vst [vmem:[%s2488] ss:$9 sm:$0xff] %v2452
      %2547 = vst [vmem:[%s2490] ss:$9 sm:$0xff] %v2453
      %2548 = vst [vmem:[%s2492] ss:$9 sm:$0xff] %v2454
      %v2549 = vld [vmem:[#allocation1] sm:$0xff]
      %2550 = vst [vmem:[#allocation1] ss:$9 sm:$0xff] %v2455
      %v2551 = vld [vmem:[#allocation1] sm:$0xff]
      %2552 = vst [vmem:[#allocation1] ss:$9 sm:$0xff] %v2456
      %2553 = vst [vmem:[%s2480] ss:$9 sm:$0xff] %v2457
      %2554 = vst [vmem:[%s2482] ss:$9 sm:$0xff] %v2394
      %2555 = vst [vmem:[%s2484] ss:$9 sm:$0xff] %v2458
      %2556 = vst [vmem:[%s2486] ss:$9 sm:$0xff] %v2459
      %2557 = vst [vmem:[%s2488] ss:$9 sm:$0xff] %v2460
      %2558 = vst [vmem:[%s2490] ss:$9 sm:$0xff] %v2461
      %2559 = vst [vmem:[%s2492] ss:$9 sm:$0xff] %v2462
      %v2560 = vld [vmem:[#allocation1] sm:$0xff]
      %2561 = vst [vmem:[#allocation1] ss:$9 sm:$0xff] %v2463
      %v2562 = vld [vmem:[#allocation1] sm:$0xff]
      %2563 = vst [vmem:[#allocation1] ss:$9 sm:$0xff] %v2464
      %2564 = vst [vmem:[%s2480] ss:$9 sm:$0xff] %v2395
      %2565 = vst [vmem:[%s2482] ss:$9 sm:$0xff] %v2465
      %2566 = vst [vmem:[%s2484] ss:$9 sm:$0xff] %v2466
      %2567 = vst [vmem:[%s2486] ss:$9 sm:$0xff] %v2467
      %2568 = vst [vmem:[%s2488] ss:$9 sm:$0xff] %v2468
      %2569 = vst [vmem:[%s2490] ss:$9 sm:$0xff] %v2469
      %2570 = vst [vmem:[%s2492] ss:$9 sm:$0xff] %v2470
      %v2571 = vld [vmem:[#allocation1] sm:$0xff]
      %2572 = vst [vmem:[#allocation1] ss:$9 sm:$0xff] %v2471
      %v2573 = vld [vmem:[#allocation1] sm:$0xff]
      %2574 = vst [vmem:[#allocation1] ss:$9 sm:$0xff] %v2396
      %2575 = vst [vmem:[%s2480] ss:$9 sm:$0xff] %v2472
      %2576 = vst [vmem:[%s2482] ss:$9 sm:$0xff] %v2473
      %2577 = vst [vmem:[%s2484] ss:$9 sm:$0xff] %v2474
      %2578 = vst [vmem:[%s2486] ss:$9 sm:$0xff] %v2475
      %2579 = vst [vmem:[%s2488] ss:$9 sm:$0xff] %v2476
      %2580 = vst [vmem:[%s2490] ss:$9 sm:$0xff] %v2477
      %2581 = vst [vmem:[%s2492] ss:$9 sm:$0xff] %v2478
      %v2582 = vld [vmem:[#allocation1] sm:$0xff]
      %2583 = vst [vmem:[#allocation1] ss:$9 sm:$0xff] %v2397
      %v2584 = vld [vmem:[#allocation1] sm:$0xff]
      %v2603 = vpack.c.bf16 %v2494, %v2494
      %v2604 = vpack.c.bf16 %v2496, %v2496
      %v2605 = vpack.c.bf16 %v2505, %v2505
      %v2606 = vpack.c.bf16 %v2507, %v2507
      %v2607 = vpack.c.bf16 %v2516, %v2516
      %v2608 = vpack.c.bf16 %v2518, %v2518
      %v2609 = vpack.c.bf16 %v2527, %v2527
      %v2610 = vpack.c.bf16 %v2529, %v2529
      %v2611 = vpack.c.bf16 %v2538, %v2538
      %v2612 = vpack.c.bf16 %v2540, %v2540
      %v2613 = vpack.c.bf16 %v2549, %v2549
      %v2614 = vpack.c.bf16 %v2551, %v2551
      %v2615 = vpack.c.bf16 %v2560, %v2560
      %v2616 = vpack.c.bf16 %v2562, %v2562
      %v2617 = vpack.c.bf16 %v2571, %v2571
      %v2618 = vpack.c.bf16 %v2573, %v2573
      %v2619 = vpack.c.bf16 %v2582, %v2582
      %v2620 = vpack.c.bf16 %v2584, %v2584
      %s2621 = scalar_lea.vmem [#allocation2], 144
      %2622 = vst [vmem:[%s2621] sm:$0xf] %v2603
      %v2623 = vld [vmem:[%s2621 + $0x4] sm:$0x1]
      %v2624 = vsel %vm1138, %v2604, %v2623
      %2625 = vst [vmem:[%s2621 + $0x4] sm:$0x1] %v2624
      %2626 = vst [vmem:[%s2621 + $0x8] sm:$0xf] %v2605
      %v2627 = vld [vmem:[%s2621 + $0xc] sm:$0x1]
      %v2628 = vsel %vm1138, %v2606, %v2627
      %2629 = vst [vmem:[%s2621 + $0xc] sm:$0x1] %v2628
      %2630 = vst [vmem:[%s2621 + $0x10] sm:$0xf] %v2607
      %v2631 = vld [vmem:[%s2621 + $0x14] sm:$0x1]
      %v2632 = vsel %vm1138, %v2608, %v2631
      %2633 = vst [vmem:[%s2621 + $0x14] sm:$0x1] %v2632
      %2634 = vst [vmem:[%s2621 + $0x18] sm:$0xf] %v2609
      %v2635 = vld [vmem:[%s2621 + $0x1c] sm:$0x1]
      %v2636 = vsel %vm1138, %v2610, %v2635
      %2637 = vst [vmem:[%s2621 + $0x1c] sm:$0x1] %v2636
      %2638 = vst [vmem:[%s2621 + $0x20] sm:$0xf] %v2611
      %v2639 = vld [vmem:[%s2621 + $0x24] sm:$0x1]
      %v2640 = vsel %vm1138, %v2612, %v2639
      %2641 = vst [vmem:[%s2621 + $0x24] sm:$0x1] %v2640
      %2642 = vst [vmem:[%s2621 + $0x28] sm:$0xf] %v2613
      %v2643 = vld [vmem:[%s2621 + $0x2c] sm:$0x1]
      %v2644 = vsel %vm1138, %v2614, %v2643
      %2645 = vst [vmem:[%s2621 + $0x2c] sm:$0x1] %v2644
      %2646 = vst [vmem:[%s2621 + $0x30] sm:$0xf] %v2615
      %v2647 = vld [vmem:[%s2621 + $0x34] sm:$0x1]
      %v2648 = vsel %vm1138, %v2616, %v2647
      %2649 = vst [vmem:[%s2621 + $0x34] sm:$0x1] %v2648
      %2650 = vst [vmem:[%s2621 + $0x38] sm:$0xf] %v2617
      %v2651 = vld [vmem:[%s2621 + $0x3c] sm:$0x1]
      %v2652 = vsel %vm1138, %v2618, %v2651
      %2653 = vst [vmem:[%s2621 + $0x3c] sm:$0x1] %v2652
      %2654 = vst [vmem:[%s2621 + $0x40] sm:$0xf] %v2619
      %v2655 = vld [vmem:[%s2621 + $0x44] sm:$0x1]
      %v2656 = vsel %vm1138, %v2620, %v2655
      %2657 = vst [vmem:[%s2621 + $0x44] sm:$0x1] %v2656
      %s2658 = sadd.s32 %s375, 54
      %s2659 = smul.addr %s2658, 4
      %s2660 = scalar_lea.vmem %s345, %s2659
      %v2661 = vld [vmem:[%s2660] sm:$0xf]
      %v2662 = vld [vmem:[%s2660 + $0x4] sm:$0x1]
      %v2663 = vld [vmem:[%s2660 + $0x8] sm:$0xf]
      %v2664 = vld [vmem:[%s2660 + $0xc] sm:$0x1]
      %v2665 = vld [vmem:[%s2660 + $0x10] sm:$0xf]
      %v2666 = vld [vmem:[%s2660 + $0x14] sm:$0x1]
      %v2667 = vld [vmem:[%s2660 + $0x18] sm:$0xf]
      %v2668 = vld [vmem:[%s2660 + $0x1c] sm:$0x1]
      %v2669 = vld [vmem:[%s2660 + $0x20] sm:$0xf]
      %v2670 = vld [vmem:[%s2660 + $0x24] sm:$0x1]
      %v2671 = vld [vmem:[%s2660 + $0x28] sm:$0xf]
      %v2672 = vld [vmem:[%s2660 + $0x2c] sm:$0x1]
      %v2673 = vld [vmem:[%s2660 + $0x30] sm:$0xf]
      %v2674 = vld [vmem:[%s2660 + $0x34] sm:$0x1]
      %v2675 = vld [vmem:[%s2660 + $0x38] sm:$0xf]
      %v2676 = vld [vmem:[%s2660 + $0x3c] sm:$0x1]
      %v2677 = vld [vmem:[%s2660 + $0x40] sm:$0xf]
      %v2678 = vld [vmem:[%s2660 + $0x44] sm:$0x1]
      %v2697 = vrot.slane %v2661, 3
      %v2698 = vrot.slane %v2662, 3
      %v2699 = vrot.slane %v2663, 3
      %v2700 = vrot.slane %v2664, 3
      %v2701 = vrot.slane %v2665, 3
      %v2702 = vrot.slane %v2666, 3
      %v2703 = vrot.slane %v2667, 3
      %v2704 = vrot.slane %v2668, 3
      %v2705 = vrot.slane %v2669, 3
      %v2706 = vrot.slane %v2670, 3
      %v2707 = vrot.slane %v2671, 3
      %v2708 = vrot.slane %v2672, 3
      %v2709 = vrot.slane %v2673, 3
      %v2710 = vrot.slane %v2674, 3
      %v2711 = vrot.slane %v2675, 3
      %v2712 = vrot.slane %v2676, 3
      %v2713 = vrot.slane %v2677, 3
      %v2714 = vrot.slane %v2678, 3
      %v2717 = vsel %vm432, %v2661, %v2697
      %v2719 = vsel %vm437, %v2661, %v2697
      %v2721 = vrot.slane %v2719, 1
      %v2722 = vsel %vm441, %v2661, %v2697
      %v2724 = vrot.slane %v2722, 2
      %v2725 = vsel %vm445, %v2661, %v2697
      %v2727 = vrot.slane %v2725, 3
      %v2730 = vsel %vm432, %v2662, %v2698
      %v2734 = vsel %vm432, %v2663, %v2699
      %v2736 = vsel %vm437, %v2663, %v2699
      %v2738 = vrot.slane %v2736, 1
      %v2739 = vsel %vm441, %v2663, %v2699
      %v2741 = vrot.slane %v2739, 2
      %v2742 = vsel %vm445, %v2663, %v2699
      %v2744 = vrot.slane %v2742, 3
      %v2747 = vsel %vm432, %v2664, %v2700
      %v2751 = vsel %vm432, %v2665, %v2701
      %v2753 = vsel %vm437, %v2665, %v2701
      %v2755 = vrot.slane %v2753, 1
      %v2756 = vsel %vm441, %v2665, %v2701
      %v2758 = vrot.slane %v2756, 2
      %v2759 = vsel %vm445, %v2665, %v2701
      %v2761 = vrot.slane %v2759, 3
      %v2764 = vsel %vm432, %v2666, %v2702
      %v2768 = vsel %vm432, %v2667, %v2703
      %v2770 = vsel %vm437, %v2667, %v2703
      %v2772 = vrot.slane %v2770, 1
      %v2773 = vsel %vm441, %v2667, %v2703
      %v2775 = vrot.slane %v2773, 2
      %v2776 = vsel %vm445, %v2667, %v2703
      %v2778 = vrot.slane %v2776, 3
      %v2781 = vsel %vm432, %v2668, %v2704
      %v2785 = vsel %vm432, %v2669, %v2705
      %v2787 = vsel %vm437, %v2669, %v2705
      %v2789 = vrot.slane %v2787, 1
      %v2790 = vsel %vm441, %v2669, %v2705
      %v2792 = vrot.slane %v2790, 2
      %v2793 = vsel %vm445, %v2669, %v2705
      %v2795 = vrot.slane %v2793, 3
      %v2798 = vsel %vm432, %v2670, %v2706
      %v2802 = vsel %vm432, %v2671, %v2707
      %v2804 = vsel %vm437, %v2671, %v2707
      %v2806 = vrot.slane %v2804, 1
      %v2807 = vsel %vm441, %v2671, %v2707
      %v2809 = vrot.slane %v2807, 2
      %v2810 = vsel %vm445, %v2671, %v2707
      %v2812 = vrot.slane %v2810, 3
      %v2815 = vsel %vm432, %v2672, %v2708
      %v2819 = vsel %vm432, %v2673, %v2709
      %v2821 = vsel %vm437, %v2673, %v2709
      %v2823 = vrot.slane %v2821, 1
      %v2824 = vsel %vm441, %v2673, %v2709
      %v2826 = vrot.slane %v2824, 2
      %v2827 = vsel %vm445, %v2673, %v2709
      %v2829 = vrot.slane %v2827, 3
      %v2832 = vsel %vm432, %v2674, %v2710
      %v2836 = vsel %vm432, %v2675, %v2711
      %v2838 = vsel %vm437, %v2675, %v2711
      %v2840 = vrot.slane %v2838, 1
      %v2841 = vsel %vm441, %v2675, %v2711
      %v2843 = vrot.slane %v2841, 2
      %v2844 = vsel %vm445, %v2675, %v2711
      %v2846 = vrot.slane %v2844, 3
      %v2849 = vsel %vm432, %v2676, %v2712
      %v2853 = vsel %vm432, %v2677, %v2713
      %v2855 = vsel %vm437, %v2677, %v2713
      %v2857 = vrot.slane %v2855, 1
      %v2858 = vsel %vm441, %v2677, %v2713
      %v2860 = vrot.slane %v2858, 2
      %v2861 = vsel %vm445, %v2677, %v2713
      %v2863 = vrot.slane %v2861, 3
      %v2866 = vsel %vm432, %v2678, %v2714
      %v2868 = vunpack.i.l.s16 %v2717
      %v2869 = vunpack.i.h.s16 %v2717
      %v2870 = vunpack.i.l.s16 %v2721
      %v2871 = vunpack.i.h.s16 %v2721
      %v2872 = vunpack.i.l.s16 %v2724
      %v2873 = vunpack.i.h.s16 %v2724
      %v2874 = vunpack.i.l.s16 %v2727
      %v2875 = vunpack.i.h.s16 %v2727
      %v2876 = vunpack.i.l.s16 %v2730
      %v2877 = vunpack.i.l.s16 %v2734
      %v2878 = vunpack.i.h.s16 %v2734
      %v2879 = vunpack.i.l.s16 %v2738
      %v2880 = vunpack.i.h.s16 %v2738
      %v2881 = vunpack.i.l.s16 %v2741
      %v2882 = vunpack.i.h.s16 %v2741
      %v2883 = vunpack.i.l.s16 %v2744
      %v2884 = vunpack.i.h.s16 %v2744
      %v2885 = vunpack.i.l.s16 %v2747
      %v2886 = vunpack.i.l.s16 %v2751
      %v2887 = vunpack.i.h.s16 %v2751
      %v2888 = vunpack.i.l.s16 %v2755
      %v2889 = vunpack.i.h.s16 %v2755
      %v2890 = vunpack.i.l.s16 %v2758
      %v2891 = vunpack.i.h.s16 %v2758
      %v2892 = vunpack.i.l.s16 %v2761
      %v2893 = vunpack.i.h.s16 %v2761
      %v2894 = vunpack.i.l.s16 %v2764
      %v2895 = vunpack.i.l.s16 %v2768
      %v2896 = vunpack.i.h.s16 %v2768
      %v2897 = vunpack.i.l.s16 %v2772
      %v2898 = vunpack.i.h.s16 %v2772
      %v2899 = vunpack.i.l.s16 %v2775
      %v2900 = vunpack.i.h.s16 %v2775
      %v2901 = vunpack.i.l.s16 %v2778
      %v2902 = vunpack.i.h.s16 %v2778
      %v2903 = vunpack.i.l.s16 %v2781
      %v2904 = vunpack.i.l.s16 %v2785
      %v2905 = vunpack.i.h.s16 %v2785
      %v2906 = vunpack.i.l.s16 %v2789
      %v2907 = vunpack.i.h.s16 %v2789
      %v2908 = vunpack.i.l.s16 %v2792
      %v2909 = vunpack.i.h.s16 %v2792
      %v2910 = vunpack.i.l.s16 %v2795
      %v2911 = vunpack.i.h.s16 %v2795
      %v2912 = vunpack.i.l.s16 %v2798
      %v2913 = vunpack.i.l.s16 %v2802
      %v2914 = vunpack.i.h.s16 %v2802
      %v2915 = vunpack.i.l.s16 %v2806
      %v2916 = vunpack.i.h.s16 %v2806
      %v2917 = vunpack.i.l.s16 %v2809
      %v2918 = vunpack.i.h.s16 %v2809
      %v2919 = vunpack.i.l.s16 %v2812
      %v2920 = vunpack.i.h.s16 %v2812
      %v2921 = vunpack.i.l.s16 %v2815
      %v2922 = vunpack.i.l.s16 %v2819
      %v2923 = vunpack.i.h.s16 %v2819
      %v2924 = vunpack.i.l.s16 %v2823
      %v2925 = vunpack.i.h.s16 %v2823
      %v2926 = vunpack.i.l.s16 %v2826
      %v2927 = vunpack.i.h.s16 %v2826
      %v2928 = vunpack.i.l.s16 %v2829
      %v2929 = vunpack.i.h.s16 %v2829
      %v2930 = vunpack.i.l.s16 %v2832
      %v2931 = vunpack.i.l.s16 %v2836
      %v2932 = vunpack.i.h.s16 %v2836
      %v2933 = vunpack.i.l.s16 %v2840
      %v2934 = vunpack.i.h.s16 %v2840
      %v2935 = vunpack.i.l.s16 %v2843
      %v2936 = vunpack.i.h.s16 %v2843
      %v2937 = vunpack.i.l.s16 %v2846
      %v2938 = vunpack.i.h.s16 %v2846
      %v2939 = vunpack.i.l.s16 %v2849
      %v2940 = vunpack.i.l.s16 %v2853
      %v2941 = vunpack.i.h.s16 %v2853
      %v2942 = vunpack.i.l.s16 %v2857
      %v2943 = vunpack.i.h.s16 %v2857
      %v2944 = vunpack.i.l.s16 %v2860
      %v2945 = vunpack.i.h.s16 %v2860
      %v2946 = vunpack.i.l.s16 %v2863
      %v2947 = vunpack.i.h.s16 %v2863
      %v2948 = vunpack.i.l.s16 %v2866
      %v2949 = vpack.i.b16 %v2869, %v2868
      %v2950 = vpack.i.b16 %v2871, %v2870
      %v2951 = vpack.i.b16 %v2873, %v2872
      %v2952 = vpack.i.b16 %v2875, %v2874
      %v2953 = vpack.i.b16 %v2877, %v2876
      %v2954 = vpack.i.b16 %v2879, %v2878
      %v2955 = vpack.i.b16 %v2881, %v2880
      %v2956 = vpack.i.b16 %v2883, %v2882
      %v2957 = vpack.i.b16 %v2885, %v2884
      %v2958 = vpack.i.b16 %v2887, %v2886
      %v2959 = vpack.i.b16 %v2889, %v2888
      %v2960 = vpack.i.b16 %v2891, %v2890
      %v2961 = vpack.i.b16 %v2893, %v2892
      %v2962 = vpack.i.b16 %v2895, %v2894
      %v2963 = vpack.i.b16 %v2897, %v2896
      %v2964 = vpack.i.b16 %v2899, %v2898
      %v2965 = vpack.i.b16 %v2901, %v2900
      %v2966 = vpack.i.b16 %v2903, %v2902
      %v2967 = vpack.i.b16 %v2905, %v2904
      %v2968 = vpack.i.b16 %v2907, %v2906
      %v2969 = vpack.i.b16 %v2909, %v2908
      %v2970 = vpack.i.b16 %v2911, %v2910
      %v2971 = vpack.i.b16 %v2913, %v2912
      %v2972 = vpack.i.b16 %v2915, %v2914
      %v2973 = vpack.i.b16 %v2917, %v2916
      %v2974 = vpack.i.b16 %v2919, %v2918
      %v2975 = vpack.i.b16 %v2921, %v2920
      %v2976 = vpack.i.b16 %v2923, %v2922
      %v2977 = vpack.i.b16 %v2925, %v2924
      %v2978 = vpack.i.b16 %v2927, %v2926
      %v2979 = vpack.i.b16 %v2929, %v2928
      %v2980 = vpack.i.b16 %v2931, %v2930
      %v2981 = vpack.i.b16 %v2933, %v2932
      %v2982 = vpack.i.b16 %v2935, %v2934
      %v2983 = vpack.i.b16 %v2937, %v2936
      %v2984 = vpack.i.b16 %v2939, %v2938
      %v2985 = vpack.i.b16 %v2941, %v2940
      %v2986 = vpack.i.b16 %v2943, %v2942
      %v2987 = vpack.i.b16 %v2945, %v2944
      %v2988 = vpack.i.b16 %v2947, %v2946
      %2991 = vst [vmem:[#allocation1] ss:$9 sm:$0xff] %v2949
      %s2993 = scalar_lea.vmem [#allocation1], 1
      %2994 = vst [vmem:[%s2993] ss:$9 sm:$0xff] %v2950
      %s2996 = scalar_lea.vmem [#allocation1], 2
      %2997 = vst [vmem:[%s2996] ss:$9 sm:$0xff] %v2951
      %s2999 = scalar_lea.vmem [#allocation1], 3
      %3000 = vst [vmem:[%s2999] ss:$9 sm:$0xff] %v2952
      %s3002 = scalar_lea.vmem [#allocation1], 4
      %3003 = vst [vmem:[%s3002] ss:$9 sm:$0xff] %v2953
      %s3005 = scalar_lea.vmem [#allocation1], 5
      %3006 = vst [vmem:[%s3005] ss:$9 sm:$0xff] %v2954
      %s3008 = scalar_lea.vmem [#allocation1], 6
      %3009 = vst [vmem:[%s3008] ss:$9 sm:$0xff] %v2955
      %s3011 = scalar_lea.vmem [#allocation1], 7
      %3012 = vst [vmem:[%s3011] ss:$9 sm:$0xff] %v2956
      %v3013 = vld [vmem:[#allocation1] sm:$0xff]
      %3015 = vst [vmem:[#allocation1] ss:$9 sm:$0xff] %v2957
      %3017 = vst [vmem:[%s2993] ss:$9 sm:$0xff] %v2958
      %3019 = vst [vmem:[%s2996] ss:$9 sm:$0xff] %v2959
      %3021 = vst [vmem:[%s2999] ss:$9 sm:$0xff] %v2960
      %3023 = vst [vmem:[%s3002] ss:$9 sm:$0xff] %v2961
      %3025 = vst [vmem:[%s3005] ss:$9 sm:$0xff] %v2962
      %3027 = vst [vmem:[%s3008] ss:$9 sm:$0xff] %v2963
      %3029 = vst [vmem:[%s3011] ss:$9 sm:$0xff] %v2964
      %v3030 = vld [vmem:[#allocation1] sm:$0xff]
      %3032 = vst [vmem:[#allocation1] ss:$9 sm:$0xff] %v2965
      %3034 = vst [vmem:[%s2993] ss:$9 sm:$0xff] %v2966
      %3036 = vst [vmem:[%s2996] ss:$9 sm:$0xff] %v2967
      %3038 = vst [vmem:[%s2999] ss:$9 sm:$0xff] %v2968
      %3040 = vst [vmem:[%s3002] ss:$9 sm:$0xff] %v2969
      %3042 = vst [vmem:[%s3005] ss:$9 sm:$0xff] %v2970
      %3044 = vst [vmem:[%s3008] ss:$9 sm:$0xff] %v2971
      %3046 = vst [vmem:[%s3011] ss:$9 sm:$0xff] %v2972
      %v3047 = vld [vmem:[#allocation1] sm:$0xff]
      %3049 = vst [vmem:[#allocation1] ss:$9 sm:$0xff] %v2973
      %3051 = vst [vmem:[%s2993] ss:$9 sm:$0xff] %v2974
      %3053 = vst [vmem:[%s2996] ss:$9 sm:$0xff] %v2975
      %3055 = vst [vmem:[%s2999] ss:$9 sm:$0xff] %v2976
      %3057 = vst [vmem:[%s3002] ss:$9 sm:$0xff] %v2977
      %3059 = vst [vmem:[%s3005] ss:$9 sm:$0xff] %v2978
      %3061 = vst [vmem:[%s3008] ss:$9 sm:$0xff] %v2979
      %3063 = vst [vmem:[%s3011] ss:$9 sm:$0xff] %v2980
      %v3064 = vld [vmem:[#allocation1] sm:$0xff]
      %3066 = vst [vmem:[#allocation1] ss:$9 sm:$0xff] %v2981
      %3068 = vst [vmem:[%s2993] ss:$9 sm:$0xff] %v2982
      %3070 = vst [vmem:[%s2996] ss:$9 sm:$0xff] %v2983
      %3072 = vst [vmem:[%s2999] ss:$9 sm:$0xff] %v2984
      %3074 = vst [vmem:[%s3002] ss:$9 sm:$0xff] %v2985
      %3076 = vst [vmem:[%s3005] ss:$9 sm:$0xff] %v2986
      %3078 = vst [vmem:[%s3008] ss:$9 sm:$0xff] %v2987
      %3080 = vst [vmem:[%s3011] ss:$9 sm:$0xff] %v2988
      %v3081 = vld [vmem:[#allocation1] sm:$0xff]
      %3083 = vst [vmem:[#allocation1] ss:$9 sm:$0xff] %v2948
      %v3084 = vld [vmem:[#allocation1] sm:$0xff]
      %3091 = vmatpush.bf16.msra.mxu0 %v854
      %3092 = vmatpush.bf16.msra.mxu0 %v853
      %3093 = vmatpush.bf16.msra.mxu0 %v852
      %3094 = vmatpush.bf16.msra.mxu0 %v851
      %3095 = vmatpush.bf16.msra.mxu0 %v850
      %3096 = vmatpush.bf16.msra.mxu0 %v849
      %3097 = vmatpush.bf16.msra.mxu0 %v848
      %3098 = vmatpush.bf16.msra.mxu0 %v847
      %3099 = vmatmul.bf16.gmra.mxu0 %v3013
      %v3100 = vpop.f32.mrf.mxu0
      %v3101 = vadd.f32 %v671, %v3100
      %v3102 = vpop.f32.mrf.mxu0
      %v3103 = vadd.f32 %v671, %v3102
      %3104 = vmatmul.bf16.gmra.mxu0 %v3030
      %v3105 = vpop.f32.mrf.mxu0
      %v3106 = vadd.f32 %v671, %v3105
      %v3107 = vpop.f32.mrf.mxu0
      %v3108 = vadd.f32 %v671, %v3107
      %3109 = vmatmul.bf16.gmra.mxu0 %v3047
      %v3110 = vpop.f32.mrf.mxu0
      %v3111 = vadd.f32 %v671, %v3110
      %v3112 = vpop.f32.mrf.mxu0
      %v3113 = vadd.f32 %v671, %v3112
      %3114 = vmatmul.bf16.gmra.mxu0 %v3064
      %v3115 = vpop.f32.mrf.mxu0
      %v3116 = vadd.f32 %v671, %v3115
      %v3117 = vpop.f32.mrf.mxu0
      %v3118 = vadd.f32 %v671, %v3117
      %3119 = vmatmul.bf16.gmra.mxu0 %v3081
      %v3120 = vpop.f32.mrf.mxu0
      %v3121 = vadd.f32 %v671, %v3120
      %v3122 = vpop.f32.mrf.mxu0
      %v3123 = vadd.f32 %v671, %v3122
      %3124 = vmatmul.bf16.gmra.mxu0 %v3084
      %v3125 = vpop.f32.mrf.mxu0
      %v3126 = vadd.f32 %v671, %v3125
      %v3127 = vpop.f32.mrf.mxu0
      %3128 = vdwg.mxu0
      %v3129 = vmax.f32 %v3101, 0.0
      %v3130 = vmax.f32 %v3103, 0.0
      %v3131 = vmax.f32 %v3106, 0.0
      %v3132 = vmax.f32 %v3108, 0.0
      %v3133 = vmax.f32 %v3111, 0.0
      %v3134 = vmax.f32 %v3113, 0.0
      %v3135 = vmax.f32 %v3116, 0.0
      %v3136 = vmax.f32 %v3118, 0.0
      %v3137 = vmax.f32 %v3121, 0.0
      %v3138 = vmax.f32 %v3123, 0.0
      %v3139 = vmax.f32 %v3126, 0.0
      %v3151 = vrot.slane %v3129, 1
      %v3152 = vrot.slane %v3129, 2
      %v3153 = vrot.slane %v3129, 3
      %v3154 = vrot.slane %v3129, 4
      %v3155 = vrot.slane %v3129, 5
      %v3156 = vrot.slane %v3129, 6
      %v3157 = vrot.slane %v3129, 7
      %v3158 = vrot.slane %v3130, 1
      %v3159 = vrot.slane %v3130, 2
      %v3160 = vrot.slane %v3130, 3
      %v3161 = vrot.slane %v3130, 4
      %v3162 = vrot.slane %v3130, 5
      %v3163 = vrot.slane %v3130, 6
      %v3164 = vrot.slane %v3130, 7
      %v3165 = vrot.slane %v3131, 1
      %v3166 = vrot.slane %v3131, 2
      %v3167 = vrot.slane %v3131, 3
      %v3168 = vrot.slane %v3131, 4
      %v3169 = vrot.slane %v3131, 5
      %v3170 = vrot.slane %v3131, 6
      %v3171 = vrot.slane %v3131, 7
      %v3172 = vrot.slane %v3132, 1
      %v3173 = vrot.slane %v3132, 2
      %v3174 = vrot.slane %v3132, 3
      %v3175 = vrot.slane %v3132, 4
      %v3176 = vrot.slane %v3132, 5
      %v3177 = vrot.slane %v3132, 6
      %v3178 = vrot.slane %v3132, 7
      %v3179 = vrot.slane %v3133, 1
      %v3180 = vrot.slane %v3133, 2
      %v3181 = vrot.slane %v3133, 3
      %v3182 = vrot.slane %v3133, 4
      %v3183 = vrot.slane %v3133, 5
      %v3184 = vrot.slane %v3133, 6
      %v3185 = vrot.slane %v3133, 7
      %v3186 = vrot.slane %v3134, 1
      %v3187 = vrot.slane %v3134, 2
      %v3188 = vrot.slane %v3134, 3
      %v3189 = vrot.slane %v3134, 4
      %v3190 = vrot.slane %v3134, 5
      %v3191 = vrot.slane %v3134, 6
      %v3192 = vrot.slane %v3134, 7
      %v3193 = vrot.slane %v3135, 1
      %v3194 = vrot.slane %v3135, 2
      %v3195 = vrot.slane %v3135, 3
      %v3196 = vrot.slane %v3135, 4
      %v3197 = vrot.slane %v3135, 5
      %v3198 = vrot.slane %v3135, 6
      %v3199 = vrot.slane %v3135, 7
      %v3200 = vrot.slane %v3136, 1
      %v3201 = vrot.slane %v3136, 2
      %v3202 = vrot.slane %v3136, 3
      %v3203 = vrot.slane %v3136, 4
      %v3204 = vrot.slane %v3136, 5
      %v3205 = vrot.slane %v3136, 6
      %v3206 = vrot.slane %v3136, 7
      %v3207 = vrot.slane %v3137, 1
      %v3208 = vrot.slane %v3137, 2
      %v3209 = vrot.slane %v3137, 3
      %v3210 = vrot.slane %v3137, 4
      %v3211 = vrot.slane %v3137, 5
      %v3212 = vrot.slane %v3137, 6
      %v3213 = vrot.slane %v3137, 7
      %v3214 = vrot.slane %v3138, 1
      %v3215 = vrot.slane %v3138, 2
      %v3216 = vrot.slane %v3138, 3
      %v3217 = vrot.slane %v3138, 4
      %v3218 = vrot.slane %v3138, 5
      %v3219 = vrot.slane %v3138, 6
      %v3220 = vrot.slane %v3138, 7
      %3221 = vst [vmem:[#allocation1] ss:$9 sm:$0xff] %v3129
      %s3222 = scalar_lea.vmem [#allocation1], 1
      %3223 = vst [vmem:[%s3222] ss:$9 sm:$0xff] %v3151
      %s3224 = scalar_lea.vmem [#allocation1], 2
      %3225 = vst [vmem:[%s3224] ss:$9 sm:$0xff] %v3152
      %s3226 = scalar_lea.vmem [#allocation1], 3
      %3227 = vst [vmem:[%s3226] ss:$9 sm:$0xff] %v3153
      %s3228 = scalar_lea.vmem [#allocation1], 4
      %3229 = vst [vmem:[%s3228] ss:$9 sm:$0xff] %v3154
      %s3230 = scalar_lea.vmem [#allocation1], 5
      %3231 = vst [vmem:[%s3230] ss:$9 sm:$0xff] %v3155
      %s3232 = scalar_lea.vmem [#allocation1], 6
      %3233 = vst [vmem:[%s3232] ss:$9 sm:$0xff] %v3156
      %s3234 = scalar_lea.vmem [#allocation1], 7
      %3235 = vst [vmem:[%s3234] ss:$9 sm:$0xff] %v3157
      %v3236 = vld [vmem:[#allocation1] sm:$0xff]
      %3237 = vst [vmem:[#allocation1] ss:$9 sm:$0xff] %v3130
      %v3238 = vld [vmem:[#allocation1] sm:$0xff]
      %3239 = vst [vmem:[#allocation1] ss:$9 sm:$0xff] %v3158
      %3240 = vst [vmem:[%s3222] ss:$9 sm:$0xff] %v3159
      %3241 = vst [vmem:[%s3224] ss:$9 sm:$0xff] %v3160
      %3242 = vst [vmem:[%s3226] ss:$9 sm:$0xff] %v3161
      %3243 = vst [vmem:[%s3228] ss:$9 sm:$0xff] %v3162
      %3244 = vst [vmem:[%s3230] ss:$9 sm:$0xff] %v3163
      %3245 = vst [vmem:[%s3232] ss:$9 sm:$0xff] %v3164
      %3246 = vst [vmem:[%s3234] ss:$9 sm:$0xff] %v3131
      %v3247 = vld [vmem:[#allocation1] sm:$0xff]
      %3248 = vst [vmem:[#allocation1] ss:$9 sm:$0xff] %v3165
      %v3249 = vld [vmem:[#allocation1] sm:$0xff]
      %3250 = vst [vmem:[#allocation1] ss:$9 sm:$0xff] %v3166
      %3251 = vst [vmem:[%s3222] ss:$9 sm:$0xff] %v3167
      %3252 = vst [vmem:[%s3224] ss:$9 sm:$0xff] %v3168
      %3253 = vst [vmem:[%s3226] ss:$9 sm:$0xff] %v3169
      %3254 = vst [vmem:[%s3228] ss:$9 sm:$0xff] %v3170
      %3255 = vst [vmem:[%s3230] ss:$9 sm:$0xff] %v3171
      %3256 = vst [vmem:[%s3232] ss:$9 sm:$0xff] %v3132
      %3257 = vst [vmem:[%s3234] ss:$9 sm:$0xff] %v3172
      %v3258 = vld [vmem:[#allocation1] sm:$0xff]
      %3259 = vst [vmem:[#allocation1] ss:$9 sm:$0xff] %v3173
      %v3260 = vld [vmem:[#allocation1] sm:$0xff]
      %3261 = vst [vmem:[#allocation1] ss:$9 sm:$0xff] %v3174
      %3262 = vst [vmem:[%s3222] ss:$9 sm:$0xff] %v3175
      %3263 = vst [vmem:[%s3224] ss:$9 sm:$0xff] %v3176
      %3264 = vst [vmem:[%s3226] ss:$9 sm:$0xff] %v3177
      %3265 = vst [vmem:[%s3228] ss:$9 sm:$0xff] %v3178
      %3266 = vst [vmem:[%s3230] ss:$9 sm:$0xff] %v3133
      %3267 = vst [vmem:[%s3232] ss:$9 sm:$0xff] %v3179
      %3268 = vst [vmem:[%s3234] ss:$9 sm:$0xff] %v3180
      %v3269 = vld [vmem:[#allocation1] sm:$0xff]
      %3270 = vst [vmem:[#allocation1] ss:$9 sm:$0xff] %v3181
      %v3271 = vld [vmem:[#allocation1] sm:$0xff]
      %3272 = vst [vmem:[#allocation1] ss:$9 sm:$0xff] %v3182
      %3273 = vst [vmem:[%s3222] ss:$9 sm:$0xff] %v3183
      %3274 = vst [vmem:[%s3224] ss:$9 sm:$0xff] %v3184
      %3275 = vst [vmem:[%s3226] ss:$9 sm:$0xff] %v3185
      %3276 = vst [vmem:[%s3228] ss:$9 sm:$0xff] %v3134
      %3277 = vst [vmem:[%s3230] ss:$9 sm:$0xff] %v3186
      %3278 = vst [vmem:[%s3232] ss:$9 sm:$0xff] %v3187
      %3279 = vst [vmem:[%s3234] ss:$9 sm:$0xff] %v3188
      %v3280 = vld [vmem:[#allocation1] sm:$0xff]
      %3281 = vst [vmem:[#allocation1] ss:$9 sm:$0xff] %v3189
      %v3282 = vld [vmem:[#allocation1] sm:$0xff]
      %3283 = vst [vmem:[#allocation1] ss:$9 sm:$0xff] %v3190
      %3284 = vst [vmem:[%s3222] ss:$9 sm:$0xff] %v3191
      %3285 = vst [vmem:[%s3224] ss:$9 sm:$0xff] %v3192
      %3286 = vst [vmem:[%s3226] ss:$9 sm:$0xff] %v3135
      %3287 = vst [vmem:[%s3228] ss:$9 sm:$0xff] %v3193
      %3288 = vst [vmem:[%s3230] ss:$9 sm:$0xff] %v3194
      %3289 = vst [vmem:[%s3232] ss:$9 sm:$0xff] %v3195
      %3290 = vst [vmem:[%s3234] ss:$9 sm:$0xff] %v3196
      %v3291 = vld [vmem:[#allocation1] sm:$0xff]
      %3292 = vst [vmem:[#allocation1] ss:$9 sm:$0xff] %v3197
      %v3293 = vld [vmem:[#allocation1] sm:$0xff]
      %3294 = vst [vmem:[#allocation1] ss:$9 sm:$0xff] %v3198
      %3295 = vst [vmem:[%s3222] ss:$9 sm:$0xff] %v3199
      %3296 = vst [vmem:[%s3224] ss:$9 sm:$0xff] %v3136
      %3297 = vst [vmem:[%s3226] ss:$9 sm:$0xff] %v3200
      %3298 = vst [vmem:[%s3228] ss:$9 sm:$0xff] %v3201
      %3299 = vst [vmem:[%s3230] ss:$9 sm:$0xff] %v3202
      %3300 = vst [vmem:[%s3232] ss:$9 sm:$0xff] %v3203
      %3301 = vst [vmem:[%s3234] ss:$9 sm:$0xff] %v3204
      %v3302 = vld [vmem:[#allocation1] sm:$0xff]
      %3303 = vst [vmem:[#allocation1] ss:$9 sm:$0xff] %v3205
      %v3304 = vld [vmem:[#allocation1] sm:$0xff]
      %3305 = vst [vmem:[#allocation1] ss:$9 sm:$0xff] %v3206
      %3306 = vst [vmem:[%s3222] ss:$9 sm:$0xff] %v3137
      %3307 = vst [vmem:[%s3224] ss:$9 sm:$0xff] %v3207
      %3308 = vst [vmem:[%s3226] ss:$9 sm:$0xff] %v3208
      %3309 = vst [vmem:[%s3228] ss:$9 sm:$0xff] %v3209
      %3310 = vst [vmem:[%s3230] ss:$9 sm:$0xff] %v3210
      %3311 = vst [vmem:[%s3232] ss:$9 sm:$0xff] %v3211
      %3312 = vst [vmem:[%s3234] ss:$9 sm:$0xff] %v3212
      %v3313 = vld [vmem:[#allocation1] sm:$0xff]
      %3314 = vst [vmem:[#allocation1] ss:$9 sm:$0xff] %v3213
      %v3315 = vld [vmem:[#allocation1] sm:$0xff]
      %3316 = vst [vmem:[#allocation1] ss:$9 sm:$0xff] %v3138
      %3317 = vst [vmem:[%s3222] ss:$9 sm:$0xff] %v3214
      %3318 = vst [vmem:[%s3224] ss:$9 sm:$0xff] %v3215
      %3319 = vst [vmem:[%s3226] ss:$9 sm:$0xff] %v3216
      %3320 = vst [vmem:[%s3228] ss:$9 sm:$0xff] %v3217
      %3321 = vst [vmem:[%s3230] ss:$9 sm:$0xff] %v3218
      %3322 = vst [vmem:[%s3232] ss:$9 sm:$0xff] %v3219
      %3323 = vst [vmem:[%s3234] ss:$9 sm:$0xff] %v3220
      %v3324 = vld [vmem:[#allocation1] sm:$0xff]
      %3325 = vst [vmem:[#allocation1] ss:$9 sm:$0xff] %v3139
      %v3326 = vld [vmem:[#allocation1] sm:$0xff]
      %v3345 = vpack.c.bf16 %v3236, %v3236
      %v3346 = vpack.c.bf16 %v3238, %v3238
      %v3347 = vpack.c.bf16 %v3247, %v3247
      %v3348 = vpack.c.bf16 %v3249, %v3249
      %v3349 = vpack.c.bf16 %v3258, %v3258
      %v3350 = vpack.c.bf16 %v3260, %v3260
      %v3351 = vpack.c.bf16 %v3269, %v3269
      %v3352 = vpack.c.bf16 %v3271, %v3271
      %v3353 = vpack.c.bf16 %v3280, %v3280
      %v3354 = vpack.c.bf16 %v3282, %v3282
      %v3355 = vpack.c.bf16 %v3291, %v3291
      %v3356 = vpack.c.bf16 %v3293, %v3293
      %v3357 = vpack.c.bf16 %v3302, %v3302
      %v3358 = vpack.c.bf16 %v3304, %v3304
      %v3359 = vpack.c.bf16 %v3313, %v3313
      %v3360 = vpack.c.bf16 %v3315, %v3315
      %v3361 = vpack.c.bf16 %v3324, %v3324
      %v3362 = vpack.c.bf16 %v3326, %v3326
      %s3363 = scalar_lea.vmem [#allocation2], 216
      %3364 = vst [vmem:[%s3363] sm:$0xf] %v3345
      %v3365 = vld [vmem:[%s3363 + $0x4] sm:$0x1]
      %v3366 = vsel %vm1138, %v3346, %v3365
      %3367 = vst [vmem:[%s3363 + $0x4] sm:$0x1] %v3366
      %3368 = vst [vmem:[%s3363 + $0x8] sm:$0xf] %v3347
      %v3369 = vld [vmem:[%s3363 + $0xc] sm:$0x1]
      %v3370 = vsel %vm1138, %v3348, %v3369
      %3371 = vst [vmem:[%s3363 + $0xc] sm:$0x1] %v3370
      %3372 = vst [vmem:[%s3363 + $0x10] sm:$0xf] %v3349
      %v3373 = vld [vmem:[%s3363 + $0x14] sm:$0x1]
      %v3374 = vsel %vm1138, %v3350, %v3373
      %3375 = vst [vmem:[%s3363 + $0x14] sm:$0x1] %v3374
      %3376 = vst [vmem:[%s3363 + $0x18] sm:$0xf] %v3351
      %v3377 = vld [vmem:[%s3363 + $0x1c] sm:$0x1]
      %v3378 = vsel %vm1138, %v3352, %v3377
      %3379 = vst [vmem:[%s3363 + $0x1c] sm:$0x1] %v3378
      %3380 = vst [vmem:[%s3363 + $0x20] sm:$0xf] %v3353
      %v3381 = vld [vmem:[%s3363 + $0x24] sm:$0x1]
      %v3382 = vsel %vm1138, %v3354, %v3381
      %3383 = vst [vmem:[%s3363 + $0x24] sm:$0x1] %v3382
      %3384 = vst [vmem:[%s3363 + $0x28] sm:$0xf] %v3355
      %v3385 = vld [vmem:[%s3363 + $0x2c] sm:$0x1]
      %v3386 = vsel %vm1138, %v3356, %v3385
      %3387 = vst [vmem:[%s3363 + $0x2c] sm:$0x1] %v3386
      %3388 = vst [vmem:[%s3363 + $0x30] sm:$0xf] %v3357
      %v3389 = vld [vmem:[%s3363 + $0x34] sm:$0x1]
      %v3390 = vsel %vm1138, %v3358, %v3389
      %3391 = vst [vmem:[%s3363 + $0x34] sm:$0x1] %v3390
      %3392 = vst [vmem:[%s3363 + $0x38] sm:$0xf] %v3359
      %v3393 = vld [vmem:[%s3363 + $0x3c] sm:$0x1]
      %v3394 = vsel %vm1138, %v3360, %v3393
      %3395 = vst [vmem:[%s3363 + $0x3c] sm:$0x1] %v3394
      %3396 = vst [vmem:[%s3363 + $0x40] sm:$0xf] %v3361
      %v3397 = vld [vmem:[%s3363 + $0x44] sm:$0x1]
      %v3398 = vsel %vm1138, %v3362, %v3397
      %3399 = vst [vmem:[%s3363 + $0x44] sm:$0x1] %v3398
      %v3400 = vld [vmem:[#allocation2] sm:$0x1]
      %v3401 = vsel %vm1138, 0, %v3400
      %3402 = vst [vmem:[#allocation2] sm:$0x1] %v3401
      %v3403 = vld [vmem:[#allocation2 + $0x8] sm:$0x1]
      %v3404 = vsel %vm1138, 0, %v3403
      %3405 = vst [vmem:[#allocation2 + $0x8] sm:$0x1] %v3404
      %v3406 = vld [vmem:[#allocation2 + $0x10] sm:$0x1]
      %v3407 = vsel %vm1138, 0, %v3406
      %3408 = vst [vmem:[#allocation2 + $0x10] sm:$0x1] %v3407
      %v3409 = vld [vmem:[#allocation2 + $0x18] sm:$0x1]
      %v3410 = vsel %vm1138, 0, %v3409
      %3411 = vst [vmem:[#allocation2 + $0x18] sm:$0x1] %v3410
      %v3412 = vld [vmem:[#allocation2 + $0x20] sm:$0x1]
      %v3413 = vsel %vm1138, 0, %v3412
      %3414 = vst [vmem:[#allocation2 + $0x20] sm:$0x1] %v3413
      %v3415 = vld [vmem:[#allocation2 + $0x28] sm:$0x1]
      %v3416 = vsel %vm1138, 0, %v3415
      %3417 = vst [vmem:[#allocation2 + $0x28] sm:$0x1] %v3416
      %v3418 = vld [vmem:[#allocation2 + $0x30] sm:$0x1]
      %v3419 = vsel %vm1138, 0, %v3418
      %3420 = vst [vmem:[#allocation2 + $0x30] sm:$0x1] %v3419
      %v3421 = vld [vmem:[#allocation2 + $0x38] sm:$0x1]
      %v3422 = vsel %vm1138, 0, %v3421
      %3423 = vst [vmem:[#allocation2 + $0x38] sm:$0x1] %v3422
      %v3424 = vld [vmem:[#allocation2 + $0x40] sm:$0x1]
      %v3425 = vsel %vm1138, 0, %v3424
      %3426 = vst [vmem:[#allocation2 + $0x40] sm:$0x1] %v3425
      %v3427 = vld [vmem:[%s1879 + $0x4] sm:$0x1]
      %v3428 = vsel %vm1138, 0, %v3427
      %3429 = vst [vmem:[%s1879 + $0x4] sm:$0x1] %v3428
      %v3430 = vld [vmem:[%s1879 + $0xc] sm:$0x1]
      %v3431 = vsel %vm1138, 0, %v3430
      %3432 = vst [vmem:[%s1879 + $0xc] sm:$0x1] %v3431
      %v3433 = vld [vmem:[%s1879 + $0x14] sm:$0x1]
      %v3434 = vsel %vm1138, 0, %v3433
      %3435 = vst [vmem:[%s1879 + $0x14] sm:$0x1] %v3434
      %v3436 = vld [vmem:[%s1879 + $0x1c] sm:$0x1]
      %v3437 = vsel %vm1138, 0, %v3436
      %3438 = vst [vmem:[%s1879 + $0x1c] sm:$0x1] %v3437
      %v3439 = vld [vmem:[%s1879 + $0x24] sm:$0x1]
      %v3440 = vsel %vm1138, 0, %v3439
      %3441 = vst [vmem:[%s1879 + $0x24] sm:$0x1] %v3440
      %v3442 = vld [vmem:[%s1879 + $0x2c] sm:$0x1]
      %v3443 = vsel %vm1138, 0, %v3442
      %3444 = vst [vmem:[%s1879 + $0x2c] sm:$0x1] %v3443
      %v3445 = vld [vmem:[%s1879 + $0x34] sm:$0x1]
      %v3446 = vsel %vm1138, 0, %v3445
      %3447 = vst [vmem:[%s1879 + $0x34] sm:$0x1] %v3446
      %v3448 = vld [vmem:[%s1879 + $0x3c] sm:$0x1]
      %v3449 = vsel %vm1138, 0, %v3448
      %3450 = vst [vmem:[%s1879 + $0x3c] sm:$0x1] %v3449
      %v3451 = vld [vmem:[%s1879 + $0x44] sm:$0x1]
      %v3452 = vsel %vm1138, 0, %v3451
      %3453 = vst [vmem:[%s1879 + $0x44] sm:$0x1] %v3452
      %v3454 = vld [vmem:[%s2621] sm:$0x1]
      %v3455 = vsel %vm1138, 0, %v3454
      %3456 = vst [vmem:[%s2621] sm:$0x1] %v3455
      %v3457 = vld [vmem:[%s2621 + $0x8] sm:$0x1]
      %v3458 = vsel %vm1138, 0, %v3457
      %3459 = vst [vmem:[%s2621 + $0x8] sm:$0x1] %v3458
      %v3460 = vld [vmem:[%s2621 + $0x10] sm:$0x1]
      %v3461 = vsel %vm1138, 0, %v3460
      %3462 = vst [vmem:[%s2621 + $0x10] sm:$0x1] %v3461
      %v3463 = vld [vmem:[%s2621 + $0x18] sm:$0x1]
      %v3464 = vsel %vm1138, 0, %v3463
      %3465 = vst [vmem:[%s2621 + $0x18] sm:$0x1] %v3464
      %v3466 = vld [vmem:[%s2621 + $0x20] sm:$0x1]
      %v3467 = vsel %vm1138, 0, %v3466
      %3468 = vst [vmem:[%s2621 + $0x20] sm:$0x1] %v3467
      %v3469 = vld [vmem:[%s2621 + $0x28] sm:$0x1]
      %v3470 = vsel %vm1138, 0, %v3469
      %3471 = vst [vmem:[%s2621 + $0x28] sm:$0x1] %v3470
      %v3472 = vld [vmem:[%s2621 + $0x30] sm:$0x1]
      %v3473 = vsel %vm1138, 0, %v3472
      %3474 = vst [vmem:[%s2621 + $0x30] sm:$0x1] %v3473
      %v3475 = vld [vmem:[%s2621 + $0x38] sm:$0x1]
      %v3476 = vsel %vm1138, 0, %v3475
      %3477 = vst [vmem:[%s2621 + $0x38] sm:$0x1] %v3476
      %v3478 = vld [vmem:[%s2621 + $0x40] sm:$0x1]
      %v3479 = vsel %vm1138, 0, %v3478
      %3480 = vst [vmem:[%s2621 + $0x40] sm:$0x1] %v3479
      %v3481 = vld [vmem:[%s3363 + $0x4] sm:$0x1]
      %v3482 = vsel %vm1138, 0, %v3481
      %3483 = vst [vmem:[%s3363 + $0x4] sm:$0x1] %v3482
      %v3484 = vld [vmem:[%s3363 + $0xc] sm:$0x1]
      %v3485 = vsel %vm1138, 0, %v3484
      %3486 = vst [vmem:[%s3363 + $0xc] sm:$0x1] %v3485
      %v3487 = vld [vmem:[%s3363 + $0x14] sm:$0x1]
      %v3488 = vsel %vm1138, 0, %v3487
      %3489 = vst [vmem:[%s3363 + $0x14] sm:$0x1] %v3488
      %v3490 = vld [vmem:[%s3363 + $0x1c] sm:$0x1]
      %v3491 = vsel %vm1138, 0, %v3490
      %3492 = vst [vmem:[%s3363 + $0x1c] sm:$0x1] %v3491
      %v3493 = vld [vmem:[%s3363 + $0x24] sm:$0x1]
      %v3494 = vsel %vm1138, 0, %v3493
      %3495 = vst [vmem:[%s3363 + $0x24] sm:$0x1] %v3494
      %v3496 = vld [vmem:[%s3363 + $0x2c] sm:$0x1]
      %v3497 = vsel %vm1138, 0, %v3496
      %3498 = vst [vmem:[%s3363 + $0x2c] sm:$0x1] %v3497
      %v3499 = vld [vmem:[%s3363 + $0x34] sm:$0x1]
      %v3500 = vsel %vm1138, 0, %v3499
      %3501 = vst [vmem:[%s3363 + $0x34] sm:$0x1] %v3500
      %v3502 = vld [vmem:[%s3363 + $0x3c] sm:$0x1]
      %v3503 = vsel %vm1138, 0, %v3502
      %3504 = vst [vmem:[%s3363 + $0x3c] sm:$0x1] %v3503
      %v3505 = vld [vmem:[%s3363 + $0x44] sm:$0x1]
      %v3506 = vsel %vm1138, 0, %v3505
      %3507 = vst [vmem:[%s3363 + $0x44] sm:$0x1] %v3506
      %p3508 = scmp.eq.s32.totalorder %s25, 0
      // Predicated region
      $region57: #{_bottleneck_forward_impl.1} parent=55 // pred_check
        %p3509 = pneg %p3508
      $region58: #{_bottleneck_forward_impl.1} parent=55 // pred_check_branch
        %3511 = sbr.rel (%p3509) target = $region60
      $region59: #{_bottleneck_forward_impl.1} parent=55 // pred_region
        %3512 = vst [vmem:[#allocation2] sm:$0xf] 0
        %v3513 = vld [vmem:[#allocation2 + $0x4] sm:$0x1]
        %v3514 = vsel %vm1138, 0, %v3513
        %3515 = vst [vmem:[#allocation2 + $0x4] sm:$0x1] %v3514
        %3516 = vst [vmem:[%s1879] sm:$0xf] 0
        %v3517 = vld [vmem:[%s1879 + $0x4] sm:$0x1]
        %v3518 = vsel %vm1138, 0, %v3517
        %3519 = vst [vmem:[%s1879 + $0x4] sm:$0x1] %v3518
        %s3520 = scalar_lea.vmem [#allocation2], 208
        %3521 = vst [vmem:[%s3520] sm:$0xf] 0
        %v3522 = vld [vmem:[%s3520 + $0x4] sm:$0x1]
        %v3523 = vsel %vm1138, 0, %v3522
        %3524 = vst [vmem:[%s3520 + $0x4] sm:$0x1] %v3523
        %s3525 = scalar_lea.vmem [#allocation2], 280
        %3526 = vst [vmem:[%s3525] sm:$0xf] 0
        %v3527 = vld [vmem:[%s3525 + $0x4] sm:$0x1]
        %v3528 = vsel %vm1138, 0, %v3527
        %3529 = vst [vmem:[%s3525 + $0x4] sm:$0x1] %v3528
      $region60: #{_bottleneck_forward_impl.1} parent=55 // pred_fallthru
        _
      %v3530 = vld [vmem:[#allocation2] sm:$0xf]
      %v3531 = vld [vmem:[#allocation2 + $0x8] sm:$0xf]
      %v3532 = vld [vmem:[#allocation2 + $0x10] sm:$0xf]
      %v3533 = vld [vmem:[#allocation2 + $0x18] sm:$0xf]
      %v3534 = vld [vmem:[#allocation2 + $0x20] sm:$0xf]
      %v3535 = vld [vmem:[#allocation2 + $0x28] sm:$0xf]
      %v3536 = vld [vmem:[#allocation2 + $0x30] sm:$0xf]
      %v3537 = vld [vmem:[#allocation2 + $0x38] sm:$0xf]
      %v3538 = vld [vmem:[%s3] sm:$0xf]
      %v3539 = vld [vmem:[%s3 + $0x4] sm:$0xf]
      %v3540 = vld [vmem:[%s3 + $0x8] sm:$0xf]
      %v3541 = vld [vmem:[%s3 + $0xc] sm:$0xf]
      %v3542 = vld [vmem:[%s3 + $0x10] sm:$0xf]
      %v3543 = vld [vmem:[%s3 + $0x14] sm:$0xf]
      %v3544 = vld [vmem:[%s3 + $0x18] sm:$0xf]
      %v3545 = vld [vmem:[%s3 + $0x1c] sm:$0xf]
      %v3546 = vld [vmem:[%s3 + $0x20] sm:$0xf]
      %v3547 = vld [vmem:[%s3 + $0x24] sm:$0xf]
      %v3548 = vld [vmem:[%s3 + $0x28] sm:$0xf]
      %v3549 = vld [vmem:[%s3 + $0x2c] sm:$0xf]
      %v3550 = vld [vmem:[%s3 + $0x30] sm:$0xf]
      %v3551 = vld [vmem:[%s3 + $0x34] sm:$0xf]
      %v3552 = vld [vmem:[%s3 + $0x38] sm:$0xf]
      %v3553 = vld [vmem:[%s3 + $0x3c] sm:$0xf]
      %v3554 = vld [vmem:[%s1879] sm:$0xf]
      %v3555 = vld [vmem:[%s1879 + $0x8] sm:$0xf]
      %v3556 = vld [vmem:[%s1879 + $0x10] sm:$0xf]
      %v3557 = vld [vmem:[%s1879 + $0x18] sm:$0xf]
      %v3558 = vld [vmem:[%s1879 + $0x20] sm:$0xf]
      %v3559 = vld [vmem:[%s1879 + $0x28] sm:$0xf]
      %v3560 = vld [vmem:[%s1879 + $0x30] sm:$0xf]
      %v3561 = vld [vmem:[%s1879 + $0x38] sm:$0xf]
      %s3562 = scalar_lea.vmem %s3, 64
      %v3563 = vld [vmem:[%s3562] sm:$0xf]
      %v3564 = vld [vmem:[%s3562 + $0x4] sm:$0xf]
      %v3565 = vld [vmem:[%s3562 + $0x8] sm:$0xf]
      %v3566 = vld [vmem:[%s3562 + $0xc] sm:$0xf]
      %v3567 = vld [vmem:[%s3562 + $0x10] sm:$0xf]
      %v3568 = vld [vmem:[%s3562 + $0x14] sm:$0xf]
      %v3569 = vld [vmem:[%s3562 + $0x18] sm:$0xf]
      %v3570 = vld [vmem:[%s3562 + $0x1c] sm:$0xf]
      %v3571 = vld [vmem:[%s3562 + $0x20] sm:$0xf]
      %v3572 = vld [vmem:[%s3562 + $0x24] sm:$0xf]
      %v3573 = vld [vmem:[%s3562 + $0x28] sm:$0xf]
      %v3574 = vld [vmem:[%s3562 + $0x2c] sm:$0xf]
      %v3575 = vld [vmem:[%s3562 + $0x30] sm:$0xf]
      %v3576 = vld [vmem:[%s3562 + $0x34] sm:$0xf]
      %v3577 = vld [vmem:[%s3562 + $0x38] sm:$0xf]
      %v3578 = vld [vmem:[%s3562 + $0x3c] sm:$0xf]
      %v3587 = vunpack.c.l.b16 %v3554
      %v3588 = vunpack.c.l.b16 %v3555
      %v3589 = vunpack.c.l.b16 %v3556
      %v3590 = vunpack.c.l.b16 %v3557
      %v3591 = vunpack.c.l.b16 %v3558
      %v3592 = vunpack.c.l.b16 %v3559
      %v3593 = vunpack.c.l.b16 %v3560
      %v3594 = vunpack.c.l.b16 %v3561
      %v3595 = vpack.c.b16 %v3588, %v3587
      %v3596 = vpack.c.b16 %v3590, %v3589
      %v3597 = vpack.c.b16 %v3592, %v3591
      %v3598 = vpack.c.b16 %v3594, %v3593
      %v3619 = vunpack.c.l.b16 %v3563
      %v3620 = vunpack.c.l.b16 %v3564
      %v3621 = vunpack.c.l.b16 %v3565
      %v3622 = vunpack.c.l.b16 %v3566
      %v3623 = vunpack.c.l.b16 %v3567
      %v3624 = vunpack.c.l.b16 %v3568
      %v3625 = vunpack.c.l.b16 %v3569
      %v3626 = vunpack.c.l.b16 %v3570
      %v3627 = vunpack.c.l.b16 %v3571
      %v3628 = vunpack.c.l.b16 %v3572
      %v3629 = vunpack.c.l.b16 %v3573
      %v3630 = vunpack.c.l.b16 %v3574
      %v3631 = vunpack.c.l.b16 %v3575
      %v3632 = vunpack.c.l.b16 %v3576
      %v3633 = vunpack.c.l.b16 %v3577
      %v3634 = vunpack.c.l.b16 %v3578
      %v3635 = vpack.c.b16 %v3620, %v3619
      %v3636 = vpack.c.b16 %v3622, %v3621
      %v3637 = vpack.c.b16 %v3624, %v3623
      %v3638 = vpack.c.b16 %v3626, %v3625
      %v3639 = vpack.c.b16 %v3628, %v3627
      %v3640 = vpack.c.b16 %v3630, %v3629
      %v3641 = vpack.c.b16 %v3632, %v3631
      %v3642 = vpack.c.b16 %v3634, %v3633
      %3651 = vmatpush.bf16.msra.mxu0 %v3642
      %3652 = vmatpush.bf16.msra.mxu0 %v3641
      %3653 = vmatpush.bf16.msra.mxu0 %v3640
      %3654 = vmatpush.bf16.msra.mxu0 %v3639
      %3655 = vmatpush.bf16.msra.mxu0 %v3638
      %3656 = vmatpush.bf16.msra.mxu0 %v3637
      %3657 = vmatpush.bf16.msra.mxu0 %v3636
      %3658 = vmatpush.bf16.msra.mxu0 %v3635
      %3659 = vmatmul.bf16.gmra.mxu0 %v3595
      %v3660 = vpop.f32.mrf.mxu0
      %v3661 = vadd.f32 0.0, %v3660
      %v3662 = vpop.f32.mrf.mxu0
      %v3663 = vadd.f32 0.0, %v3662
      %3664 = vmatmul.bf16.gmra.mxu0 %v3596
      %v3665 = vpop.f32.mrf.mxu0
      %v3666 = vadd.f32 0.0, %v3665
      %v3667 = vpop.f32.mrf.mxu0
      %v3668 = vadd.f32 0.0, %v3667
      %3669 = vmatmul.bf16.gmra.mxu0 %v3597
      %v3670 = vpop.f32.mrf.mxu0
      %v3671 = vadd.f32 0.0, %v3670
      %v3672 = vpop.f32.mrf.mxu0
      %v3673 = vadd.f32 0.0, %v3672
      %3674 = vmatmul.bf16.gmra.mxu0 %v3598
      %v3675 = vpop.f32.mrf.mxu0
      %v3676 = vadd.f32 0.0, %v3675
      %v3677 = vpop.f32.mrf.mxu0
      %v3678 = vadd.f32 0.0, %v3677
      %3679 = vdwg.mxu0
      %v3688 = vunpack.c.l.b16 %v3530
      %v3689 = vunpack.c.l.b16 %v3531
      %v3690 = vunpack.c.l.b16 %v3532
      %v3691 = vunpack.c.l.b16 %v3533
      %v3692 = vunpack.c.l.b16 %v3534
      %v3693 = vunpack.c.l.b16 %v3535
      %v3694 = vunpack.c.l.b16 %v3536
      %v3695 = vunpack.c.l.b16 %v3537
      %v3696 = vpack.c.b16 %v3689, %v3688
      %v3697 = vpack.c.b16 %v3691, %v3690
      %v3698 = vpack.c.b16 %v3693, %v3692
      %v3699 = vpack.c.b16 %v3695, %v3694
      %v3720 = vunpack.c.l.b16 %v3538
      %v3721 = vunpack.c.l.b16 %v3539
      %v3722 = vunpack.c.l.b16 %v3540
      %v3723 = vunpack.c.l.b16 %v3541
      %v3724 = vunpack.c.l.b16 %v3542
      %v3725 = vunpack.c.l.b16 %v3543
      %v3726 = vunpack.c.l.b16 %v3544
      %v3727 = vunpack.c.l.b16 %v3545
      %v3728 = vunpack.c.l.b16 %v3546
      %v3729 = vunpack.c.l.b16 %v3547
      %v3730 = vunpack.c.l.b16 %v3548
      %v3731 = vunpack.c.l.b16 %v3549
      %v3732 = vunpack.c.l.b16 %v3550
      %v3733 = vunpack.c.l.b16 %v3551
      %v3734 = vunpack.c.l.b16 %v3552
      %v3735 = vunpack.c.l.b16 %v3553
      %v3736 = vpack.c.b16 %v3721, %v3720
      %v3737 = vpack.c.b16 %v3723, %v3722
      %v3738 = vpack.c.b16 %v3725, %v3724
      %v3739 = vpack.c.b16 %v3727, %v3726
      %v3740 = vpack.c.b16 %v3729, %v3728
      %v3741 = vpack.c.b16 %v3731, %v3730
      %v3742 = vpack.c.b16 %v3733, %v3732
      %v3743 = vpack.c.b16 %v3735, %v3734
      %3752 = vmatpush.bf16.msra.mxu0 %v3743
      %3753 = vmatpush.bf16.msra.mxu0 %v3742
      %3754 = vmatpush.bf16.msra.mxu0 %v3741
      %3755 = vmatpush.bf16.msra.mxu0 %v3740
      %3756 = vmatpush.bf16.msra.mxu0 %v3739
      %3757 = vmatpush.bf16.msra.mxu0 %v3738
      %3758 = vmatpush.bf16.msra.mxu0 %v3737
      %3759 = vmatpush.bf16.msra.mxu0 %v3736
      %3760 = vmatmul.bf16.gmra.mxu0 %v3696
      %v3761 = vpop.f32.mrf.mxu0
      %v3762 = vadd.f32 %v3661, %v3761
      %v3763 = vpop.f32.mrf.mxu0
      %v3764 = vadd.f32 %v3663, %v3763
      %3765 = vmatmul.bf16.gmra.mxu0 %v3697
      %v3766 = vpop.f32.mrf.mxu0
      %v3767 = vadd.f32 %v3666, %v3766
      %v3768 = vpop.f32.mrf.mxu0
      %v3769 = vadd.f32 %v3668, %v3768
      %3770 = vmatmul.bf16.gmra.mxu0 %v3698
      %v3771 = vpop.f32.mrf.mxu0
      %v3772 = vadd.f32 %v3671, %v3771
      %v3773 = vpop.f32.mrf.mxu0
      %v3774 = vadd.f32 %v3673, %v3773
      %3775 = vmatmul.bf16.gmra.mxu0 %v3699
      %v3776 = vpop.f32.mrf.mxu0
      %v3777 = vadd.f32 %v3676, %v3776
      %v3778 = vpop.f32.mrf.mxu0
      %v3779 = vadd.f32 %v3678, %v3778
      %3780 = vdwg.mxu0
      %v3781 = vld [vmem:[#allocation2] sm:$0xf]
      %v3782 = vld [vmem:[#allocation2 + $0x4] sm:$0x1]
      %v3783 = vld [vmem:[#allocation2 + $0x8] sm:$0xf]
      %v3784 = vld [vmem:[#allocation2 + $0xc] sm:$0x1]
      %v3785 = vld [vmem:[#allocation2 + $0x10] sm:$0xf]
      %v3786 = vld [vmem:[#allocation2 + $0x14] sm:$0x1]
      %v3787 = vld [vmem:[#allocation2 + $0x18] sm:$0xf]
      %v3788 = vld [vmem:[#allocation2 + $0x1c] sm:$0x1]
      %v3789 = vld [vmem:[#allocation2 + $0x20] sm:$0xf]
      %v3790 = vld [vmem:[#allocation2 + $0x24] sm:$0x1]
      %v3791 = vld [vmem:[#allocation2 + $0x28] sm:$0xf]
      %v3792 = vld [vmem:[#allocation2 + $0x2c] sm:$0x1]
      %v3793 = vld [vmem:[#allocation2 + $0x30] sm:$0xf]
      %v3794 = vld [vmem:[#allocation2 + $0x34] sm:$0x1]
      %v3795 = vld [vmem:[#allocation2 + $0x38] sm:$0xf]
      %v3796 = vld [vmem:[#allocation2 + $0x3c] sm:$0x1]
      %vm3797 = vsmask.f32 3328
      %vm3798 = vsmask.f32 7440
      %vm3799 = vmor %vm3797, %vm3798
      %v3801 = vshrl.u32 %v3781, 16
      %v3803 = vrot.slane %v3801, 4
      %v3804 = vshll.u32 %v3781, 16
      %v3806 = vrot.slane %v3804, 5
      %v3807 = vor.u32 %v3803, %v3806
      %v3808 = vrot.slane %v3807, 4
      %v3810 = vshll.u32 %v3782, 16
      %v3812 = vrot.slane %v3810, 5
      %v3813 = vsel %vm3799, %v3808, %v3812
      %v3815 = vshrl.u32 %v3783, 16
      %v3817 = vrot.slane %v3815, 4
      %v3818 = vshll.u32 %v3783, 16
      %v3820 = vrot.slane %v3818, 5
      %v3821 = vor.u32 %v3817, %v3820
      %v3822 = vrot.slane %v3821, 4
      %v3824 = vshll.u32 %v3784, 16
      %v3826 = vrot.slane %v3824, 5
      %v3827 = vsel %vm3799, %v3822, %v3826
      %v3829 = vshrl.u32 %v3785, 16
      %v3831 = vrot.slane %v3829, 4
      %v3832 = vshll.u32 %v3785, 16
      %v3834 = vrot.slane %v3832, 5
      %v3835 = vor.u32 %v3831, %v3834
      %v3836 = vrot.slane %v3835, 4
      %v3838 = vshll.u32 %v3786, 16
      %v3840 = vrot.slane %v3838, 5
      %v3841 = vsel %vm3799, %v3836, %v3840
      %v3843 = vshrl.u32 %v3787, 16
      %v3845 = vrot.slane %v3843, 4
      %v3846 = vshll.u32 %v3787, 16
      %v3848 = vrot.slane %v3846, 5
      %v3849 = vor.u32 %v3845, %v3848
      %v3850 = vrot.slane %v3849, 4
      %v3852 = vshll.u32 %v3788, 16
      %v3854 = vrot.slane %v3852, 5
      %v3855 = vsel %vm3799, %v3850, %v3854
      %v3857 = vshrl.u32 %v3789, 16
      %v3859 = vrot.slane %v3857, 4
      %v3860 = vshll.u32 %v3789, 16
      %v3862 = vrot.slane %v3860, 5
      %v3863 = vor.u32 %v3859, %v3862
      %v3864 = vrot.slane %v3863, 4
      %v3866 = vshll.u32 %v3790, 16
      %v3868 = vrot.slane %v3866, 5
      %v3869 = vsel %vm3799, %v3864, %v3868
      %v3871 = vshrl.u32 %v3791, 16
      %v3873 = vrot.slane %v3871, 4
      %v3874 = vshll.u32 %v3791, 16
      %v3876 = vrot.slane %v3874, 5
      %v3877 = vor.u32 %v3873, %v3876
      %v3878 = vrot.slane %v3877, 4
      %v3880 = vshll.u32 %v3792, 16
      %v3882 = vrot.slane %v3880, 5
      %v3883 = vsel %vm3799, %v3878, %v3882
      %v3885 = vshrl.u32 %v3793, 16
      %v3887 = vrot.slane %v3885, 4
      %v3888 = vshll.u32 %v3793, 16
      %v3890 = vrot.slane %v3888, 5
      %v3891 = vor.u32 %v3887, %v3890
      %v3892 = vrot.slane %v3891, 4
      %v3894 = vshll.u32 %v3794, 16
      %v3896 = vrot.slane %v3894, 5
      %v3897 = vsel %vm3799, %v3892, %v3896
      %v3899 = vshrl.u32 %v3795, 16
      %v3901 = vrot.slane %v3899, 4
      %v3902 = vshll.u32 %v3795, 16
      %v3904 = vrot.slane %v3902, 5
      %v3905 = vor.u32 %v3901, %v3904
      %v3906 = vrot.slane %v3905, 4
      %v3908 = vshll.u32 %v3796, 16
      %v3910 = vrot.slane %v3908, 5
      %v3911 = vsel %vm3799, %v3906, %v3910
      %s3912 = scalar_lea.vmem %s3, 128
      %v3913 = vld [vmem:[%s3912] sm:$0xf]
      %v3914 = vld [vmem:[%s3912 + $0x4] sm:$0xf]
      %v3915 = vld [vmem:[%s3912 + $0x8] sm:$0xf]
      %v3916 = vld [vmem:[%s3912 + $0xc] sm:$0xf]
      %v3917 = vld [vmem:[%s3912 + $0x10] sm:$0xf]
      %v3918 = vld [vmem:[%s3912 + $0x14] sm:$0xf]
      %v3919 = vld [vmem:[%s3912 + $0x18] sm:$0xf]
      %v3920 = vld [vmem:[%s3912 + $0x1c] sm:$0xf]
      %v3921 = vld [vmem:[%s3912 + $0x20] sm:$0xf]
      %v3922 = vld [vmem:[%s3912 + $0x24] sm:$0xf]
      %v3923 = vld [vmem:[%s3912 + $0x28] sm:$0xf]
      %v3924 = vld [vmem:[%s3912 + $0x2c] sm:$0xf]
      %v3925 = vld [vmem:[%s3912 + $0x30] sm:$0xf]
      %v3926 = vld [vmem:[%s3912 + $0x34] sm:$0xf]
      %v3927 = vld [vmem:[%s3912 + $0x38] sm:$0xf]
      %v3928 = vld [vmem:[%s3912 + $0x3c] sm:$0xf]
      %v3929 = vunpack.c.l.b16 %v3813
      %v3930 = vunpack.c.l.b16 %v3827
      %v3931 = vunpack.c.l.b16 %v3841
      %v3932 = vunpack.c.l.b16 %v3855
      %v3933 = vunpack.c.l.b16 %v3869
      %v3934 = vunpack.c.l.b16 %v3883
      %v3935 = vunpack.c.l.b16 %v3897
      %v3936 = vunpack.c.l.b16 %v3911
      %v3937 = vpack.c.b16 %v3930, %v3929
      %v3938 = vpack.c.b16 %v3932, %v3931
      %v3939 = vpack.c.b16 %v3934, %v3933
      %v3940 = vpack.c.b16 %v3936, %v3935
      %v3961 = vunpack.c.l.b16 %v3913
      %v3962 = vunpack.c.l.b16 %v3914
      %v3963 = vunpack.c.l.b16 %v3915
      %v3964 = vunpack.c.l.b16 %v3916
      %v3965 = vunpack.c.l.b16 %v3917
      %v3966 = vunpack.c.l.b16 %v3918
      %v3967 = vunpack.c.l.b16 %v3919
      %v3968 = vunpack.c.l.b16 %v3920
      %v3969 = vunpack.c.l.b16 %v3921
      %v3970 = vunpack.c.l.b16 %v3922
      %v3971 = vunpack.c.l.b16 %v3923
      %v3972 = vunpack.c.l.b16 %v3924
      %v3973 = vunpack.c.l.b16 %v3925
      %v3974 = vunpack.c.l.b16 %v3926
      %v3975 = vunpack.c.l.b16 %v3927
      %v3976 = vunpack.c.l.b16 %v3928
      %v3977 = vpack.c.b16 %v3962, %v3961
      %v3978 = vpack.c.b16 %v3964, %v3963
      %v3979 = vpack.c.b16 %v3966, %v3965
      %v3980 = vpack.c.b16 %v3968, %v3967
      %v3981 = vpack.c.b16 %v3970, %v3969
      %v3982 = vpack.c.b16 %v3972, %v3971
      %v3983 = vpack.c.b16 %v3974, %v3973
      %v3984 = vpack.c.b16 %v3976, %v3975
      %3993 = vmatpush.bf16.msra.mxu0 %v3984
      %3994 = vmatpush.bf16.msra.mxu0 %v3983
      %3995 = vmatpush.bf16.msra.mxu0 %v3982
      %3996 = vmatpush.bf16.msra.mxu0 %v3981
      %3997 = vmatpush.bf16.msra.mxu0 %v3980
      %3998 = vmatpush.bf16.msra.mxu0 %v3979
      %3999 = vmatpush.bf16.msra.mxu0 %v3978
      %4000 = vmatpush.bf16.msra.mxu0 %v3977
      %4001 = vmatmul.bf16.gmra.mxu0 %v3937
      %v4002 = vpop.f32.mrf.mxu0
      %v4003 = vadd.f32 0.0, %v4002
      %v4004 = vpop.f32.mrf.mxu0
      %v4005 = vadd.f32 0.0, %v4004
      %4006 = vmatmul.bf16.gmra.mxu0 %v3938
      %v4007 = vpop.f32.mrf.mxu0
      %v4008 = vadd.f32 0.0, %v4007
      %v4009 = vpop.f32.mrf.mxu0
      %v4010 = vadd.f32 0.0, %v4009
      %4011 = vmatmul.bf16.gmra.mxu0 %v3939
      %v4012 = vpop.f32.mrf.mxu0
      %v4013 = vadd.f32 0.0, %v4012
      %v4014 = vpop.f32.mrf.mxu0
      %v4015 = vadd.f32 0.0, %v4014
      %4016 = vmatmul.bf16.gmra.mxu0 %v3940
      %v4017 = vpop.f32.mrf.mxu0
      %v4018 = vadd.f32 0.0, %v4017
      %v4019 = vpop.f32.mrf.mxu0
      %v4020 = vadd.f32 0.0, %v4019
      %4021 = vdwg.mxu0
      %v4022 = vadd.f32 %v3762, %v4003
      %v4023 = vadd.f32 %v3764, %v4005
      %v4024 = vadd.f32 %v3767, %v4008
      %v4025 = vadd.f32 %v3769, %v4010
      %v4026 = vadd.f32 %v3772, %v4013
      %v4027 = vadd.f32 %v3774, %v4015
      %v4028 = vadd.f32 %v3777, %v4018
      %v4029 = vadd.f32 %v3779, %v4020
      %v4030 = vld [vmem:[%s2621] sm:$0xf]
      %v4031 = vld [vmem:[%s2621 + $0x8] sm:$0xf]
      %v4032 = vld [vmem:[%s2621 + $0x10] sm:$0xf]
      %v4033 = vld [vmem:[%s2621 + $0x18] sm:$0xf]
      %v4034 = vld [vmem:[%s2621 + $0x20] sm:$0xf]
      %v4035 = vld [vmem:[%s2621 + $0x28] sm:$0xf]
      %v4036 = vld [vmem:[%s2621 + $0x30] sm:$0xf]
      %v4037 = vld [vmem:[%s2621 + $0x38] sm:$0xf]
      %s4038 = scalar_lea.vmem %s3, 192
      %v4039 = vld [vmem:[%s4038] sm:$0xf]
      %v4040 = vld [vmem:[%s4038 + $0x4] sm:$0xf]
      %v4041 = vld [vmem:[%s4038 + $0x8] sm:$0xf]
      %v4042 = vld [vmem:[%s4038 + $0xc] sm:$0xf]
      %v4043 = vld [vmem:[%s4038 + $0x10] sm:$0xf]
      %v4044 = vld [vmem:[%s4038 + $0x14] sm:$0xf]
      %v4045 = vld [vmem:[%s4038 + $0x18] sm:$0xf]
      %v4046 = vld [vmem:[%s4038 + $0x1c] sm:$0xf]
      %v4047 = vld [vmem:[%s4038 + $0x20] sm:$0xf]
      %v4048 = vld [vmem:[%s4038 + $0x24] sm:$0xf]
      %v4049 = vld [vmem:[%s4038 + $0x28] sm:$0xf]
      %v4050 = vld [vmem:[%s4038 + $0x2c] sm:$0xf]
      %v4051 = vld [vmem:[%s4038 + $0x30] sm:$0xf]
      %v4052 = vld [vmem:[%s4038 + $0x34] sm:$0xf]
      %v4053 = vld [vmem:[%s4038 + $0x38] sm:$0xf]
      %v4054 = vld [vmem:[%s4038 + $0x3c] sm:$0xf]
      %v4063 = vunpack.c.l.b16 %v4030
      %v4064 = vunpack.c.l.b16 %v4031
      %v4065 = vunpack.c.l.b16 %v4032
      %v4066 = vunpack.c.l.b16 %v4033
      %v4067 = vunpack.c.l.b16 %v4034
      %v4068 = vunpack.c.l.b16 %v4035
      %v4069 = vunpack.c.l.b16 %v4036
      %v4070 = vunpack.c.l.b16 %v4037
      %v4071 = vpack.c.b16 %v4064, %v4063
      %v4072 = vpack.c.b16 %v4066, %v4065
      %v4073 = vpack.c.b16 %v4068, %v4067
      %v4074 = vpack.c.b16 %v4070, %v4069
      %v4095 = vunpack.c.l.b16 %v4039
      %v4096 = vunpack.c.l.b16 %v4040
      %v4097 = vunpack.c.l.b16 %v4041
      %v4098 = vunpack.c.l.b16 %v4042
      %v4099 = vunpack.c.l.b16 %v4043
      %v4100 = vunpack.c.l.b16 %v4044
      %v4101 = vunpack.c.l.b16 %v4045
      %v4102 = vunpack.c.l.b16 %v4046
      %v4103 = vunpack.c.l.b16 %v4047
      %v4104 = vunpack.c.l.b16 %v4048
      %v4105 = vunpack.c.l.b16 %v4049
      %v4106 = vunpack.c.l.b16 %v4050
      %v4107 = vunpack.c.l.b16 %v4051
      %v4108 = vunpack.c.l.b16 %v4052
      %v4109 = vunpack.c.l.b16 %v4053
      %v4110 = vunpack.c.l.b16 %v4054
      %v4111 = vpack.c.b16 %v4096, %v4095
      %v4112 = vpack.c.b16 %v4098, %v4097
      %v4113 = vpack.c.b16 %v4100, %v4099
      %v4114 = vpack.c.b16 %v4102, %v4101
      %v4115 = vpack.c.b16 %v4104, %v4103
      %v4116 = vpack.c.b16 %v4106, %v4105
      %v4117 = vpack.c.b16 %v4108, %v4107
      %v4118 = vpack.c.b16 %v4110, %v4109
      %4127 = vmatpush.bf16.msra.mxu0 %v4118
      %4128 = vmatpush.bf16.msra.mxu0 %v4117
      %4129 = vmatpush.bf16.msra.mxu0 %v4116
      %4130 = vmatpush.bf16.msra.mxu0 %v4115
      %4131 = vmatpush.bf16.msra.mxu0 %v4114
      %4132 = vmatpush.bf16.msra.mxu0 %v4113
      %4133 = vmatpush.bf16.msra.mxu0 %v4112
      %4134 = vmatpush.bf16.msra.mxu0 %v4111
      %4135 = vmatmul.bf16.gmra.mxu0 %v4071
      %v4136 = vpop.f32.mrf.mxu0
      %v4137 = vadd.f32 0.0, %v4136
      %v4138 = vpop.f32.mrf.mxu0
      %v4139 = vadd.f32 0.0, %v4138
      %4140 = vmatmul.bf16.gmra.mxu0 %v4072
      %v4141 = vpop.f32.mrf.mxu0
      %v4142 = vadd.f32 0.0, %v4141
      %v4143 = vpop.f32.mrf.mxu0
      %v4144 = vadd.f32 0.0, %v4143
      %4145 = vmatmul.bf16.gmra.mxu0 %v4073
      %v4146 = vpop.f32.mrf.mxu0
      %v4147 = vadd.f32 0.0, %v4146
      %v4148 = vpop.f32.mrf.mxu0
      %v4149 = vadd.f32 0.0, %v4148
      %4150 = vmatmul.bf16.gmra.mxu0 %v4074
      %v4151 = vpop.f32.mrf.mxu0
      %v4152 = vadd.f32 0.0, %v4151
      %v4153 = vpop.f32.mrf.mxu0
      %v4154 = vadd.f32 0.0, %v4153
      %4155 = vdwg.mxu0
      %v4156 = vadd.f32 %v4022, %v4137
      %v4157 = vadd.f32 %v4023, %v4139
      %v4158 = vadd.f32 %v4024, %v4142
      %v4159 = vadd.f32 %v4025, %v4144
      %v4160 = vadd.f32 %v4026, %v4147
      %v4161 = vadd.f32 %v4027, %v4149
      %v4162 = vadd.f32 %v4028, %v4152
      %v4163 = vadd.f32 %v4029, %v4154
      %v4164 = vld [vmem:[%s3363] sm:$0xf]
      %v4165 = vld [vmem:[%s3363 + $0x8] sm:$0xf]
      %v4166 = vld [vmem:[%s3363 + $0x10] sm:$0xf]
      %v4167 = vld [vmem:[%s3363 + $0x18] sm:$0xf]
      %v4168 = vld [vmem:[%s3363 + $0x20] sm:$0xf]
      %v4169 = vld [vmem:[%s3363 + $0x28] sm:$0xf]
      %v4170 = vld [vmem:[%s3363 + $0x30] sm:$0xf]
      %v4171 = vld [vmem:[%s3363 + $0x38] sm:$0xf]
      %s4172 = scalar_lea.vmem %s3, 256
      %v4173 = vld [vmem:[%s4172] sm:$0xf]
      %v4174 = vld [vmem:[%s4172 + $0x4] sm:$0xf]
      %v4175 = vld [vmem:[%s4172 + $0x8] sm:$0xf]
      %v4176 = vld [vmem:[%s4172 + $0xc] sm:$0xf]
      %v4177 = vld [vmem:[%s4172 + $0x10] sm:$0xf]
      %v4178 = vld [vmem:[%s4172 + $0x14] sm:$0xf]
      %v4179 = vld [vmem:[%s4172 + $0x18] sm:$0xf]
      %v4180 = vld [vmem:[%s4172 + $0x1c] sm:$0xf]
      %v4181 = vld [vmem:[%s4172 + $0x20] sm:$0xf]
      %v4182 = vld [vmem:[%s4172 + $0x24] sm:$0xf]
      %v4183 = vld [vmem:[%s4172 + $0x28] sm:$0xf]
      %v4184 = vld [vmem:[%s4172 + $0x2c] sm:$0xf]
      %v4185 = vld [vmem:[%s4172 + $0x30] sm:$0xf]
      %v4186 = vld [vmem:[%s4172 + $0x34] sm:$0xf]
      %v4187 = vld [vmem:[%s4172 + $0x38] sm:$0xf]
      %v4188 = vld [vmem:[%s4172 + $0x3c] sm:$0xf]
      %v4197 = vunpack.c.l.b16 %v4164
      %v4198 = vunpack.c.l.b16 %v4165
      %v4199 = vunpack.c.l.b16 %v4166
      %v4200 = vunpack.c.l.b16 %v4167
      %v4201 = vunpack.c.l.b16 %v4168
      %v4202 = vunpack.c.l.b16 %v4169
      %v4203 = vunpack.c.l.b16 %v4170
      %v4204 = vunpack.c.l.b16 %v4171
      %v4205 = vpack.c.b16 %v4198, %v4197
      %v4206 = vpack.c.b16 %v4200, %v4199
      %v4207 = vpack.c.b16 %v4202, %v4201
      %v4208 = vpack.c.b16 %v4204, %v4203
      %v4229 = vunpack.c.l.b16 %v4173
      %v4230 = vunpack.c.l.b16 %v4174
      %v4231 = vunpack.c.l.b16 %v4175
      %v4232 = vunpack.c.l.b16 %v4176
      %v4233 = vunpack.c.l.b16 %v4177
      %v4234 = vunpack.c.l.b16 %v4178
      %v4235 = vunpack.c.l.b16 %v4179
      %v4236 = vunpack.c.l.b16 %v4180
      %v4237 = vunpack.c.l.b16 %v4181
      %v4238 = vunpack.c.l.b16 %v4182
      %v4239 = vunpack.c.l.b16 %v4183
      %v4240 = vunpack.c.l.b16 %v4184
      %v4241 = vunpack.c.l.b16 %v4185
      %v4242 = vunpack.c.l.b16 %v4186
      %v4243 = vunpack.c.l.b16 %v4187
      %v4244 = vunpack.c.l.b16 %v4188
      %v4245 = vpack.c.b16 %v4230, %v4229
      %v4246 = vpack.c.b16 %v4232, %v4231
      %v4247 = vpack.c.b16 %v4234, %v4233
      %v4248 = vpack.c.b16 %v4236, %v4235
      %v4249 = vpack.c.b16 %v4238, %v4237
      %v4250 = vpack.c.b16 %v4240, %v4239
      %v4251 = vpack.c.b16 %v4242, %v4241
      %v4252 = vpack.c.b16 %v4244, %v4243
      %4261 = vmatpush.bf16.msra.mxu0 %v4252
      %4262 = vmatpush.bf16.msra.mxu0 %v4251
      %4263 = vmatpush.bf16.msra.mxu0 %v4250
      %4264 = vmatpush.bf16.msra.mxu0 %v4249
      %4265 = vmatpush.bf16.msra.mxu0 %v4248
      %4266 = vmatpush.bf16.msra.mxu0 %v4247
      %4267 = vmatpush.bf16.msra.mxu0 %v4246
      %4268 = vmatpush.bf16.msra.mxu0 %v4245
      %4269 = vmatmul.bf16.gmra.mxu0 %v4205
      %v4270 = vpop.f32.mrf.mxu0
      %v4271 = vadd.f32 0.0, %v4270
      %v4272 = vpop.f32.mrf.mxu0
      %v4273 = vadd.f32 0.0, %v4272
      %4274 = vmatmul.bf16.gmra.mxu0 %v4206
      %v4275 = vpop.f32.mrf.mxu0
      %v4276 = vadd.f32 0.0, %v4275
      %v4277 = vpop.f32.mrf.mxu0
      %v4278 = vadd.f32 0.0, %v4277
      %4279 = vmatmul.bf16.gmra.mxu0 %v4207
      %v4280 = vpop.f32.mrf.mxu0
      %v4281 = vadd.f32 0.0, %v4280
      %v4282 = vpop.f32.mrf.mxu0
      %v4283 = vadd.f32 0.0, %v4282
      %4284 = vmatmul.bf16.gmra.mxu0 %v4208
      %v4285 = vpop.f32.mrf.mxu0
      %v4286 = vadd.f32 0.0, %v4285
      %v4287 = vpop.f32.mrf.mxu0
      %v4288 = vadd.f32 0.0, %v4287
      %4289 = vdwg.mxu0
      %v4290 = vadd.f32 %v4156, %v4271
      %v4291 = vadd.f32 %v4157, %v4273
      %v4292 = vadd.f32 %v4158, %v4276
      %v4293 = vadd.f32 %v4159, %v4278
      %v4294 = vadd.f32 %v4160, %v4281
      %v4295 = vadd.f32 %v4161, %v4283
      %v4296 = vadd.f32 %v4162, %v4286
      %v4297 = vadd.f32 %v4163, %v4288
      %v4298 = vld [vmem:[%s2621] sm:$0xf]
      %v4299 = vld [vmem:[%s2621 + $0x4] sm:$0x1]
      %v4300 = vld [vmem:[%s2621 + $0x8] sm:$0xf]
      %v4301 = vld [vmem:[%s2621 + $0xc] sm:$0x1]
      %v4302 = vld [vmem:[%s2621 + $0x10] sm:$0xf]
      %v4303 = vld [vmem:[%s2621 + $0x14] sm:$0x1]
      %v4304 = vld [vmem:[%s2621 + $0x18] sm:$0xf]
      %v4305 = vld [vmem:[%s2621 + $0x1c] sm:$0x1]
      %v4306 = vld [vmem:[%s2621 + $0x20] sm:$0xf]
      %v4307 = vld [vmem:[%s2621 + $0x24] sm:$0x1]
      %v4308 = vld [vmem:[%s2621 + $0x28] sm:$0xf]
      %v4309 = vld [vmem:[%s2621 + $0x2c] sm:$0x1]
      %v4310 = vld [vmem:[%s2621 + $0x30] sm:$0xf]
      %v4311 = vld [vmem:[%s2621 + $0x34] sm:$0x1]
      %v4312 = vld [vmem:[%s2621 + $0x38] sm:$0xf]
      %v4313 = vld [vmem:[%s2621 + $0x3c] sm:$0x1]
      %v4315 = vshrl.u32 %v4298, 16
      %v4317 = vrot.slane %v4315, 4
      %v4318 = vshll.u32 %v4298, 16
      %v4320 = vrot.slane %v4318, 5
      %v4321 = vor.u32 %v4317, %v4320
      %v4322 = vrot.slane %v4321, 4
      %v4324 = vshll.u32 %v4299, 16
      %v4326 = vrot.slane %v4324, 5
      %v4327 = vsel %vm3799, %v4322, %v4326
      %v4329 = vshrl.u32 %v4300, 16
      %v4331 = vrot.slane %v4329, 4
      %v4332 = vshll.u32 %v4300, 16
      %v4334 = vrot.slane %v4332, 5
      %v4335 = vor.u32 %v4331, %v4334
      %v4336 = vrot.slane %v4335, 4
      %v4338 = vshll.u32 %v4301, 16
      %v4340 = vrot.slane %v4338, 5
      %v4341 = vsel %vm3799, %v4336, %v4340
      %v4343 = vshrl.u32 %v4302, 16
      %v4345 = vrot.slane %v4343, 4
      %v4346 = vshll.u32 %v4302, 16
      %v4348 = vrot.slane %v4346, 5
      %v4349 = vor.u32 %v4345, %v4348
      %v4350 = vrot.slane %v4349, 4
      %v4352 = vshll.u32 %v4303, 16
      %v4354 = vrot.slane %v4352, 5
      %v4355 = vsel %vm3799, %v4350, %v4354
      %v4357 = vshrl.u32 %v4304, 16
      %v4359 = vrot.slane %v4357, 4
      %v4360 = vshll.u32 %v4304, 16
      %v4362 = vrot.slane %v4360, 5
      %v4363 = vor.u32 %v4359, %v4362
      %v4364 = vrot.slane %v4363, 4
      %v4366 = vshll.u32 %v4305, 16
      %v4368 = vrot.slane %v4366, 5
      %v4369 = vsel %vm3799, %v4364, %v4368
      %v4371 = vshrl.u32 %v4306, 16
      %v4373 = vrot.slane %v4371, 4
      %v4374 = vshll.u32 %v4306, 16
      %v4376 = vrot.slane %v4374, 5
      %v4377 = vor.u32 %v4373, %v4376
      %v4378 = vrot.slane %v4377, 4
      %v4380 = vshll.u32 %v4307, 16
      %v4382 = vrot.slane %v4380, 5
      %v4383 = vsel %vm3799, %v4378, %v4382
      %v4385 = vshrl.u32 %v4308, 16
      %v4387 = vrot.slane %v4385, 4
      %v4388 = vshll.u32 %v4308, 16
      %v4390 = vrot.slane %v4388, 5
      %v4391 = vor.u32 %v4387, %v4390
      %v4392 = vrot.slane %v4391, 4
      %v4394 = vshll.u32 %v4309, 16
      %v4396 = vrot.slane %v4394, 5
      %v4397 = vsel %vm3799, %v4392, %v4396
      %v4399 = vshrl.u32 %v4310, 16
      %v4401 = vrot.slane %v4399, 4
      %v4402 = vshll.u32 %v4310, 16
      %v4404 = vrot.slane %v4402, 5
      %v4405 = vor.u32 %v4401, %v4404
      %v4406 = vrot.slane %v4405, 4
      %v4408 = vshll.u32 %v4311, 16
      %v4410 = vrot.slane %v4408, 5
      %v4411 = vsel %vm3799, %v4406, %v4410
      %v4413 = vshrl.u32 %v4312, 16
      %v4415 = vrot.slane %v4413, 4
      %v4416 = vshll.u32 %v4312, 16
      %v4418 = vrot.slane %v4416, 5
      %v4419 = vor.u32 %v4415, %v4418
      %v4420 = vrot.slane %v4419, 4
      %v4422 = vshll.u32 %v4313, 16
      %v4424 = vrot.slane %v4422, 5
      %v4425 = vsel %vm3799, %v4420, %v4424
      %s4426 = scalar_lea.vmem %s3, 320
      %v4427 = vld [vmem:[%s4426] sm:$0xf]
      %v4428 = vld [vmem:[%s4426 + $0x4] sm:$0xf]
      %v4429 = vld [vmem:[%s4426 + $0x8] sm:$0xf]
      %v4430 = vld [vmem:[%s4426 + $0xc] sm:$0xf]
      %v4431 = vld [vmem:[%s4426 + $0x10] sm:$0xf]
      %v4432 = vld [vmem:[%s4426 + $0x14] sm:$0xf]
      %v4433 = vld [vmem:[%s4426 + $0x18] sm:$0xf]
      %v4434 = vld [vmem:[%s4426 + $0x1c] sm:$0xf]
      %v4435 = vld [vmem:[%s4426 + $0x20] sm:$0xf]
      %v4436 = vld [vmem:[%s4426 + $0x24] sm:$0xf]
      %v4437 = vld [vmem:[%s4426 + $0x28] sm:$0xf]
      %v4438 = vld [vmem:[%s4426 + $0x2c] sm:$0xf]
      %v4439 = vld [vmem:[%s4426 + $0x30] sm:$0xf]
      %v4440 = vld [vmem:[%s4426 + $0x34] sm:$0xf]
      %v4441 = vld [vmem:[%s4426 + $0x38] sm:$0xf]
      %v4442 = vld [vmem:[%s4426 + $0x3c] sm:$0xf]
      %v4443 = vunpack.c.l.b16 %v4327
      %v4444 = vunpack.c.l.b16 %v4341
      %v4445 = vunpack.c.l.b16 %v4355
      %v4446 = vunpack.c.l.b16 %v4369
      %v4447 = vunpack.c.l.b16 %v4383
      %v4448 = vunpack.c.l.b16 %v4397
      %v4449 = vunpack.c.l.b16 %v4411
      %v4450 = vunpack.c.l.b16 %v4425
      %v4451 = vpack.c.b16 %v4444, %v4443
      %v4452 = vpack.c.b16 %v4446, %v4445
      %v4453 = vpack.c.b16 %v4448, %v4447
      %v4454 = vpack.c.b16 %v4450, %v4449
      %v4475 = vunpack.c.l.b16 %v4427
      %v4476 = vunpack.c.l.b16 %v4428
      %v4477 = vunpack.c.l.b16 %v4429
      %v4478 = vunpack.c.l.b16 %v4430
      %v4479 = vunpack.c.l.b16 %v4431
      %v4480 = vunpack.c.l.b16 %v4432
      %v4481 = vunpack.c.l.b16 %v4433
      %v4482 = vunpack.c.l.b16 %v4434
      %v4483 = vunpack.c.l.b16 %v4435
      %v4484 = vunpack.c.l.b16 %v4436
      %v4485 = vunpack.c.l.b16 %v4437
      %v4486 = vunpack.c.l.b16 %v4438
      %v4487 = vunpack.c.l.b16 %v4439
      %v4488 = vunpack.c.l.b16 %v4440
      %v4489 = vunpack.c.l.b16 %v4441
      %v4490 = vunpack.c.l.b16 %v4442
      %v4491 = vpack.c.b16 %v4476, %v4475
      %v4492 = vpack.c.b16 %v4478, %v4477
      %v4493 = vpack.c.b16 %v4480, %v4479
      %v4494 = vpack.c.b16 %v4482, %v4481
      %v4495 = vpack.c.b16 %v4484, %v4483
      %v4496 = vpack.c.b16 %v4486, %v4485
      %v4497 = vpack.c.b16 %v4488, %v4487
      %v4498 = vpack.c.b16 %v4490, %v4489
      %4507 = vmatpush.bf16.msra.mxu0 %v4498
      %4508 = vmatpush.bf16.msra.mxu0 %v4497
      %4509 = vmatpush.bf16.msra.mxu0 %v4496
      %4510 = vmatpush.bf16.msra.mxu0 %v4495
      %4511 = vmatpush.bf16.msra.mxu0 %v4494
      %4512 = vmatpush.bf16.msra.mxu0 %v4493
      %4513 = vmatpush.bf16.msra.mxu0 %v4492
      %4514 = vmatpush.bf16.msra.mxu0 %v4491
      %4515 = vmatmul.bf16.gmra.mxu0 %v4451
      %v4516 = vpop.f32.mrf.mxu0
      %v4517 = vadd.f32 0.0, %v4516
      %v4518 = vpop.f32.mrf.mxu0
      %v4519 = vadd.f32 0.0, %v4518
      %4520 = vmatmul.bf16.gmra.mxu0 %v4452
      %v4521 = vpop.f32.mrf.mxu0
      %v4522 = vadd.f32 0.0, %v4521
      %v4523 = vpop.f32.mrf.mxu0
      %v4524 = vadd.f32 0.0, %v4523
      %4525 = vmatmul.bf16.gmra.mxu0 %v4453
      %v4526 = vpop.f32.mrf.mxu0
      %v4527 = vadd.f32 0.0, %v4526
      %v4528 = vpop.f32.mrf.mxu0
      %v4529 = vadd.f32 0.0, %v4528
      %4530 = vmatmul.bf16.gmra.mxu0 %v4454
      %v4531 = vpop.f32.mrf.mxu0
      %v4532 = vadd.f32 0.0, %v4531
      %v4533 = vpop.f32.mrf.mxu0
      %v4534 = vadd.f32 0.0, %v4533
      %4535 = vdwg.mxu0
      %v4536 = vadd.f32 %v4290, %v4517
      %v4537 = vadd.f32 %v4291, %v4519
      %v4538 = vadd.f32 %v4292, %v4522
      %v4539 = vadd.f32 %v4293, %v4524
      %v4540 = vadd.f32 %v4294, %v4527
      %v4541 = vadd.f32 %v4295, %v4529
      %v4542 = vadd.f32 %v4296, %v4532
      %v4543 = vadd.f32 %v4297, %v4534
      %s4544 = scalar_lea.vmem [#allocation2], 8
      %v4545 = vld [vmem:[%s4544] sm:$0xf]
      %v4546 = vld [vmem:[%s4544 + $0x8] sm:$0xf]
      %v4547 = vld [vmem:[%s4544 + $0x10] sm:$0xf]
      %v4548 = vld [vmem:[%s4544 + $0x18] sm:$0xf]
      %v4549 = vld [vmem:[%s4544 + $0x20] sm:$0xf]
      %v4550 = vld [vmem:[%s4544 + $0x28] sm:$0xf]
      %v4551 = vld [vmem:[%s4544 + $0x30] sm:$0xf]
      %v4552 = vld [vmem:[%s4544 + $0x38] sm:$0xf]
      %s4553 = scalar_lea.vmem %s3, 384
      %v4554 = vld [vmem:[%s4553] sm:$0xf]
      %v4555 = vld [vmem:[%s4553 + $0x4] sm:$0xf]
      %v4556 = vld [vmem:[%s4553 + $0x8] sm:$0xf]
      %v4557 = vld [vmem:[%s4553 + $0xc] sm:$0xf]
      %v4558 = vld [vmem:[%s4553 + $0x10] sm:$0xf]
      %v4559 = vld [vmem:[%s4553 + $0x14] sm:$0xf]
      %v4560 = vld [vmem:[%s4553 + $0x18] sm:$0xf]
      %v4561 = vld [vmem:[%s4553 + $0x1c] sm:$0xf]
      %v4562 = vld [vmem:[%s4553 + $0x20] sm:$0xf]
      %v4563 = vld [vmem:[%s4553 + $0x24] sm:$0xf]
      %v4564 = vld [vmem:[%s4553 + $0x28] sm:$0xf]
      %v4565 = vld [vmem:[%s4553 + $0x2c] sm:$0xf]
      %v4566 = vld [vmem:[%s4553 + $0x30] sm:$0xf]
      %v4567 = vld [vmem:[%s4553 + $0x34] sm:$0xf]
      %v4568 = vld [vmem:[%s4553 + $0x38] sm:$0xf]
      %v4569 = vld [vmem:[%s4553 + $0x3c] sm:$0xf]
      %v4578 = vunpack.c.l.b16 %v4545
      %v4579 = vunpack.c.l.b16 %v4546
      %v4580 = vunpack.c.l.b16 %v4547
      %v4581 = vunpack.c.l.b16 %v4548
      %v4582 = vunpack.c.l.b16 %v4549
      %v4583 = vunpack.c.l.b16 %v4550
      %v4584 = vunpack.c.l.b16 %v4551
      %v4585 = vunpack.c.l.b16 %v4552
      %v4586 = vpack.c.b16 %v4579, %v4578
      %v4587 = vpack.c.b16 %v4581, %v4580
      %v4588 = vpack.c.b16 %v4583, %v4582
      %v4589 = vpack.c.b16 %v4585, %v4584
      %v4610 = vunpack.c.l.b16 %v4554
      %v4611 = vunpack.c.l.b16 %v4555
      %v4612 = vunpack.c.l.b16 %v4556
      %v4613 = vunpack.c.l.b16 %v4557
      %v4614 = vunpack.c.l.b16 %v4558
      %v4615 = vunpack.c.l.b16 %v4559
      %v4616 = vunpack.c.l.b16 %v4560
      %v4617 = vunpack.c.l.b16 %v4561
      %v4618 = vunpack.c.l.b16 %v4562
      %v4619 = vunpack.c.l.b16 %v4563
      %v4620 = vunpack.c.l.b16 %v4564
      %v4621 = vunpack.c.l.b16 %v4565
      %v4622 = vunpack.c.l.b16 %v4566
      %v4623 = vunpack.c.l.b16 %v4567
      %v4624 = vunpack.c.l.b16 %v4568
      %v4625 = vunpack.c.l.b16 %v4569
      %v4626 = vpack.c.b16 %v4611, %v4610
      %v4627 = vpack.c.b16 %v4613, %v4612
      %v4628 = vpack.c.b16 %v4615, %v4614
      %v4629 = vpack.c.b16 %v4617, %v4616
      %v4630 = vpack.c.b16 %v4619, %v4618
      %v4631 = vpack.c.b16 %v4621, %v4620
      %v4632 = vpack.c.b16 %v4623, %v4622
      %v4633 = vpack.c.b16 %v4625, %v4624
      %4642 = vmatpush.bf16.msra.mxu0 %v4633
      %4643 = vmatpush.bf16.msra.mxu0 %v4632
      %4644 = vmatpush.bf16.msra.mxu0 %v4631
      %4645 = vmatpush.bf16.msra.mxu0 %v4630
      %4646 = vmatpush.bf16.msra.mxu0 %v4629
      %4647 = vmatpush.bf16.msra.mxu0 %v4628
      %4648 = vmatpush.bf16.msra.mxu0 %v4627
      %4649 = vmatpush.bf16.msra.mxu0 %v4626
      %4650 = vmatmul.bf16.gmra.mxu0 %v4586
      %v4651 = vpop.f32.mrf.mxu0
      %v4652 = vadd.f32 0.0, %v4651
      %v4653 = vpop.f32.mrf.mxu0
      %v4654 = vadd.f32 0.0, %v4653
      %4655 = vmatmul.bf16.gmra.mxu0 %v4587
      %v4656 = vpop.f32.mrf.mxu0
      %v4657 = vadd.f32 0.0, %v4656
      %v4658 = vpop.f32.mrf.mxu0
      %v4659 = vadd.f32 0.0, %v4658
      %4660 = vmatmul.bf16.gmra.mxu0 %v4588
      %v4661 = vpop.f32.mrf.mxu0
      %v4662 = vadd.f32 0.0, %v4661
      %v4663 = vpop.f32.mrf.mxu0
      %v4664 = vadd.f32 0.0, %v4663
      %4665 = vmatmul.bf16.gmra.mxu0 %v4589
      %v4666 = vpop.f32.mrf.mxu0
      %v4667 = vadd.f32 0.0, %v4666
      %v4668 = vpop.f32.mrf.mxu0
      %v4669 = vadd.f32 0.0, %v4668
      %4670 = vdwg.mxu0
      %v4671 = vadd.f32 %v4536, %v4652
      %v4672 = vadd.f32 %v4537, %v4654
      %v4673 = vadd.f32 %v4538, %v4657
      %v4674 = vadd.f32 %v4539, %v4659
      %v4675 = vadd.f32 %v4540, %v4662
      %v4676 = vadd.f32 %v4541, %v4664
      %v4677 = vadd.f32 %v4542, %v4667
      %v4678 = vadd.f32 %v4543, %v4669
      %s4679 = scalar_lea.vmem [#allocation2], 80
      %v4680 = vld [vmem:[%s4679] sm:$0xf]
      %v4681 = vld [vmem:[%s4679 + $0x8] sm:$0xf]
      %v4682 = vld [vmem:[%s4679 + $0x10] sm:$0xf]
      %v4683 = vld [vmem:[%s4679 + $0x18] sm:$0xf]
      %v4684 = vld [vmem:[%s4679 + $0x20] sm:$0xf]
      %v4685 = vld [vmem:[%s4679 + $0x28] sm:$0xf]
      %v4686 = vld [vmem:[%s4679 + $0x30] sm:$0xf]
      %v4687 = vld [vmem:[%s4679 + $0x38] sm:$0xf]
      %s4688 = scalar_lea.vmem %s3, 448
      %v4689 = vld [vmem:[%s4688] sm:$0xf]
      %v4690 = vld [vmem:[%s4688 + $0x4] sm:$0xf]
      %v4691 = vld [vmem:[%s4688 + $0x8] sm:$0xf]
      %v4692 = vld [vmem:[%s4688 + $0xc] sm:$0xf]
      %v4693 = vld [vmem:[%s4688 + $0x10] sm:$0xf]
      %v4694 = vld [vmem:[%s4688 + $0x14] sm:$0xf]
      %v4695 = vld [vmem:[%s4688 + $0x18] sm:$0xf]
      %v4696 = vld [vmem:[%s4688 + $0x1c] sm:$0xf]
      %v4697 = vld [vmem:[%s4688 + $0x20] sm:$0xf]
      %v4698 = vld [vmem:[%s4688 + $0x24] sm:$0xf]
      %v4699 = vld [vmem:[%s4688 + $0x28] sm:$0xf]
      %v4700 = vld [vmem:[%s4688 + $0x2c] sm:$0xf]
      %v4701 = vld [vmem:[%s4688 + $0x30] sm:$0xf]
      %v4702 = vld [vmem:[%s4688 + $0x34] sm:$0xf]
      %v4703 = vld [vmem:[%s4688 + $0x38] sm:$0xf]
      %v4704 = vld [vmem:[%s4688 + $0x3c] sm:$0xf]
      %v4713 = vunpack.c.l.b16 %v4680
      %v4714 = vunpack.c.l.b16 %v4681
      %v4715 = vunpack.c.l.b16 %v4682
      %v4716 = vunpack.c.l.b16 %v4683
      %v4717 = vunpack.c.l.b16 %v4684
      %v4718 = vunpack.c.l.b16 %v4685
      %v4719 = vunpack.c.l.b16 %v4686
      %v4720 = vunpack.c.l.b16 %v4687
      %v4721 = vpack.c.b16 %v4714, %v4713
      %v4722 = vpack.c.b16 %v4716, %v4715
      %v4723 = vpack.c.b16 %v4718, %v4717
      %v4724 = vpack.c.b16 %v4720, %v4719
      %v4745 = vunpack.c.l.b16 %v4689
      %v4746 = vunpack.c.l.b16 %v4690
      %v4747 = vunpack.c.l.b16 %v4691
      %v4748 = vunpack.c.l.b16 %v4692
      %v4749 = vunpack.c.l.b16 %v4693
      %v4750 = vunpack.c.l.b16 %v4694
      %v4751 = vunpack.c.l.b16 %v4695
      %v4752 = vunpack.c.l.b16 %v4696
      %v4753 = vunpack.c.l.b16 %v4697
      %v4754 = vunpack.c.l.b16 %v4698
      %v4755 = vunpack.c.l.b16 %v4699
      %v4756 = vunpack.c.l.b16 %v4700
      %v4757 = vunpack.c.l.b16 %v4701
      %v4758 = vunpack.c.l.b16 %v4702
      %v4759 = vunpack.c.l.b16 %v4703
      %v4760 = vunpack.c.l.b16 %v4704
      %v4761 = vpack.c.b16 %v4746, %v4745
      %v4762 = vpack.c.b16 %v4748, %v4747
      %v4763 = vpack.c.b16 %v4750, %v4749
      %v4764 = vpack.c.b16 %v4752, %v4751
      %v4765 = vpack.c.b16 %v4754, %v4753
      %v4766 = vpack.c.b16 %v4756, %v4755
      %v4767 = vpack.c.b16 %v4758, %v4757
      %v4768 = vpack.c.b16 %v4760, %v4759
      %4777 = vmatpush.bf16.msra.mxu0 %v4768
      %4778 = vmatpush.bf16.msra.mxu0 %v4767
      %4779 = vmatpush.bf16.msra.mxu0 %v4766
      %4780 = vmatpush.bf16.msra.mxu0 %v4765
      %4781 = vmatpush.bf16.msra.mxu0 %v4764
      %4782 = vmatpush.bf16.msra.mxu0 %v4763
      %4783 = vmatpush.bf16.msra.mxu0 %v4762
      %4784 = vmatpush.bf16.msra.mxu0 %v4761
      %4785 = vmatmul.bf16.gmra.mxu0 %v4721
      %v4786 = vpop.f32.mrf.mxu0
      %v4787 = vadd.f32 0.0, %v4786
      %v4788 = vpop.f32.mrf.mxu0
      %v4789 = vadd.f32 0.0, %v4788
      %4790 = vmatmul.bf16.gmra.mxu0 %v4722
      %v4791 = vpop.f32.mrf.mxu0
      %v4792 = vadd.f32 0.0, %v4791
      %v4793 = vpop.f32.mrf.mxu0
      %v4794 = vadd.f32 0.0, %v4793
      %4795 = vmatmul.bf16.gmra.mxu0 %v4723
      %v4796 = vpop.f32.mrf.mxu0
      %v4797 = vadd.f32 0.0, %v4796
      %v4798 = vpop.f32.mrf.mxu0
      %v4799 = vadd.f32 0.0, %v4798
      %4800 = vmatmul.bf16.gmra.mxu0 %v4724
      %v4801 = vpop.f32.mrf.mxu0
      %v4802 = vadd.f32 0.0, %v4801
      %v4803 = vpop.f32.mrf.mxu0
      %v4804 = vadd.f32 0.0, %v4803
      %4805 = vdwg.mxu0
      %v4806 = vadd.f32 %v4671, %v4787
      %v4807 = vadd.f32 %v4672, %v4789
      %v4808 = vadd.f32 %v4673, %v4792
      %v4809 = vadd.f32 %v4674, %v4794
      %v4810 = vadd.f32 %v4675, %v4797
      %v4811 = vadd.f32 %v4676, %v4799
      %v4812 = vadd.f32 %v4677, %v4802
      %v4813 = vadd.f32 %v4678, %v4804
      %v4814 = vld [vmem:[%s4544] sm:$0xf]
      %v4815 = vld [vmem:[%s4544 + $0x4] sm:$0x1]
      %v4816 = vld [vmem:[%s4544 + $0x8] sm:$0xf]
      %v4817 = vld [vmem:[%s4544 + $0xc] sm:$0x1]
      %v4818 = vld [vmem:[%s4544 + $0x10] sm:$0xf]
      %v4819 = vld [vmem:[%s4544 + $0x14] sm:$0x1]
      %v4820 = vld [vmem:[%s4544 + $0x18] sm:$0xf]
      %v4821 = vld [vmem:[%s4544 + $0x1c] sm:$0x1]
      %v4822 = vld [vmem:[%s4544 + $0x20] sm:$0xf]
      %v4823 = vld [vmem:[%s4544 + $0x24] sm:$0x1]
      %v4824 = vld [vmem:[%s4544 + $0x28] sm:$0xf]
      %v4825 = vld [vmem:[%s4544 + $0x2c] sm:$0x1]
      %v4826 = vld [vmem:[%s4544 + $0x30] sm:$0xf]
      %v4827 = vld [vmem:[%s4544 + $0x34] sm:$0x1]
      %v4828 = vld [vmem:[%s4544 + $0x38] sm:$0xf]
      %v4829 = vld [vmem:[%s4544 + $0x3c] sm:$0x1]
      %v4831 = vshrl.u32 %v4814, 16
      %v4833 = vrot.slane %v4831, 4
      %v4834 = vshll.u32 %v4814, 16
      %v4836 = vrot.slane %v4834, 5
      %v4837 = vor.u32 %v4833, %v4836
      %v4838 = vrot.slane %v4837, 4
      %v4840 = vshll.u32 %v4815, 16
      %v4842 = vrot.slane %v4840, 5
      %v4843 = vsel %vm3799, %v4838, %v4842
      %v4845 = vshrl.u32 %v4816, 16
      %v4847 = vrot.slane %v4845, 4
      %v4848 = vshll.u32 %v4816, 16
      %v4850 = vrot.slane %v4848, 5
      %v4851 = vor.u32 %v4847, %v4850
      %v4852 = vrot.slane %v4851, 4
      %v4854 = vshll.u32 %v4817, 16
      %v4856 = vrot.slane %v4854, 5
      %v4857 = vsel %vm3799, %v4852, %v4856
      %v4859 = vshrl.u32 %v4818, 16
      %v4861 = vrot.slane %v4859, 4
      %v4862 = vshll.u32 %v4818, 16
      %v4864 = vrot.slane %v4862, 5
      %v4865 = vor.u32 %v4861, %v4864
      %v4866 = vrot.slane %v4865, 4
      %v4868 = vshll.u32 %v4819, 16
      %v4870 = vrot.slane %v4868, 5
      %v4871 = vsel %vm3799, %v4866, %v4870
      %v4873 = vshrl.u32 %v4820, 16
      %v4875 = vrot.slane %v4873, 4
      %v4876 = vshll.u32 %v4820, 16
      %v4878 = vrot.slane %v4876, 5
      %v4879 = vor.u32 %v4875, %v4878
      %v4880 = vrot.slane %v4879, 4
      %v4882 = vshll.u32 %v4821, 16
      %v4884 = vrot.slane %v4882, 5
      %v4885 = vsel %vm3799, %v4880, %v4884
      %v4887 = vshrl.u32 %v4822, 16
      %v4889 = vrot.slane %v4887, 4
      %v4890 = vshll.u32 %v4822, 16
      %v4892 = vrot.slane %v4890, 5
      %v4893 = vor.u32 %v4889, %v4892
      %v4894 = vrot.slane %v4893, 4
      %v4896 = vshll.u32 %v4823, 16
      %v4898 = vrot.slane %v4896, 5
      %v4899 = vsel %vm3799, %v4894, %v4898
      %v4901 = vshrl.u32 %v4824, 16
      %v4903 = vrot.slane %v4901, 4
      %v4904 = vshll.u32 %v4824, 16
      %v4906 = vrot.slane %v4904, 5
      %v4907 = vor.u32 %v4903, %v4906
      %v4908 = vrot.slane %v4907, 4
      %v4910 = vshll.u32 %v4825, 16
      %v4912 = vrot.slane %v4910, 5
      %v4913 = vsel %vm3799, %v4908, %v4912
      %v4915 = vshrl.u32 %v4826, 16
      %v4917 = vrot.slane %v4915, 4
      %v4918 = vshll.u32 %v4826, 16
      %v4920 = vrot.slane %v4918, 5
      %v4921 = vor.u32 %v4917, %v4920
      %v4922 = vrot.slane %v4921, 4
      %v4924 = vshll.u32 %v4827, 16
      %v4926 = vrot.slane %v4924, 5
      %v4927 = vsel %vm3799, %v4922, %v4926
      %v4929 = vshrl.u32 %v4828, 16
      %v4931 = vrot.slane %v4929, 4
      %v4932 = vshll.u32 %v4828, 16
      %v4934 = vrot.slane %v4932, 5
      %v4935 = vor.u32 %v4931, %v4934
      %v4936 = vrot.slane %v4935, 4
      %v4938 = vshll.u32 %v4829, 16
      %v4940 = vrot.slane %v4938, 5
      %v4941 = vsel %vm3799, %v4936, %v4940
      %s4942 = scalar_lea.vmem %s3, 512
      %v4943 = vld [vmem:[%s4942] sm:$0xf]
      %v4944 = vld [vmem:[%s4942 + $0x4] sm:$0xf]
      %v4945 = vld [vmem:[%s4942 + $0x8] sm:$0xf]
      %v4946 = vld [vmem:[%s4942 + $0xc] sm:$0xf]
      %v4947 = vld [vmem:[%s4942 + $0x10] sm:$0xf]
      %v4948 = vld [vmem:[%s4942 + $0x14] sm:$0xf]
      %v4949 = vld [vmem:[%s4942 + $0x18] sm:$0xf]
      %v4950 = vld [vmem:[%s4942 + $0x1c] sm:$0xf]
      %v4951 = vld [vmem:[%s4942 + $0x20] sm:$0xf]
      %v4952 = vld [vmem:[%s4942 + $0x24] sm:$0xf]
      %v4953 = vld [vmem:[%s4942 + $0x28] sm:$0xf]
      %v4954 = vld [vmem:[%s4942 + $0x2c] sm:$0xf]
      %v4955 = vld [vmem:[%s4942 + $0x30] sm:$0xf]
      %v4956 = vld [vmem:[%s4942 + $0x34] sm:$0xf]
      %v4957 = vld [vmem:[%s4942 + $0x38] sm:$0xf]
      %v4958 = vld [vmem:[%s4942 + $0x3c] sm:$0xf]
      %v4959 = vunpack.c.l.b16 %v4843
      %v4960 = vunpack.c.l.b16 %v4857
      %v4961 = vunpack.c.l.b16 %v4871
      %v4962 = vunpack.c.l.b16 %v4885
      %v4963 = vunpack.c.l.b16 %v4899
      %v4964 = vunpack.c.l.b16 %v4913
      %v4965 = vunpack.c.l.b16 %v4927
      %v4966 = vunpack.c.l.b16 %v4941
      %v4967 = vpack.c.b16 %v4960, %v4959
      %v4968 = vpack.c.b16 %v4962, %v4961
      %v4969 = vpack.c.b16 %v4964, %v4963
      %v4970 = vpack.c.b16 %v4966, %v4965
      %v4991 = vunpack.c.l.b16 %v4943
      %v4992 = vunpack.c.l.b16 %v4944
      %v4993 = vunpack.c.l.b16 %v4945
      %v4994 = vunpack.c.l.b16 %v4946
      %v4995 = vunpack.c.l.b16 %v4947
      %v4996 = vunpack.c.l.b16 %v4948
      %v4997 = vunpack.c.l.b16 %v4949
      %v4998 = vunpack.c.l.b16 %v4950
      %v4999 = vunpack.c.l.b16 %v4951
      %v5000 = vunpack.c.l.b16 %v4952
      %v5001 = vunpack.c.l.b16 %v4953
      %v5002 = vunpack.c.l.b16 %v4954
      %v5003 = vunpack.c.l.b16 %v4955
      %v5004 = vunpack.c.l.b16 %v4956
      %v5005 = vunpack.c.l.b16 %v4957
      %v5006 = vunpack.c.l.b16 %v4958
      %v5007 = vpack.c.b16 %v4992, %v4991
      %v5008 = vpack.c.b16 %v4994, %v4993
      %v5009 = vpack.c.b16 %v4996, %v4995
      %v5010 = vpack.c.b16 %v4998, %v4997
      %v5011 = vpack.c.b16 %v5000, %v4999
      %v5012 = vpack.c.b16 %v5002, %v5001
      %v5013 = vpack.c.b16 %v5004, %v5003
      %v5014 = vpack.c.b16 %v5006, %v5005
      %5023 = vmatpush.bf16.msra.mxu0 %v5014
      %5024 = vmatpush.bf16.msra.mxu0 %v5013
      %5025 = vmatpush.bf16.msra.mxu0 %v5012
      %5026 = vmatpush.bf16.msra.mxu0 %v5011
      %5027 = vmatpush.bf16.msra.mxu0 %v5010
      %5028 = vmatpush.bf16.msra.mxu0 %v5009
      %5029 = vmatpush.bf16.msra.mxu0 %v5008
      %5030 = vmatpush.bf16.msra.mxu0 %v5007
      %5031 = vmatmul.bf16.gmra.mxu0 %v4967
      %v5032 = vpop.f32.mrf.mxu0
      %v5033 = vadd.f32 0.0, %v5032
      %v5034 = vpop.f32.mrf.mxu0
      %v5035 = vadd.f32 0.0, %v5034
      %5036 = vmatmul.bf16.gmra.mxu0 %v4968
      %v5037 = vpop.f32.mrf.mxu0
      %v5038 = vadd.f32 0.0, %v5037
      %v5039 = vpop.f32.mrf.mxu0
      %v5040 = vadd.f32 0.0, %v5039
      %5041 = vmatmul.bf16.gmra.mxu0 %v4969
      %v5042 = vpop.f32.mrf.mxu0
      %v5043 = vadd.f32 0.0, %v5042
      %v5044 = vpop.f32.mrf.mxu0
      %v5045 = vadd.f32 0.0, %v5044
      %5046 = vmatmul.bf16.gmra.mxu0 %v4970
      %v5047 = vpop.f32.mrf.mxu0
      %v5048 = vadd.f32 0.0, %v5047
      %v5049 = vpop.f32.mrf.mxu0
      %v5050 = vadd.f32 0.0, %v5049
      %5051 = vdwg.mxu0
      %v5052 = vadd.f32 %v4806, %v5033
      %v5053 = vadd.f32 %v4807, %v5035
      %v5054 = vadd.f32 %v4808, %v5038
      %v5055 = vadd.f32 %v4809, %v5040
      %v5056 = vadd.f32 %v4810, %v5043
      %v5057 = vadd.f32 %v4811, %v5045
      %v5058 = vadd.f32 %v4812, %v5048
      %v5059 = vadd.f32 %v4813, %v5050
      %v5060 = vld [vmem:[%s4] sm:$0x1]
      %v5062 = vperm.slane %v5060, 0
      %v5064 = vadd.f32 %v5052, %v5062
      %v5065 = vadd.f32 %v5053, %v5062
      %v5066 = vadd.f32 %v5054, %v5062
      %v5067 = vadd.f32 %v5055, %v5062
      %v5068 = vadd.f32 %v5056, %v5062
      %v5069 = vadd.f32 %v5057, %v5062
      %v5070 = vadd.f32 %v5058, %v5062
      %v5071 = vadd.f32 %v5059, %v5062
      %v5072 = vmax.f32 %v5064, 0.0
      %v5073 = vmax.f32 %v5065, 0.0
      %v5074 = vmax.f32 %v5066, 0.0
      %v5075 = vmax.f32 %v5067, 0.0
      %v5076 = vmax.f32 %v5068, 0.0
      %v5077 = vmax.f32 %v5069, 0.0
      %v5078 = vmax.f32 %v5070, 0.0
      %v5079 = vmax.f32 %v5071, 0.0
      %v5080 = vpack.c.bf16 %v5073, %v5072
      %v5081 = vpack.c.bf16 %v5075, %v5074
      %v5082 = vpack.c.bf16 %v5077, %v5076
      %v5083 = vpack.c.bf16 %v5079, %v5078
      %v5084 = vld [vmem:[%s5] sm:$0xf]
      %v5085 = vld [vmem:[%s5 + $0x4] sm:$0xf]
      %v5086 = vld [vmem:[%s5 + $0x8] sm:$0xf]
      %v5087 = vld [vmem:[%s5 + $0xc] sm:$0xf]
      %v5088 = vld [vmem:[%s5 + $0x10] sm:$0xf]
      %v5089 = vld [vmem:[%s5 + $0x14] sm:$0xf]
      %v5090 = vld [vmem:[%s5 + $0x18] sm:$0xf]
      %v5091 = vld [vmem:[%s5 + $0x1c] sm:$0xf]
      %v5092 = vld [vmem:[%s5 + $0x20] sm:$0xf]
      %v5093 = vld [vmem:[%s5 + $0x24] sm:$0xf]
      %v5094 = vld [vmem:[%s5 + $0x28] sm:$0xf]
      %v5095 = vld [vmem:[%s5 + $0x2c] sm:$0xf]
      %v5096 = vld [vmem:[%s5 + $0x30] sm:$0xf]
      %v5097 = vld [vmem:[%s5 + $0x34] sm:$0xf]
      %v5098 = vld [vmem:[%s5 + $0x38] sm:$0xf]
      %v5099 = vld [vmem:[%s5 + $0x3c] sm:$0xf]
      %v5100 = vld [vmem:[%s6] sm:$0x1]
      %v5102 = vperm.slane %v5100, 0
      %v5120 = vunpack.c.l.b16 %v5084
      %v5121 = vunpack.c.l.b16 %v5085
      %v5122 = vunpack.c.l.b16 %v5086
      %v5123 = vunpack.c.l.b16 %v5087
      %v5124 = vunpack.c.l.b16 %v5088
      %v5125 = vunpack.c.l.b16 %v5089
      %v5126 = vunpack.c.l.b16 %v5090
      %v5127 = vunpack.c.l.b16 %v5091
      %v5128 = vunpack.c.l.b16 %v5092
      %v5129 = vunpack.c.l.b16 %v5093
      %v5130 = vunpack.c.l.b16 %v5094
      %v5131 = vunpack.c.l.b16 %v5095
      %v5132 = vunpack.c.l.b16 %v5096
      %v5133 = vunpack.c.l.b16 %v5097
      %v5134 = vunpack.c.l.b16 %v5098
      %v5135 = vunpack.c.l.b16 %v5099
      %v5136 = vpack.c.b16 %v5121, %v5120
      %v5137 = vpack.c.b16 %v5123, %v5122
      %v5138 = vpack.c.b16 %v5125, %v5124
      %v5139 = vpack.c.b16 %v5127, %v5126
      %v5140 = vpack.c.b16 %v5129, %v5128
      %v5141 = vpack.c.b16 %v5131, %v5130
      %v5142 = vpack.c.b16 %v5133, %v5132
      %v5143 = vpack.c.b16 %v5135, %v5134
      %5152 = vmatpush.bf16.msra.mxu0 %v5143
      %5153 = vmatpush.bf16.msra.mxu0 %v5142
      %5154 = vmatpush.bf16.msra.mxu0 %v5141
      %5155 = vmatpush.bf16.msra.mxu0 %v5140
      %5156 = vmatpush.bf16.msra.mxu0 %v5139
      %5157 = vmatpush.bf16.msra.mxu0 %v5138
      %5158 = vmatpush.bf16.msra.mxu0 %v5137
      %5159 = vmatpush.bf16.msra.mxu0 %v5136
      %5160 = vmatmul.bf16.gmra.mxu0 %v5080
      %v5161 = vpop.f32.mrf.mxu0
      %v5162 = vadd.f32 %v5102, %v5161
      %v5163 = vpop.f32.mrf.mxu0
      %v5164 = vadd.f32 %v5102, %v5163
      %5165 = vmatmul.bf16.gmra.mxu0 %v5081
      %v5166 = vpop.f32.mrf.mxu0
      %v5167 = vadd.f32 %v5102, %v5166
      %v5168 = vpop.f32.mrf.mxu0
      %v5169 = vadd.f32 %v5102, %v5168
      %5170 = vmatmul.bf16.gmra.mxu0 %v5082
      %v5171 = vpop.f32.mrf.mxu0
      %v5172 = vadd.f32 %v5102, %v5171
      %v5173 = vpop.f32.mrf.mxu0
      %v5174 = vadd.f32 %v5102, %v5173
      %5175 = vmatmul.bf16.gmra.mxu0 %v5083
      %v5176 = vpop.f32.mrf.mxu0
      %v5177 = vadd.f32 %v5102, %v5176
      %v5178 = vpop.f32.mrf.mxu0
      %v5179 = vadd.f32 %v5102, %v5178
      %5180 = vdwg.mxu0
      %v5181 = vld [vmem:[%s2660] sm:$0xf]
      %v5182 = vld [vmem:[%s2660 + $0x8] sm:$0xf]
      %v5183 = vld [vmem:[%s2660 + $0x10] sm:$0xf]
      %v5184 = vld [vmem:[%s2660 + $0x18] sm:$0xf]
      %v5185 = vld [vmem:[%s2660 + $0x20] sm:$0xf]
      %v5186 = vld [vmem:[%s2660 + $0x28] sm:$0xf]
      %v5187 = vld [vmem:[%s2660 + $0x30] sm:$0xf]
      %v5188 = vld [vmem:[%s2660 + $0x38] sm:$0xf]
      %v5189 = vld [vmem:[%s7] sm:$0xf]
      %v5190 = vld [vmem:[%s7 + $0x4] sm:$0xf]
      %v5191 = vld [vmem:[%s7 + $0x8] sm:$0xf]
      %v5192 = vld [vmem:[%s7 + $0xc] sm:$0xf]
      %v5193 = vld [vmem:[%s7 + $0x10] sm:$0xf]
      %v5194 = vld [vmem:[%s7 + $0x14] sm:$0xf]
      %v5195 = vld [vmem:[%s7 + $0x18] sm:$0xf]
      %v5196 = vld [vmem:[%s7 + $0x1c] sm:$0xf]
      %v5197 = vld [vmem:[%s7 + $0x20] sm:$0xf]
      %v5198 = vld [vmem:[%s7 + $0x24] sm:$0xf]
      %v5199 = vld [vmem:[%s7 + $0x28] sm:$0xf]
      %v5200 = vld [vmem:[%s7 + $0x2c] sm:$0xf]
      %v5201 = vld [vmem:[%s7 + $0x30] sm:$0xf]
      %v5202 = vld [vmem:[%s7 + $0x34] sm:$0xf]
      %v5203 = vld [vmem:[%s7 + $0x38] sm:$0xf]
      %v5204 = vld [vmem:[%s7 + $0x3c] sm:$0xf]
      %v5205 = vld [vmem:[%s8] sm:$0x1]
      %v5207 = vperm.slane %v5205, 0
      %v5217 = vunpack.c.l.b16 %v5181
      %v5218 = vunpack.c.l.b16 %v5182
      %v5219 = vunpack.c.l.b16 %v5183
      %v5220 = vunpack.c.l.b16 %v5184
      %v5221 = vunpack.c.l.b16 %v5185
      %v5222 = vunpack.c.l.b16 %v5186
      %v5223 = vunpack.c.l.b16 %v5187
      %v5224 = vunpack.c.l.b16 %v5188
      %v5225 = vpack.c.b16 %v5218, %v5217
      %v5226 = vpack.c.b16 %v5220, %v5219
      %v5227 = vpack.c.b16 %v5222, %v5221
      %v5228 = vpack.c.b16 %v5224, %v5223
      %v5249 = vunpack.c.l.b16 %v5189
      %v5250 = vunpack.c.l.b16 %v5190
      %v5251 = vunpack.c.l.b16 %v5191
      %v5252 = vunpack.c.l.b16 %v5192
      %v5253 = vunpack.c.l.b16 %v5193
      %v5254 = vunpack.c.l.b16 %v5194
      %v5255 = vunpack.c.l.b16 %v5195
      %v5256 = vunpack.c.l.b16 %v5196
      %v5257 = vunpack.c.l.b16 %v5197
      %v5258 = vunpack.c.l.b16 %v5198
      %v5259 = vunpack.c.l.b16 %v5199
      %v5260 = vunpack.c.l.b16 %v5200
      %v5261 = vunpack.c.l.b16 %v5201
      %v5262 = vunpack.c.l.b16 %v5202
      %v5263 = vunpack.c.l.b16 %v5203
      %v5264 = vunpack.c.l.b16 %v5204
      %v5265 = vpack.c.b16 %v5250, %v5249
      %v5266 = vpack.c.b16 %v5252, %v5251
      %v5267 = vpack.c.b16 %v5254, %v5253
      %v5268 = vpack.c.b16 %v5256, %v5255
      %v5269 = vpack.c.b16 %v5258, %v5257
      %v5270 = vpack.c.b16 %v5260, %v5259
      %v5271 = vpack.c.b16 %v5262, %v5261
      %v5272 = vpack.c.b16 %v5264, %v5263
      %5281 = vmatpush.bf16.msra.mxu0 %v5272
      %5282 = vmatpush.bf16.msra.mxu0 %v5271
      %5283 = vmatpush.bf16.msra.mxu0 %v5270
      %5284 = vmatpush.bf16.msra.mxu0 %v5269
      %5285 = vmatpush.bf16.msra.mxu0 %v5268
      %5286 = vmatpush.bf16.msra.mxu0 %v5267
      %5287 = vmatpush.bf16.msra.mxu0 %v5266
      %5288 = vmatpush.bf16.msra.mxu0 %v5265
      %5289 = vmatmul.bf16.gmra.mxu0 %v5225
      %v5290 = vpop.f32.mrf.mxu0
      %v5291 = vadd.f32 %v5207, %v5290
      %v5292 = vpop.f32.mrf.mxu0
      %v5293 = vadd.f32 %v5207, %v5292
      %5294 = vmatmul.bf16.gmra.mxu0 %v5226
      %v5295 = vpop.f32.mrf.mxu0
      %v5296 = vadd.f32 %v5207, %v5295
      %v5297 = vpop.f32.mrf.mxu0
      %v5298 = vadd.f32 %v5207, %v5297
      %5299 = vmatmul.bf16.gmra.mxu0 %v5227
      %v5300 = vpop.f32.mrf.mxu0
      %v5301 = vadd.f32 %v5207, %v5300
      %v5302 = vpop.f32.mrf.mxu0
      %v5303 = vadd.f32 %v5207, %v5302
      %5304 = vmatmul.bf16.gmra.mxu0 %v5228
      %v5305 = vpop.f32.mrf.mxu0
      %v5306 = vadd.f32 %v5207, %v5305
      %v5307 = vpop.f32.mrf.mxu0
      %v5308 = vadd.f32 %v5207, %v5307
      %5309 = vdwg.mxu0
      %v5310 = vadd.f32 %v5162, %v5291
      %v5311 = vadd.f32 %v5164, %v5293
      %v5312 = vadd.f32 %v5167, %v5296
      %v5313 = vadd.f32 %v5169, %v5298
      %v5314 = vadd.f32 %v5172, %v5301
      %v5315 = vadd.f32 %v5174, %v5303
      %v5316 = vadd.f32 %v5177, %v5306
      %v5317 = vadd.f32 %v5179, %v5308
      %v5318 = vmax.f32 %v5310, 0.0
      %v5319 = vmax.f32 %v5311, 0.0
      %v5320 = vmax.f32 %v5312, 0.0
      %v5321 = vmax.f32 %v5313, 0.0
      %v5322 = vmax.f32 %v5314, 0.0
      %v5323 = vmax.f32 %v5315, 0.0
      %v5324 = vmax.f32 %v5316, 0.0
      %v5325 = vmax.f32 %v5317, 0.0
      %v5326 = vpack.c.bf16 %v5318, %v5318
      %v5327 = vpack.c.bf16 %v5319, %v5319
      %v5328 = vpack.c.bf16 %v5320, %v5320
      %v5329 = vpack.c.bf16 %v5321, %v5321
      %v5330 = vpack.c.bf16 %v5322, %v5322
      %v5331 = vpack.c.bf16 %v5323, %v5323
      %v5332 = vpack.c.bf16 %v5324, %v5324
      %v5333 = vpack.c.bf16 %v5325, %v5325
      %5334 = vst [vmem:[%s354] sm:$0xf] %v5326
      %5335 = vst [vmem:[%s354 + $0x4] sm:$0xf] %v5327
      %5336 = vst [vmem:[%s354 + $0x8] sm:$0xf] %v5328
      %5337 = vst [vmem:[%s354 + $0xc] sm:$0xf] %v5329
      %5338 = vst [vmem:[%s354 + $0x10] sm:$0xf] %v5330
      %5339 = vst [vmem:[%s354 + $0x14] sm:$0xf] %v5331
      %5340 = vst [vmem:[%s354 + $0x18] sm:$0xf] %v5332
      %5341 = vst [vmem:[%s354 + $0x1c] sm:$0xf] %v5333
      %s5342 = smul.u32 8, %s25
      %p5343 = scmp.lt.s32.totalorder %s24, 1
      %s5344 = scalar_select %p5343, %s24, 1
      %p5345 = scmp.lt.s32.totalorder %s5342, 7
      %s5346 = scalar_select %p5345, %s5342, 7
      %s5347 = smul.addr %s5344, 8
      %s5348 = sadd.s32 %s5346, %s5347
      %s5349 = smul.addr %s5348, 4
      %s5350 = scalar_lea.vmem %s9, %s5349
      // Predicated region
      $region61: #{_bottleneck_forward_impl.1} parent=55 // pred_check
        %p5351 = pneg %p246
      $region62: #{_bottleneck_forward_impl.1} parent=55 // pred_check_branch
        %5353 = sbr.rel (%p5351) target = $region64
      $region63: #{_bottleneck_forward_impl.1} parent=55 // pred_region
        %s5354 = smul.u32 8, %s25
      $region64: #{_bottleneck_forward_impl.1} parent=55 // pred_fallthru
        _
    $region56: #{_bottleneck_forward_impl.1} parent=5 // pred_fallthru
      _
    %p5355 = scmp.le.s32.totalorder 2, %s15
    // Predicated region
    $region65: #{_bottleneck_forward_impl.1} parent=5 // pred_check
      %p5356 = pneg %p5355
    $region66: #{_bottleneck_forward_impl.1} parent=5 // pred_check_branch
      %5358 = sbr.rel (%p5356) target = $region68
    $region67: #{_bottleneck_forward_impl.1} parent=5 // pred_region
      %s5359 = ssub.s32 %s15, 2
      // Predicated region
      $region69: #{_bottleneck_forward_impl.1} parent=67 // pred_check
        %p5360 = pneg %p252
      $region70: #{_bottleneck_forward_impl.1} parent=67 // pred_check_branch
        %5362 = sbr.rel (%p5360) target = $region72
      $region71: #{_bottleneck_forward_impl.1} parent=67 // pred_region
        %s5363 = smul.u32 8, %s27
        %p5364 = scmp.lt.s32.totalorder %s26, 1
        %s5365 = scalar_select %p5364, %s26, 1
        %p5366 = scmp.lt.s32.totalorder %s5363, 7
        %s5367 = scalar_select %p5366, %s5363, 7
        %s5368 = smul.addr %s5365, 8
        %s5369 = sadd.s32 %s5367, %s5368
        %s5370 = smul.addr %s5369, 4
        %s5371 = scalar_lea.vmem %s9, %s5370
      $region72: #{_bottleneck_forward_impl.1} parent=67 // pred_fallthru
        _
    $region68: #{_bottleneck_forward_impl.1} parent=5 // pred_fallthru
      _
  $region6: #{_bottleneck_forward_impl.1} parent=0 // loop_footer
    %s19 = sadd.s32 1, %s15
  $region7: #{_bottleneck_forward_impl.1} parent=0 // loop_footer_branch
    %14 = sbr.rel target = $region3
  $region8: #{_bottleneck_forward_impl.1} parent=0 // loop_exit
    _

</llo_original>
